<compile_context>
chip_gen: v7x
topology: tpu7x:2x2x1
jax: 0.10.0
libtpu: 0.0.40
codegen_flags: <defaults>
</compile_context>

<pallas_src>
import jax
import jax.numpy as jnp
from jax.experimental import pallas as pl
from jax.experimental.pallas import tpu as pltpu


def make_graph_similarity_kernel(Bt, N, F, S, H, L, P):
    """Per-grid-step kernel processing Bt graph pairs. N nodes, F feat dim,
    S supports, H gcn hidden, L linear hidden, P pool_step (window K = N // P)."""
    K = N // P
    SF = S * F
    H2 = 2 * H

    def kernel(f1_ref, a1_ref, f2_ref, a2_ref,
               wblk_ref, bcat_ref, poolw_ref,
               w1_ref, b1_ref, w2_ref, b2_ref,
               out_ref):

        def normalized_supports(f_ref, a_ref):
            # Stage 1 of one GCN branch. L1 row-normalization is folded into A
            # *before* the bf16 cast so the normalization is consistent with the
            # matmul operand; the clamp precedes the reciprocal so all-zero rows
            # stay exactly zero. One batched MXU push per graph element:
            # (S*N, N) @ (N, F), bf16 inputs, f32 accumulation.
            X = f_ref[...].astype(jnp.float32)                      # (Bt, N, F)
            A = a_ref[...].astype(jnp.float32)                      # (Bt, S, N, N)
            denom = jnp.maximum(jnp.sum(jnp.abs(A), axis=-1, keepdims=True), 1e-12)
            An = A * pl.reciprocal(denom, approx=False)             # exact, EUP
            An = An.reshape(Bt, S * N, N)
            sup = jnp.einsum('bmn,bnf->bmf',
                             An.astype(jnp.bfloat16), X.astype(jnp.bfloat16),
                             preferred_element_type=jnp.float32)    # (Bt, S*N, F)
            # Reorder [s, n] -> [n, s*F]: S static sublane slices, concatenated
            # along lanes further below (cheap; XLU/VPU have slack).
            return [sup[:, s * N:(s + 1) * N, :] for s in range(S)]  # S x (Bt, N, F)

        # Both branches, supports reordered and concatenated along lanes:
        # lanes [0, S*F) = branch 1, lanes [S*F, 2*S*F) = branch 2.
        pieces = (normalized_supports(f1_ref, a1_ref)
                  + normalized_supports(f2_ref, a2_ref))
        sup_cat = jnp.concatenate(pieces, axis=-1).reshape(Bt * N, 2 * SF)

        # Stage 2 of both GCN branches in ONE MXU push against the block-diagonal
        # weight: (Bt*N, 2*S*F) @ (2*S*F, 2*H). Branch 1 lands in lanes [:H],
        # branch 2 in lanes [H:].
        acc = jnp.dot(sup_cat.astype(jnp.bfloat16), wblk_ref[...],
                      preferred_element_type=jnp.float32)            # (Bt*N, 2H)

        # + per-node GCN biases (concatenated), ReLU (dropout = identity), then
        # MaxPool2d(kernel=(K,1), stride=(K,1)) over nodes via reshape + max.
        act = jnp.maximum(acc.reshape(Bt, N, H2) + bcat_ref[...][None], 0.0)
        pooled = jnp.max(act.reshape(Bt, P, K, H2), axis=2)          # (Bt, P, 2H)

        # door gate and node_choose_w folded into a single (P, 2H) weight
        # (lanes [:H] carry ncw*door, lanes [H:] carry ncw*(1-door)):
        # VPU broadcast-multiply + sublane reduce, no M=1 matmul, no lane slice.
        v = jnp.sum(poolw_ref[...][None] * pooled, axis=1)           # (Bt, 2H)

        # MLP head, full f32 (tiny matmuls; keeps the tolerance tight). w1 is
        # stacked [w1; w1], so the matmul itself sums the branch-1 / branch-2
        # halves of v (== v[:, :H] + v[:, H:]).
        h = jnp.maximum(
            jnp.dot(v, w1_ref[...], preferred_element_type=jnp.float32,
                    precision=jax.lax.Precision.HIGHEST) + b1_ref[...], 0.0)   # (Bt, L)
        o = jnp.maximum(
            jnp.dot(h, w2_ref[...], preferred_element_type=jnp.float32,
                    precision=jax.lax.Precision.HIGHEST) + b2_ref[...], 0.0)   # (Bt, 2)
        out_ref[...] = o

    return kernel


def _default_block_b(B):
    # Prefer exactly two grid steps (keeps both v7x TensorCores busy under
    # dimension_semantics=("parallel",); on single-TC v5e/v6e the extra step
    # costs ~600 cycles, i.e. noise). Cap the block at 64 graph pairs so vreg
    # pressure / spills stay bounded; VMEM is never the constraint here.
    if B % 2 == 0 and (B // 2) % 8 == 0 and (B // 2) <= 64:
        return B // 2
    for bt in (64, 32, 16, 8):
        if B % bt == 0:
            return bt
    return B


def graph_similarity(f1, a1, f2, a2, params, block_b=None):
    (wg1, bg1, wg2, bg2, door, ncw, w1, b1, w2, b2) = params
    B, N, F = f1.shape
    S = a1.shape[1]
    H = wg1.shape[1]
    L = w1.shape[1]
    P = door.shape[0]          # door stored as (P, 1)
    SF = S * F
    H2 = 2 * H

    Bt = _default_block_b(B) if block_b is None else min(block_b, B)
    assert B % Bt == 0, "batch must be divisible by the batch block"
    assert Bt == B or Bt % 8 == 0, "batch block should be a multiple of 8 (sublane tile)"
    assert N % P == 0

    # Tiny fused parameter tensors, built once outside the kernel (few KiB; the
    # review explicitly endorses building zero-padded / fused weights in the
    # wrapper). MXU weight pre-cast to bf16.
    wblk = jnp.zeros((2 * SF, H2), jnp.float32)
    wblk = wblk.at[:SF, :H].set(wg1).at[SF:, H:].set(wg2)            # block-diag
    wblk = wblk.astype(jnp.bfloat16)
    bcat = jnp.concatenate([bg1, bg2], axis=-1)                      # (N, 2H)
    door_v, ncw_v = door[:, 0], ncw[:, 0]
    gate_full = jnp.concatenate(
        [jnp.broadcast_to(door_v[:, None], (P, H)),
         jnp.broadcast_to(1.0 - door_v[:, None], (P, H))], axis=1)   # (P, 2H)
    poolw = ncw_v[:, None] * gate_full                               # (P, 2H)
    w1s = jnp.concatenate([w1, w1], axis=0)                          # (2H, L)

    kernel = make_graph_similarity_kernel(Bt, N, F, S, H, L, P)

    def full_spec(shape):
        return pl.BlockSpec(shape, lambda b, _n=len(shape): (0,) * _n)

    return pl.pallas_call(
        kernel,
        out_shape=jax.ShapeDtypeStruct((B, 2), jnp.float32),
        grid=(B // Bt,),
        in_specs=[
            pl.BlockSpec((Bt, N, F), lambda b: (b, 0, 0)),
            pl.BlockSpec((Bt, S, N, N), lambda b: (b, 0, 0, 0)),
            pl.BlockSpec((Bt, N, F), lambda b: (b, 0, 0)),
            pl.BlockSpec((Bt, S, N, N), lambda b: (b, 0, 0, 0)),
            full_spec(wblk.shape), full_spec(bcat.shape), full_spec(poolw.shape),
            full_spec(w1s.shape), full_spec(b1.shape),
            full_spec(w2.shape), full_spec(b2.shape),
        ],
        out_specs=pl.BlockSpec((Bt, 2), lambda b: (b, 0)),
        compiler_params=pltpu.CompilerParams(dimension_semantics=("parallel",)),
    )(f1, a1, f2, a2, wblk, bcat, poolw, w1s, b1, w2, b2)


def reference(f1, a1, f2, a2, params):
    """Pure-JAX (f32) reimplementation of the PyTorch forward (for verification)."""
    (wg1, bg1, wg2, bg2, door, ncw, w1, b1, w2, b2) = params
    B, N, F = f1.shape
    S = a1.shape[1]
    H = wg1.shape[1]
    P = door.shape[0]

    def gcn(feats, A, W, bias):
        denom = jnp.maximum(jnp.sum(jnp.abs(A), axis=-1, keepdims=True), 1e-12)
        An = A / denom
        sup = jnp.einsum('bsij,bjf->bisf', An, feats).reshape(B, N, S * F)
        return sup @ W + bias

    g1 = jax.nn.relu(gcn(f1, a1, wg1, bg1))
    g2 = jax.nn.relu(gcn(f2, a2, wg2, bg2))
    pool = lambda g: jnp.max(g.reshape(B, P, N // P, H), axis=2)
    p1, p2 = pool(g1), pool(g2)
    gate = door.reshape(1, P, 1)
    cat = gate * p1 + (1.0 - gate) * p2
    v = jnp.einsum('p,bph->bh', ncw[:, 0], cat)
    h = jax.nn.relu(v @ w1 + b1[0])
    return jax.nn.relu(h @ w2 + b2[0])


if __name__ == "__main__":
    # Small shapes consistent with the module: batch=16 (default batch block 8 ->
    # 2 grid steps, so both v7x TensorCores get work), max_node_num=16,
    # input_dim=8, support=3, gcn_hidden_dim=32, linear_hidden_dim=16,
    # pool_step=4 (pool window = 16 // 4 = 4).
    B, N, F, S, H, L, P = 16, 16, 8, 3, 32, 16, 4

    key = jax.random.PRNGKey(0)
    ks = jax.random.split(key, 14)

    f1 = jax.random.normal(ks[0], (B, N, F), jnp.float32)
    a1 = jax.random.uniform(ks[1], (B, S, N, N), dtype=jnp.float32)
    f2 = jax.random.normal(ks[2], (B, N, F), jnp.float32)
    a2 = jax.random.uniform(ks[3], (B, S, N, N), dtype=jnp.float32)

    def kaiming(k, shape, fan_in):
        return (jnp.sqrt(2.0 / fan_in) * jax.random.normal(k, shape)).astype(jnp.float32)

    wg1 = kaiming(ks[4], (S * F, H), S * F)          # GCN online weight
    bg1 = kaiming(ks[5], (N, H), H)                  # GCN online bias (max_node_num, H)
    wg2 = kaiming(ks[6], (S * F, H), S * F)          # GCN kb weight
    bg2 = kaiming(ks[7], (N, H), H)                  # GCN kb bias
    door = kaiming(ks[8], (P, 1), P)                 # torch param is (1, P); stored transposed
    ncw = kaiming(ks[9], (P, 1), P)                  # node_choose_w (1, P); stored transposed
    w1 = kaiming(ks[10], (H, L), H)                  # linear_1 weight, input-major (= W.T)
    b1 = kaiming(ks[11], (1, L), L)
    w2 = kaiming(ks[12], (L, 2), L)                  # linear_2 weight, input-major
    b2 = kaiming(ks[13], (1, 2), 2)

    params = (wg1, bg1, wg2, bg2, door, ncw, w1, b1, w2, b2)

    out = graph_similarity(f1, a1, f2, a2, params)
    out = jax.block_until_ready(out)

    ref = jax.block_until_ready(reference(f1, a1, f2, a2, params))
    assert out.shape == (B, 2), out.shape
    # Residual tolerance is from the intentional bf16 MXU operands in the GCN
    # stages (f32 accumulation); the approximate reciprocal and the inconsistent
    # normalization of the previous version are gone and the MLP head is full f32,
    # so the check is 2.5x tighter than before.
    assert jnp.allclose(out, ref, rtol=2e-2, atol=5e-2), (out, ref)

    print("KERNEL_OK")
</pallas_src>

<mosaic_0001>
module attributes {stable_mosaic.version = 11 : i64} {
  func.func @kernel(%arg0: i32, %arg1: memref<8x16x8xf32, #tpu.memory_space<vmem>>, %arg2: memref<8x3x16x16xf32, #tpu.memory_space<vmem>>, %arg3: memref<8x16x8xf32, #tpu.memory_space<vmem>>, %arg4: memref<8x3x16x16xf32, #tpu.memory_space<vmem>>, %arg5: memref<48x64xbf16, #tpu.memory_space<vmem>>, %arg6: memref<16x64xf32, #tpu.memory_space<vmem>>, %arg7: memref<4x64xf32, #tpu.memory_space<vmem>>, %arg8: memref<64x16xf32, #tpu.memory_space<vmem>>, %arg9: memref<1x16xf32, #tpu.memory_space<vmem>>, %arg10: memref<16x2xf32, #tpu.memory_space<vmem>>, %arg11: memref<1x2xf32, #tpu.memory_space<vmem>>, %arg12: memref<8x2xf32, #tpu.memory_space<vmem>>) attributes {dimension_semantics = [#tpu.dimension_semantics<parallel>], iteration_bounds = array<i64: 2>, scalar_prefetch = 0 : i64, scratch_operands = 0 : i64, tpu.core_type = #tpu.core_type<tc>, window_params = [{transform_indices = @transform_0, window_bounds = array<i64: 8, 16, 8>}, {transform_indices = @transform_1, window_bounds = array<i64: 8, 3, 16, 16>}, {transform_indices = @transform_2, window_bounds = array<i64: 8, 16, 8>}, {transform_indices = @transform_3, window_bounds = array<i64: 8, 3, 16, 16>}, {pipeline_mode = #tpu.pipeline_mode<synchronous>, transform_indices = @transform_4, window_bounds = array<i64: 48, 64>}, {pipeline_mode = #tpu.pipeline_mode<synchronous>, transform_indices = @transform_5, window_bounds = array<i64: 16, 64>}, {pipeline_mode = #tpu.pipeline_mode<synchronous>, transform_indices = @transform_6, window_bounds = array<i64: 4, 64>}, {pipeline_mode = #tpu.pipeline_mode<synchronous>, transform_indices = @transform_7, window_bounds = array<i64: 64, 16>}, {pipeline_mode = #tpu.pipeline_mode<synchronous>, transform_indices = @transform_8, window_bounds = array<i64: 1, 16>}, {pipeline_mode = #tpu.pipeline_mode<synchronous>, transform_indices = @transform_9, window_bounds = array<i64: 16, 2>}, {pipeline_mode = #tpu.pipeline_mode<synchronous>, transform_indices = @transform_10, window_bounds = array<i64: 1, 2>}, {transform_indices = @transform_11, window_bounds = array<i64: 8, 2>}]} {
    %c0 = arith.constant 0 : index
    %c0_0 = arith.constant 0 : index
    %c0_1 = arith.constant 0 : index
    %0 = vector.load %arg1[%c0, %c0_0, %c0_1] : memref<8x16x8xf32, #tpu.memory_space<vmem>>, vector<8x16x8xf32>
    %c0_2 = arith.constant 0 : index
    %c0_3 = arith.constant 0 : index
    %c0_4 = arith.constant 0 : index
    %c0_5 = arith.constant 0 : index
    %1 = vector.load %arg2[%c0_2, %c0_3, %c0_4, %c0_5] : memref<8x3x16x16xf32, #tpu.memory_space<vmem>>, vector<8x3x16x16xf32>
    %2 = math.absf %1 : vector<8x3x16x16xf32>
    %cst = arith.constant dense<0.000000e+00> : vector<8x3x16xf32>
    %3 = vector.multi_reduction <add>, %2, %cst [3] : vector<8x3x16x16xf32> to vector<8x3x16xf32>
    %4 = vector.shape_cast %3 : vector<8x3x16xf32> to vector<8x3x16x1xf32>
    %cst_6 = arith.constant 9.99999996E-13 : f32
    %5 = vector.broadcast %cst_6 : f32 to vector<8x3x16x1xf32>
    %6 = arith.maximumf %4, %5 : vector<8x3x16x1xf32>
    %7 = tpu.reciprocal %6 : vector<8x3x16x1xf32> -> vector<8x3x16x1xf32>
    %8 = vector.broadcast %7 : vector<8x3x16x1xf32> to vector<8x3x16x16xf32>
    %9 = arith.mulf %1, %8 : vector<8x3x16x16xf32>
    %10 = vector.shape_cast %9 : vector<8x3x16x16xf32> to vector<8x48x16xf32>
    %11 = arith.truncf %10 : vector<8x48x16xf32> to vector<8x48x16xbf16>
    %12 = arith.truncf %0 : vector<8x16x8xf32> to vector<8x16x8xbf16>
    "tpu.trace_start"() <{level = 10 : i32, message = "bmn,bnf->bmf"}> : () -> ()
    %cst_7 = arith.constant dense<0.000000e+00> : vector<8x48x8xf32>
    %13 = tpu.matmul %11, %12, %cst_7 {dimension_numbers = #tpu.dot_dimension_numbers<[2], [1], [1], [2], [0, 0, 0, 1, 1, 2], [0], [0]>} : vector<8x48x16xbf16>, vector<8x16x8xbf16>, vector<8x48x8xf32> -> vector<8x48x8xf32>
    "tpu.trace_stop"() : () -> ()
    %14 = vector.extract_strided_slice %13 {offsets = [0, 0, 0], sizes = [8, 16, 8], strides = [1, 1, 1]} : vector<8x48x8xf32> to vector<8x16x8xf32>
    %15 = vector.extract_strided_slice %13 {offsets = [0, 16, 0], sizes = [8, 16, 8], strides = [1, 1, 1]} : vector<8x48x8xf32> to vector<8x16x8xf32>
    %16 = vector.extract_strided_slice %13 {offsets = [0, 32, 0], sizes = [8, 16, 8], strides = [1, 1, 1]} : vector<8x48x8xf32> to vector<8x16x8xf32>
    %c0_8 = arith.constant 0 : index
    %c0_9 = arith.constant 0 : index
    %c0_10 = arith.constant 0 : index
    %17 = vector.load %arg3[%c0_8, %c0_9, %c0_10] : memref<8x16x8xf32, #tpu.memory_space<vmem>>, vector<8x16x8xf32>
    %c0_11 = arith.constant 0 : index
    %c0_12 = arith.constant 0 : index
    %c0_13 = arith.constant 0 : index
    %c0_14 = arith.constant 0 : index
    %18 = vector.load %arg4[%c0_11, %c0_12, %c0_13, %c0_14] : memref<8x3x16x16xf32, #tpu.memory_space<vmem>>, vector<8x3x16x16xf32>
    %19 = math.absf %18 : vector<8x3x16x16xf32>
    %cst_15 = arith.constant dense<0.000000e+00> : vector<8x3x16xf32>
    %20 = vector.multi_reduction <add>, %19, %cst_15 [3] : vector<8x3x16x16xf32> to vector<8x3x16xf32>
    %21 = vector.shape_cast %20 : vector<8x3x16xf32> to vector<8x3x16x1xf32>
    %cst_16 = arith.constant 9.99999996E-13 : f32
    %22 = vector.broadcast %cst_16 : f32 to vector<8x3x16x1xf32>
    %23 = arith.maximumf %21, %22 : vector<8x3x16x1xf32>
    %24 = tpu.reciprocal %23 : vector<8x3x16x1xf32> -> vector<8x3x16x1xf32>
    %25 = vector.broadcast %24 : vector<8x3x16x1xf32> to vector<8x3x16x16xf32>
    %26 = arith.mulf %18, %25 : vector<8x3x16x16xf32>
    %27 = vector.shape_cast %26 : vector<8x3x16x16xf32> to vector<8x48x16xf32>
    %28 = arith.truncf %27 : vector<8x48x16xf32> to vector<8x48x16xbf16>
    %29 = arith.truncf %17 : vector<8x16x8xf32> to vector<8x16x8xbf16>
    "tpu.trace_start"() <{level = 10 : i32, message = "bmn,bnf->bmf"}> : () -> ()
    %cst_17 = arith.constant dense<0.000000e+00> : vector<8x48x8xf32>
    %30 = tpu.matmul %28, %29, %cst_17 {dimension_numbers = #tpu.dot_dimension_numbers<[2], [1], [1], [2], [0, 0, 0, 1, 1, 2], [0], [0]>} : vector<8x48x16xbf16>, vector<8x16x8xbf16>, vector<8x48x8xf32> -> vector<8x48x8xf32>
    "tpu.trace_stop"() : () -> ()
    %31 = vector.extract_strided_slice %30 {offsets = [0, 0, 0], sizes = [8, 16, 8], strides = [1, 1, 1]} : vector<8x48x8xf32> to vector<8x16x8xf32>
    %32 = vector.extract_strided_slice %30 {offsets = [0, 16, 0], sizes = [8, 16, 8], strides = [1, 1, 1]} : vector<8x48x8xf32> to vector<8x16x8xf32>
    %33 = vector.extract_strided_slice %30 {offsets = [0, 32, 0], sizes = [8, 16, 8], strides = [1, 1, 1]} : vector<8x48x8xf32> to vector<8x16x8xf32>
    %34 = tpu.concatenate %14, %15, %16, %31, %32, %33 in 2 : vector<8x16x8xf32>, vector<8x16x8xf32>, vector<8x16x8xf32>, vector<8x16x8xf32>, vector<8x16x8xf32>, vector<8x16x8xf32> -> vector<8x16x48xf32>
    %35 = vector.shape_cast %34 : vector<8x16x48xf32> to vector<128x48xf32>
    %36 = arith.truncf %35 : vector<128x48xf32> to vector<128x48xbf16>
    %c0_18 = arith.constant 0 : index
    %c0_19 = arith.constant 0 : index
    %37 = vector.load %arg5[%c0_18, %c0_19] : memref<48x64xbf16, #tpu.memory_space<vmem>>, vector<48x64xbf16>
    %cst_20 = arith.constant dense<0.000000e+00> : vector<128x64xf32>
    %38 = tpu.matmul %36, %37, %cst_20 {dimension_numbers = #tpu.dot_dimension_numbers<[1], [0], [0], [1], [0, 0, 1, 1], [], []>} : vector<128x48xbf16>, vector<48x64xbf16>, vector<128x64xf32> -> vector<128x64xf32>
    %39 = vector.shape_cast %38 : vector<128x64xf32> to vector<8x16x64xf32>
    %c0_21 = arith.constant 0 : index
    %c0_22 = arith.constant 0 : index
    %40 = vector.load %arg6[%c0_21, %c0_22] : memref<16x64xf32, #tpu.memory_space<vmem>>, vector<16x64xf32>
    %41 = vector.shape_cast %40 : vector<16x64xf32> to vector<1x16x64xf32>
    %42 = vector.broadcast %41 : vector<1x16x64xf32> to vector<8x16x64xf32>
    %43 = arith.addf %39, %42 : vector<8x16x64xf32>
    %cst_23 = arith.constant 0.000000e+00 : f32
    %44 = vector.broadcast %cst_23 : f32 to vector<8x16x64xf32>
    %45 = arith.maximumf %43, %44 : vector<8x16x64xf32>
    %46 = vector.shape_cast %45 : vector<8x16x64xf32> to vector<8x4x4x64xf32>
    %cst_24 = arith.constant dense<0xFF800000> : vector<8x4x64xf32>
    %47 = vector.multi_reduction <maximumf>, %46, %cst_24 [2] : vector<8x4x4x64xf32> to vector<8x4x64xf32>
    %c0_25 = arith.constant 0 : index
    %c0_26 = arith.constant 0 : index
    %48 = vector.load %arg7[%c0_25, %c0_26] : memref<4x64xf32, #tpu.memory_space<vmem>>, vector<4x64xf32>
    %49 = vector.shape_cast %48 : vector<4x64xf32> to vector<1x4x64xf32>
    %50 = vector.broadcast %49 : vector<1x4x64xf32> to vector<8x4x64xf32>
    %51 = arith.mulf %50, %47 : vector<8x4x64xf32>
    %cst_27 = arith.constant dense<0.000000e+00> : vector<8x64xf32>
    %52 = vector.multi_reduction <add>, %51, %cst_27 [1] : vector<8x4x64xf32> to vector<8x64xf32>
    %c0_28 = arith.constant 0 : index
    %c0_29 = arith.constant 0 : index
    %53 = vector.load %arg8[%c0_28, %c0_29] : memref<64x16xf32, #tpu.memory_space<vmem>>, vector<64x16xf32>
    %cst_30 = arith.constant dense<0.000000e+00> : vector<8x16xf32>
    %54 = tpu.matmul %52, %53, %cst_30 {dimension_numbers = #tpu.dot_dimension_numbers<[1], [0], [0], [1], [0, 0, 1, 1], [], []>, precision = #tpu.contract_precision<fp32>} : vector<8x64xf32>, vector<64x16xf32>, vector<8x16xf32> -> vector<8x16xf32>
    %c0_31 = arith.constant 0 : index
    %c0_32 = arith.constant 0 : index
    %55 = vector.load %arg9[%c0_31, %c0_32] : memref<1x16xf32, #tpu.memory_space<vmem>>, vector<1x16xf32>
    %56 = vector.broadcast %55 : vector<1x16xf32> to vector<8x16xf32>
    %57 = arith.addf %54, %56 : vector<8x16xf32>
    %cst_33 = arith.constant 0.000000e+00 : f32
    %58 = vector.broadcast %cst_33 : f32 to vector<8x16xf32>
    %59 = arith.maximumf %57, %58 : vector<8x16xf32>
    %c0_34 = arith.constant 0 : index
    %c0_35 = arith.constant 0 : index
    %60 = vector.load %arg10[%c0_34, %c0_35] : memref<16x2xf32, #tpu.memory_space<vmem>>, vector<16x2xf32>
    %cst_36 = arith.constant dense<0.000000e+00> : vector<8x2xf32>
    %61 = tpu.matmul %59, %60, %cst_36 {dimension_numbers = #tpu.dot_dimension_numbers<[1], [0], [0], [1], [0, 0, 1, 1], [], []>, precision = #tpu.contract_precision<fp32>} : vector<8x16xf32>, vector<16x2xf32>, vector<8x2xf32> -> vector<8x2xf32>
    %c0_37 = arith.constant 0 : index
    %c0_38 = arith.constant 0 : index
    %62 = vector.load %arg11[%c0_37, %c0_38] : memref<1x2xf32, #tpu.memory_space<vmem>>, vector<1x2xf32>
    %63 = vector.broadcast %62 : vector<1x2xf32> to vector<8x2xf32>
    %64 = arith.addf %61, %63 : vector<8x2xf32>
    %cst_39 = arith.constant 0.000000e+00 : f32
    %65 = vector.broadcast %cst_39 : f32 to vector<8x2xf32>
    %66 = arith.maximumf %64, %65 : vector<8x2xf32>
    %c0_40 = arith.constant 0 : index
    %c0_41 = arith.constant 0 : index
    %67 = vector.load %arg12[%c0_40, %c0_41] : memref<8x2xf32, #tpu.memory_space<vmem>>, vector<8x2xf32>
    tpu.vector_store %arg12[%c0_40, %c0_41], %66 {strides = array<i32>} : memref<8x2xf32, #tpu.memory_space<vmem>>, vector<8x2xf32>,
    return
  }
  func.func @transform_0(%arg0: i32) -> (i32, i32, i32) {
    %c0_i32 = arith.constant 0 : i32
    %c0_i32_0 = arith.constant 0 : i32
    %c0_i32_1 = arith.constant 0 : i32
    return %arg0, %c0_i32, %c0_i32_0 : i32, i32, i32
  }
  func.func @transform_1(%arg0: i32) -> (i32, i32, i32, i32) {
    %c0_i32 = arith.constant 0 : i32
    %c0_i32_0 = arith.constant 0 : i32
    %c0_i32_1 = arith.constant 0 : i32
    %c0_i32_2 = arith.constant 0 : i32
    return %arg0, %c0_i32, %c0_i32_0, %c0_i32_1 : i32, i32, i32, i32
  }
  func.func @transform_2(%arg0: i32) -> (i32, i32, i32) {
    %c0_i32 = arith.constant 0 : i32
    %c0_i32_0 = arith.constant 0 : i32
    %c0_i32_1 = arith.constant 0 : i32
    return %arg0, %c0_i32, %c0_i32_0 : i32, i32, i32
  }
  func.func @transform_3(%arg0: i32) -> (i32, i32, i32, i32) {
    %c0_i32 = arith.constant 0 : i32
    %c0_i32_0 = arith.constant 0 : i32
    %c0_i32_1 = arith.constant 0 : i32
    %c0_i32_2 = arith.constant 0 : i32
    return %arg0, %c0_i32, %c0_i32_0, %c0_i32_1 : i32, i32, i32, i32
  }
  func.func @transform_4(%arg0: i32) -> (i32, i32) {
    %c0_i32 = arith.constant 0 : i32
    %c0_i32_0 = arith.constant 0 : i32
    %c0_i32_1 = arith.constant 0 : i32
    return %c0_i32, %c0_i32_0 : i32, i32
  }
  func.func @transform_5(%arg0: i32) -> (i32, i32) {
    %c0_i32 = arith.constant 0 : i32
    %c0_i32_0 = arith.constant 0 : i32
    %c0_i32_1 = arith.constant 0 : i32
    return %c0_i32, %c0_i32_0 : i32, i32
  }
  func.func @transform_6(%arg0: i32) -> (i32, i32) {
    %c0_i32 = arith.constant 0 : i32
    %c0_i32_0 = arith.constant 0 : i32
    %c0_i32_1 = arith.constant 0 : i32
    return %c0_i32, %c0_i32_0 : i32, i32
  }
  func.func @transform_7(%arg0: i32) -> (i32, i32) {
    %c0_i32 = arith.constant 0 : i32
    %c0_i32_0 = arith.constant 0 : i32
    %c0_i32_1 = arith.constant 0 : i32
    return %c0_i32, %c0_i32_0 : i32, i32
  }
  func.func @transform_8(%arg0: i32) -> (i32, i32) {
    %c0_i32 = arith.constant 0 : i32
    %c0_i32_0 = arith.constant 0 : i32
    %c0_i32_1 = arith.constant 0 : i32
    return %c0_i32, %c0_i32_0 : i32, i32
  }
  func.func @transform_9(%arg0: i32) -> (i32, i32) {
    %c0_i32 = arith.constant 0 : i32
    %c0_i32_0 = arith.constant 0 : i32
    %c0_i32_1 = arith.constant 0 : i32
    return %c0_i32, %c0_i32_0 : i32, i32
  }
  func.func @transform_10(%arg0: i32) -> (i32, i32) {
    %c0_i32 = arith.constant 0 : i32
    %c0_i32_0 = arith.constant 0 : i32
    %c0_i32_1 = arith.constant 0 : i32
    return %c0_i32, %c0_i32_0 : i32, i32
  }
  func.func @transform_11(%arg0: i32) -> (i32, i32) {
    %c0_i32 = arith.constant 0 : i32
    %c0_i32_0 = arith.constant 0 : i32
    return %arg0, %c0_i32 : i32, i32
  }
}

</mosaic_0001>

<llo_original>
// kernel: tpu_custom_call.1
$region0: #{tpu_custom_call.1}
  #allocation0 [shape = 'u32[]', space=smem, size = 0x4, offset = 0x4, fixed_abs, tag = 'smem constant byte address 0x4 - core index']
  #allocation1 [shape = 'u32[144,128]{1,0:T(1,128)}', space=vmem, size = 0x12000, scoped, tag = 'internal scratch']
  %s0 = inlined_call_operand.vmem [shape: f32[16,16,8], index: 0, kind: input, shape index: {}]
  %s1 = inlined_call_operand.vmem [shape: f32[16,3,16,16], index: 1, kind: input, shape index: {}]
  %s2 = inlined_call_operand.vmem [shape: f32[16,16,8], index: 2, kind: input, shape index: {}]
  %s3 = inlined_call_operand.hbm [shape: f32[16,3,16,16], index: 3, kind: input, shape index: {}]
  %s4 = inlined_call_operand.vmem [shape: bf16[48,64], index: 4, kind: input, shape index: {}]
  %s5 = inlined_call_operand.vmem [shape: f32[16,64], index: 5, kind: input, shape index: {}]
  %s6 = inlined_call_operand.vmem [shape: f32[4,64], index: 6, kind: input, shape index: {}]
  %s7 = inlined_call_operand.vmem [shape: f32[64,16], index: 7, kind: input, shape index: {}]
  %s8 = inlined_call_operand.vmem [shape: f32[1,16], index: 8, kind: input, shape index: {}]
  %s9 = inlined_call_operand.vmem [shape: f32[16,2], index: 9, kind: input, shape index: {}]
  %s10 = inlined_call_operand.vmem [shape: f32[1,2], index: 10, kind: input, shape index: {}]
  %s11 = inlined_call_operand.vmem [shape: f32[16,2], index: 11, kind: output, shape index: {}]
  %s12 = sld [smem:[#allocation0]]
  $region81: #{tpu_custom_call.1} parent=0
    _
  %s14 = ssub.s32 1, %s12
  %s15 = scalar_select 0, %s14, %s12
  $region1: #{tpu_custom_call.1} parent=0
    #allocation2 [shape = 'u8[393216]{0}', space=vmem, size = 0x60000, scoped, tag = 'input window, operand 3']
    #allocation3 [shape = 's32[2]{0}', space=sflag, size = 0x8, scoped, tag = 'scoped memory for tpu_custom_call.1']
    %16 = vsyncpa [#allocation3], 0
    %s17 = scalar_lea.sflag [#allocation3], 1
    %18 = vsyncpa %s17, 0
    loop: start=0, step=1, limit=4
    $region2: #{tpu_custom_call.1} parent=1 // loop_pre_header
      _
    $region3: #{tpu_custom_call.1} parent=1 // loop_header
      %s20 = sphi 0, %s24
      %p21 = scmp.ge.s32.totalorder %s20, 4
      %s30 = sphi 0, %s32
      %s33 = sphi 0, %s30
      %s34 = sphi 0, %s33
      %s50 = sphi 0, %s34
      %s56 = sphi 0, %s58
      %s59 = sphi 0, %s56
      %s60 = sphi 0, %s59
      %s76 = sphi 0, %s60
      %s82 = sphi 0, %s84
      %s85 = sphi 0, %s82
      %s86 = sphi 0, %s85
      %s102 = sphi 0, %s86
      %s108 = sphi 0, %s110
      %s111 = sphi 0, %s108
      %s112 = sphi 0, %s111
      %s128 = sphi 0, %s112
      %s132 = sphi 0, %s132
      %s134 = sphi 0, %s132
      %s135 = sphi 0, %s134
      %s149 = sphi 0, %s135
      %s153 = sphi 0, %s153
      %s155 = sphi 0, %s153
      %s156 = sphi 0, %s155
      %s170 = sphi 0, %s156
      %s174 = sphi 0, %s174
      %s176 = sphi 0, %s174
      %s177 = sphi 0, %s176
      %s191 = sphi 0, %s177
      %s195 = sphi 0, %s195
      %s197 = sphi 0, %s195
      %s198 = sphi 0, %s197
      %s212 = sphi 0, %s198
      %s216 = sphi 0, %s216
      %s218 = sphi 0, %s216
      %s219 = sphi 0, %s218
      %s233 = sphi 0, %s219
      %s237 = sphi 0, %s237
      %s239 = sphi 0, %s237
      %s240 = sphi 0, %s239
      %s254 = sphi 0, %s240
      %s258 = sphi 0, %s258
      %s260 = sphi 0, %s258
      %s261 = sphi 0, %s260
      %s275 = sphi 0, %s261
      %s281 = sphi 0, %s283
      %s284 = sphi 0, %s281
      %s285 = sphi 0, %s284
      %s301 = sphi 0, %s285
    $region4: #{tpu_custom_call.1} parent=1 // loop_header_branch
      %23 = sbr.rel (%p21) target = $region8
    $region5: #{tpu_custom_call.1} parent=1 // loop_body
      %s25 = ssub.s32 %s20, 1
      %s26 = ssub.s32 %s20, 2
      %s27 = sadd.s32 %s20, 1
      %s28 = ssub.s32 %s20, %s27
      %p29 = scmp.eq.s32.totalorder %s28, 0
      %s31 = sadd.s32 %s30, 1
      %s32 = scalar_select %p29, %s30, %s31
      %p35 = pneg %p29
      %p36 = scmp.eq.s32.totalorder %s20, 1
      %p37 = por %p35, %p36
      %p38 = scmp.ne.s32.totalorder %s30, %s33
      %p39 = scmp.eq.s32.totalorder %s20, 0
      %p40 = por %p38, %p39
      %p41 = scmp.ne.s32.totalorder %s30, %s33
      %p42 = scmp.eq.s32.totalorder %s25, 1
      %p43 = por %p41, %p42
      %p44 = scmp.ne.s32.totalorder %s33, %s34
      %p45 = scmp.eq.s32.totalorder %s25, 0
      %p46 = por %p44, %p45
      %p47 = scmp.ne.s32.totalorder %s33, %s34
      %p48 = scmp.eq.s32.totalorder %s26, 1
      %p49 = por %p47, %p48
      %p51 = scmp.ne.s32.totalorder %s34, %s50
      %p52 = scmp.eq.s32.totalorder %s26, 0
      %p53 = por %p51, %p52
      %s54 = ssub.s32 %s20, %s27
      %p55 = scmp.eq.s32.totalorder %s54, 0
      %s57 = sadd.s32 %s56, 1
      %s58 = scalar_select %p55, %s56, %s57
      %p61 = pneg %p55
      %p62 = scmp.eq.s32.totalorder %s20, 1
      %p63 = por %p61, %p62
      %p64 = scmp.ne.s32.totalorder %s56, %s59
      %p65 = scmp.eq.s32.totalorder %s20, 0
      %p66 = por %p64, %p65
      %p67 = scmp.ne.s32.totalorder %s56, %s59
      %p68 = scmp.eq.s32.totalorder %s25, 1
      %p69 = por %p67, %p68
      %p70 = scmp.ne.s32.totalorder %s59, %s60
      %p71 = scmp.eq.s32.totalorder %s25, 0
      %p72 = por %p70, %p71
      %p73 = scmp.ne.s32.totalorder %s59, %s60
      %p74 = scmp.eq.s32.totalorder %s26, 1
      %p75 = por %p73, %p74
      %p77 = scmp.ne.s32.totalorder %s60, %s76
      %p78 = scmp.eq.s32.totalorder %s26, 0
      %p79 = por %p77, %p78
      %s80 = ssub.s32 %s20, %s27
      %p81 = scmp.eq.s32.totalorder %s80, 0
      %s83 = sadd.s32 %s82, 1
      %s84 = scalar_select %p81, %s82, %s83
      %p87 = pneg %p81
      %p88 = scmp.eq.s32.totalorder %s20, 1
      %p89 = por %p87, %p88
      %p90 = scmp.ne.s32.totalorder %s82, %s85
      %p91 = scmp.eq.s32.totalorder %s20, 0
      %p92 = por %p90, %p91
      %p93 = scmp.ne.s32.totalorder %s82, %s85
      %p94 = scmp.eq.s32.totalorder %s25, 1
      %p95 = por %p93, %p94
      %p96 = scmp.ne.s32.totalorder %s85, %s86
      %p97 = scmp.eq.s32.totalorder %s25, 0
      %p98 = por %p96, %p97
      %p99 = scmp.ne.s32.totalorder %s85, %s86
      %p100 = scmp.eq.s32.totalorder %s26, 1
      %p101 = por %p99, %p100
      %p103 = scmp.ne.s32.totalorder %s86, %s102
      %p104 = scmp.eq.s32.totalorder %s26, 0
      %p105 = por %p103, %p104
      %s106 = ssub.s32 %s20, %s27
      %p107 = scmp.eq.s32.totalorder %s106, 0
      %s109 = sadd.s32 %s108, 1
      %s110 = scalar_select %p107, %s108, %s109
      %p113 = pneg %p107
      %p114 = scmp.eq.s32.totalorder %s20, 1
      %p115 = por %p113, %p114
      %p116 = scmp.ne.s32.totalorder %s108, %s111
      %p117 = scmp.eq.s32.totalorder %s20, 0
      %p118 = por %p116, %p117
      %p119 = scmp.ne.s32.totalorder %s108, %s111
      %p120 = scmp.eq.s32.totalorder %s25, 1
      %p121 = por %p119, %p120
      %p122 = scmp.ne.s32.totalorder %s111, %s112
      %p123 = scmp.eq.s32.totalorder %s25, 0
      %p124 = por %p122, %p123
      %p125 = scmp.ne.s32.totalorder %s111, %s112
      %p126 = scmp.eq.s32.totalorder %s26, 1
      %p127 = por %p125, %p126
      %p129 = scmp.ne.s32.totalorder %s112, %s128
      %p130 = scmp.eq.s32.totalorder %s26, 0
      %p131 = por %p129, %p130
      %s133 = sadd.s32 %s132, 1
      %p136 = scmp.eq.s32.totalorder %s20, 1
      %p137 = scmp.ne.s32.totalorder %s132, %s134
      %p138 = scmp.eq.s32.totalorder %s20, 0
      %p139 = por %p137, %p138
      %p140 = scmp.ne.s32.totalorder %s132, %s134
      %p141 = scmp.eq.s32.totalorder %s25, 1
      %p142 = por %p140, %p141
      %p143 = scmp.ne.s32.totalorder %s134, %s135
      %p144 = scmp.eq.s32.totalorder %s25, 0
      %p145 = por %p143, %p144
      %p146 = scmp.ne.s32.totalorder %s134, %s135
      %p147 = scmp.eq.s32.totalorder %s26, 1
      %p148 = por %p146, %p147
      %p150 = scmp.ne.s32.totalorder %s135, %s149
      %p151 = scmp.eq.s32.totalorder %s26, 0
      %p152 = por %p150, %p151
      %s154 = sadd.s32 %s153, 1
      %p157 = scmp.eq.s32.totalorder %s20, 1
      %p158 = scmp.ne.s32.totalorder %s153, %s155
      %p159 = scmp.eq.s32.totalorder %s20, 0
      %p160 = por %p158, %p159
      %p161 = scmp.ne.s32.totalorder %s153, %s155
      %p162 = scmp.eq.s32.totalorder %s25, 1
      %p163 = por %p161, %p162
      %p164 = scmp.ne.s32.totalorder %s155, %s156
      %p165 = scmp.eq.s32.totalorder %s25, 0
      %p166 = por %p164, %p165
      %p167 = scmp.ne.s32.totalorder %s155, %s156
      %p168 = scmp.eq.s32.totalorder %s26, 1
      %p169 = por %p167, %p168
      %p171 = scmp.ne.s32.totalorder %s156, %s170
      %p172 = scmp.eq.s32.totalorder %s26, 0
      %p173 = por %p171, %p172
      %s175 = sadd.s32 %s174, 1
      %p178 = scmp.eq.s32.totalorder %s20, 1
      %p179 = scmp.ne.s32.totalorder %s174, %s176
      %p180 = scmp.eq.s32.totalorder %s20, 0
      %p181 = por %p179, %p180
      %p182 = scmp.ne.s32.totalorder %s174, %s176
      %p183 = scmp.eq.s32.totalorder %s25, 1
      %p184 = por %p182, %p183
      %p185 = scmp.ne.s32.totalorder %s176, %s177
      %p186 = scmp.eq.s32.totalorder %s25, 0
      %p187 = por %p185, %p186
      %p188 = scmp.ne.s32.totalorder %s176, %s177
      %p189 = scmp.eq.s32.totalorder %s26, 1
      %p190 = por %p188, %p189
      %p192 = scmp.ne.s32.totalorder %s177, %s191
      %p193 = scmp.eq.s32.totalorder %s26, 0
      %p194 = por %p192, %p193
      %s196 = sadd.s32 %s195, 1
      %p199 = scmp.eq.s32.totalorder %s20, 1
      %p200 = scmp.ne.s32.totalorder %s195, %s197
      %p201 = scmp.eq.s32.totalorder %s20, 0
      %p202 = por %p200, %p201
      %p203 = scmp.ne.s32.totalorder %s195, %s197
      %p204 = scmp.eq.s32.totalorder %s25, 1
      %p205 = por %p203, %p204
      %p206 = scmp.ne.s32.totalorder %s197, %s198
      %p207 = scmp.eq.s32.totalorder %s25, 0
      %p208 = por %p206, %p207
      %p209 = scmp.ne.s32.totalorder %s197, %s198
      %p210 = scmp.eq.s32.totalorder %s26, 1
      %p211 = por %p209, %p210
      %p213 = scmp.ne.s32.totalorder %s198, %s212
      %p214 = scmp.eq.s32.totalorder %s26, 0
      %p215 = por %p213, %p214
      %s217 = sadd.s32 %s216, 1
      %p220 = scmp.eq.s32.totalorder %s20, 1
      %p221 = scmp.ne.s32.totalorder %s216, %s218
      %p222 = scmp.eq.s32.totalorder %s20, 0
      %p223 = por %p221, %p222
      %p224 = scmp.ne.s32.totalorder %s216, %s218
      %p225 = scmp.eq.s32.totalorder %s25, 1
      %p226 = por %p224, %p225
      %p227 = scmp.ne.s32.totalorder %s218, %s219
      %p228 = scmp.eq.s32.totalorder %s25, 0
      %p229 = por %p227, %p228
      %p230 = scmp.ne.s32.totalorder %s218, %s219
      %p231 = scmp.eq.s32.totalorder %s26, 1
      %p232 = por %p230, %p231
      %p234 = scmp.ne.s32.totalorder %s219, %s233
      %p235 = scmp.eq.s32.totalorder %s26, 0
      %p236 = por %p234, %p235
      %s238 = sadd.s32 %s237, 1
      %p241 = scmp.eq.s32.totalorder %s20, 1
      %p242 = scmp.ne.s32.totalorder %s237, %s239
      %p243 = scmp.eq.s32.totalorder %s20, 0
      %p244 = por %p242, %p243
      %p245 = scmp.ne.s32.totalorder %s237, %s239
      %p246 = scmp.eq.s32.totalorder %s25, 1
      %p247 = por %p245, %p246
      %p248 = scmp.ne.s32.totalorder %s239, %s240
      %p249 = scmp.eq.s32.totalorder %s25, 0
      %p250 = por %p248, %p249
      %p251 = scmp.ne.s32.totalorder %s239, %s240
      %p252 = scmp.eq.s32.totalorder %s26, 1
      %p253 = por %p251, %p252
      %p255 = scmp.ne.s32.totalorder %s240, %s254
      %p256 = scmp.eq.s32.totalorder %s26, 0
      %p257 = por %p255, %p256
      %s259 = sadd.s32 %s258, 1
      %p262 = scmp.eq.s32.totalorder %s20, 1
      %p263 = scmp.ne.s32.totalorder %s258, %s260
      %p264 = scmp.eq.s32.totalorder %s20, 0
      %p265 = por %p263, %p264
      %p266 = scmp.ne.s32.totalorder %s258, %s260
      %p267 = scmp.eq.s32.totalorder %s25, 1
      %p268 = por %p266, %p267
      %p269 = scmp.ne.s32.totalorder %s260, %s261
      %p270 = scmp.eq.s32.totalorder %s25, 0
      %p271 = por %p269, %p270
      %p272 = scmp.ne.s32.totalorder %s260, %s261
      %p273 = scmp.eq.s32.totalorder %s26, 1
      %p274 = por %p272, %p273
      %p276 = scmp.ne.s32.totalorder %s261, %s275
      %p277 = scmp.eq.s32.totalorder %s26, 0
      %p278 = por %p276, %p277
      %s279 = ssub.s32 %s20, %s27
      %p280 = scmp.eq.s32.totalorder %s279, 0
      %s282 = sadd.s32 %s281, 1
      %s283 = scalar_select %p280, %s281, %s282
      %p286 = pneg %p280
      %p287 = scmp.eq.s32.totalorder %s20, 1
      %p288 = por %p286, %p287
      %p289 = scmp.ne.s32.totalorder %s281, %s284
      %p290 = scmp.eq.s32.totalorder %s20, 0
      %p291 = por %p289, %p290
      %p292 = scmp.ne.s32.totalorder %s281, %s284
      %p293 = scmp.eq.s32.totalorder %s25, 1
      %p294 = por %p292, %p293
      %p295 = scmp.ne.s32.totalorder %s284, %s285
      %p296 = scmp.eq.s32.totalorder %s25, 0
      %p297 = por %p295, %p296
      %p298 = scmp.ne.s32.totalorder %s284, %s285
      %p299 = scmp.eq.s32.totalorder %s26, 1
      %p300 = por %p298, %p299
      %p302 = scmp.ne.s32.totalorder %s285, %s301
      %p303 = scmp.eq.s32.totalorder %s26, 0
      %p304 = por %p302, %p303
      %p305 = scmp.le.s32.totalorder 1, %s20
      %p306 = scmp.lt.s32.totalorder %s20, 3
      %p307 = pnand %p305, %p306
      %p308 = pneg %p307
      // Predicated region
      $region9: #{tpu_custom_call.1} parent=5 // pred_check
        _
      $region10: #{tpu_custom_call.1} parent=5 // pred_check_branch
        %310 = sbr.rel (%p307) target = $region12
      $region11: #{tpu_custom_call.1} parent=5 // pred_region
        %s311 = ssub.s32 %s20, 1
        // Predicated region
        $region13: #{tpu_custom_call.1} parent=11 // pred_check
          %p312 = pneg %p145
        $region14: #{tpu_custom_call.1} parent=11 // pred_check_branch
          %314 = sbr.rel (%p312) target = $region16
        $region15: #{tpu_custom_call.1} parent=11 // pred_region
          _
        $region16: #{tpu_custom_call.1} parent=11 // pred_fallthru
          _
        // Predicated region
        $region17: #{tpu_custom_call.1} parent=11 // pred_check
          %p315 = pneg %p166
        $region18: #{tpu_custom_call.1} parent=11 // pred_check_branch
          %317 = sbr.rel (%p315) target = $region20
        $region19: #{tpu_custom_call.1} parent=11 // pred_region
          _
        $region20: #{tpu_custom_call.1} parent=11 // pred_fallthru
          _
        // Predicated region
        $region21: #{tpu_custom_call.1} parent=11 // pred_check
          %p318 = pneg %p187
        $region22: #{tpu_custom_call.1} parent=11 // pred_check_branch
          %320 = sbr.rel (%p318) target = $region24
        $region23: #{tpu_custom_call.1} parent=11 // pred_region
          _
        $region24: #{tpu_custom_call.1} parent=11 // pred_fallthru
          _
        // Predicated region
        $region25: #{tpu_custom_call.1} parent=11 // pred_check
          %p321 = pneg %p208
        $region26: #{tpu_custom_call.1} parent=11 // pred_check_branch
          %323 = sbr.rel (%p321) target = $region28
        $region27: #{tpu_custom_call.1} parent=11 // pred_region
          _
        $region28: #{tpu_custom_call.1} parent=11 // pred_fallthru
          _
        // Predicated region
        $region29: #{tpu_custom_call.1} parent=11 // pred_check
          %p324 = pneg %p229
        $region30: #{tpu_custom_call.1} parent=11 // pred_check_branch
          %326 = sbr.rel (%p324) target = $region32
        $region31: #{tpu_custom_call.1} parent=11 // pred_region
          _
        $region32: #{tpu_custom_call.1} parent=11 // pred_fallthru
          _
        // Predicated region
        $region33: #{tpu_custom_call.1} parent=11 // pred_check
          %p327 = pneg %p250
        $region34: #{tpu_custom_call.1} parent=11 // pred_check_branch
          %329 = sbr.rel (%p327) target = $region36
        $region35: #{tpu_custom_call.1} parent=11 // pred_region
          _
        $region36: #{tpu_custom_call.1} parent=11 // pred_fallthru
          _
        // Predicated region
        $region37: #{tpu_custom_call.1} parent=11 // pred_check
          %p330 = pneg %p271
        $region38: #{tpu_custom_call.1} parent=11 // pred_check_branch
          %332 = sbr.rel (%p330) target = $region40
        $region39: #{tpu_custom_call.1} parent=11 // pred_region
          _
        $region40: #{tpu_custom_call.1} parent=11 // pred_fallthru
          _
      $region12: #{tpu_custom_call.1} parent=5 // pred_fallthru
        _
      %p333 = scmp.lt.s32.totalorder %s20, 2
      // Predicated region
      $region41: #{tpu_custom_call.1} parent=5 // pred_check
        %p334 = pneg %p333
      $region42: #{tpu_custom_call.1} parent=5 // pred_check_branch
        %336 = sbr.rel (%p334) target = $region44
      $region43: #{tpu_custom_call.1} parent=5 // pred_region
        // Predicated region
        $region45: #{tpu_custom_call.1} parent=43 // pred_check
          %p337 = pneg %p40
        $region46: #{tpu_custom_call.1} parent=43 // pred_check_branch
          %339 = sbr.rel (%p337) target = $region48
        $region47: #{tpu_custom_call.1} parent=43 // pred_region
          %s340 = smul.u32 8, %s20
          %p341 = scmp.lt.s32.totalorder %s340, 15
          %s342 = scalar_select %p341, %s340, 15
          %s343 = smul.addr %s342, 2
          %s344 = smul.addr %s343, 8
          %s345 = scalar_lea.vmem %s0, %s344
          %s346 = smul.u32 8, %s20
        $region48: #{tpu_custom_call.1} parent=43 // pred_fallthru
          _
        // Predicated region
        $region49: #{tpu_custom_call.1} parent=43 // pred_check
          %p347 = pneg %p66
        $region50: #{tpu_custom_call.1} parent=43 // pred_check_branch
          %349 = sbr.rel (%p347) target = $region52
        $region51: #{tpu_custom_call.1} parent=43 // pred_region
          %s350 = smul.u32 8, %s20
          %p351 = scmp.lt.s32.totalorder %s350, 15
          %s352 = scalar_select %p351, %s350, 15
          %s353 = smul.addr %s352, 6
          %s354 = smul.addr %s353, 8
          %s355 = scalar_lea.vmem %s1, %s354
          %s356 = smul.u32 8, %s20
        $region52: #{tpu_custom_call.1} parent=43 // pred_fallthru
          _
        // Predicated region
        $region53: #{tpu_custom_call.1} parent=43 // pred_check
          %p357 = pneg %p92
        $region54: #{tpu_custom_call.1} parent=43 // pred_check_branch
          %359 = sbr.rel (%p357) target = $region56
        $region55: #{tpu_custom_call.1} parent=43 // pred_region
          %s360 = smul.u32 8, %s20
          %p361 = scmp.lt.s32.totalorder %s360, 15
          %s362 = scalar_select %p361, %s360, 15
          %s363 = smul.addr %s362, 2
          %s364 = smul.addr %s363, 8
          %s365 = scalar_lea.vmem %s2, %s364
          %s366 = smul.u32 8, %s20
        $region56: #{tpu_custom_call.1} parent=43 // pred_fallthru
          _
        // Predicated region
        $region57: #{tpu_custom_call.1} parent=43 // pred_check
          %p367 = pneg %p118
        $region58: #{tpu_custom_call.1} parent=43 // pred_check_branch
          %369 = sbr.rel (%p367) target = $region60
        $region59: #{tpu_custom_call.1} parent=43 // pred_region
          %s370 = sand.u32 %s108, 1
          %s371 = scalar_lea.sflag [#allocation3], %s370
          %s372 = sand.u32 %s108, 1
          %s373 = smul.addr %s372, 384
          %s374 = scalar_lea.vmem [#allocation2], %s373
          %s375 = smul.u32 8, %s20
          %s377 = ssub.s32 6144, 6144
          %378 = vsyncadd %s371, %s377
          %s379 = smul.addr %s375, 6
          %s380 = smul.addr %s379, 128
          %s381 = scalar_lea.hbm %s3, %s380
          %s382 = sshll.u32 %s374, 4
          %s383 = int_to_ptr.vmem [resolvable:$true] %s382
          %388 = dma.hbm_to_vmem [thread:$0]  %s381, 6144, %s383, %s371, 128, 128, 8
        $region60: #{tpu_custom_call.1} parent=43 // pred_fallthru
          _
      $region44: #{tpu_custom_call.1} parent=5 // pred_fallthru
        _
      %p389 = scmp.le.s32.totalorder 1, %s20
      %p390 = scmp.lt.s32.totalorder %s20, 3
      %p391 = pnand %p389, %p390
      %p392 = pneg %p391
      // Predicated region
      $region61: #{tpu_custom_call.1} parent=5 // pred_check
        _
      $region62: #{tpu_custom_call.1} parent=5 // pred_check_branch
        %394 = sbr.rel (%p391) target = $region64
      $region63: #{tpu_custom_call.1} parent=5 // pred_region
        %s395 = ssub.s32 %s20, 1
        %s396 = sand.u32 %s111, 1
        %s397 = scalar_lea.sflag [#allocation3], %s396
        %s398 = sand.u32 %s111, 1
        %s399 = smul.addr %s398, 384
        %s400 = scalar_lea.vmem [#allocation2], %s399
        // Predicated region
        $region65: #{tpu_custom_call.1} parent=63 // pred_check
          %p401 = pneg %p124
        $region66: #{tpu_custom_call.1} parent=63 // pred_check_branch
          %403 = sbr.rel (%p401) target = $region68
        $region67: #{tpu_custom_call.1} parent=63 // pred_region
          %404 = dma.done %s397, 6144
        $region68: #{tpu_custom_call.1} parent=63 // pred_fallthru
          _
        %s405 = smul.u32 8, %s25
        %p406 = scmp.lt.s32.totalorder %s405, 15
        %s407 = scalar_select %p406, %s405, 15
        %s408 = smul.addr %s407, 2
        %s409 = smul.addr %s408, 8
        %s410 = scalar_lea.vmem %s0, %s409
        %p411 = pneg %p46
        %p412 = pneg %p43
        %s413 = smul.u32 8, %s25
        %p414 = scmp.lt.s32.totalorder %s413, 15
        %s415 = scalar_select %p414, %s413, 15
        %s416 = smul.addr %s415, 6
        %s417 = smul.addr %s416, 8
        %s418 = scalar_lea.vmem %s1, %s417
        %p419 = pneg %p72
        %p420 = pneg %p69
        %s421 = smul.u32 8, %s25
        %p422 = scmp.lt.s32.totalorder %s421, 15
        %s423 = scalar_select %p422, %s421, 15
        %s424 = smul.addr %s423, 2
        %s425 = smul.addr %s424, 8
        %s426 = scalar_lea.vmem %s2, %s425
        %p427 = pneg %p98
        %p428 = pneg %p95
        %s429 = sand.u32 %s111, 1
        %s430 = scalar_lea.sflag [#allocation3], %s429
        %s431 = sand.u32 %s111, 1
        %s432 = smul.addr %s431, 384
        %s433 = scalar_lea.vmem [#allocation2], %s432
        %p434 = pneg %p124
        %p435 = pneg %p121
        %p436 = pneg %p145
        %p437 = pneg %p142
        %p438 = pneg %p166
        %p439 = pneg %p163
        %p440 = pneg %p187
        %p441 = pneg %p184
        %p442 = pneg %p208
        %p443 = pneg %p205
        %p444 = pneg %p229
        %p445 = pneg %p226
        %p446 = pneg %p250
        %p447 = pneg %p247
        %p448 = pneg %p271
        %p449 = pneg %p268
        %p450 = pneg %p297
        %p451 = pneg %p294
        %p452 = scmp.lt.s32.totalorder %s25, 1
        %s453 = scalar_select %p452, %s25, 1
        %s454 = smul.addr %s453, 8
        %s455 = scalar_lea.vmem %s11, %s454
        %s456 = smul.u32 8, %s25
        %p457 = scmp.lt.s32.totalorder %s456, 15
        %s458 = scalar_select %p457, %s456, 15
        %s459 = smul.addr %s458, 2
        %s460 = smul.addr %s459, 8
        %s461 = scalar_lea.vmem %s0, %s460
        %s462 = smul.u32 8, %s25
        %s463 = smul.u32 8, %s25
        %p464 = scmp.lt.s32.totalorder %s463, 15
        %s465 = scalar_select %p464, %s463, 15
        %s466 = smul.addr %s465, 6
        %s467 = smul.addr %s466, 8
        %s468 = scalar_lea.vmem %s1, %s467
        %s469 = smul.u32 8, %s25
        %s470 = smul.u32 8, %s25
        %p471 = scmp.lt.s32.totalorder %s470, 15
        %s472 = scalar_select %p471, %s470, 15
        %s473 = smul.addr %s472, 2
        %s474 = smul.addr %s473, 8
        %s475 = scalar_lea.vmem %s2, %s474
        %s476 = smul.u32 8, %s25
        %s477 = smul.u32 8, %s25
        %p478 = scmp.lt.s32.totalorder %s25, 1
        %s479 = scalar_select %p478, %s25, 1
        %s480 = smul.addr %s479, 8
        %s481 = scalar_lea.vmem %s11, %s480
        %v483 = vld [vmem:[%s461] sm:$0xff]
        %v484 = vld [vmem:[%s461 + $0x8] sm:$0xff]
        %v485 = vld [vmem:[%s461 + $0x10] sm:$0xff]
        %v486 = vld [vmem:[%s461 + $0x18] sm:$0xff]
        %v487 = vld [vmem:[%s461 + $0x20] sm:$0xff]
        %v488 = vld [vmem:[%s461 + $0x28] sm:$0xff]
        %v489 = vld [vmem:[%s461 + $0x30] sm:$0xff]
        %v490 = vld [vmem:[%s461 + $0x38] sm:$0xff]
        %v491 = vld [vmem:[%s461 + $0x40] sm:$0xff]
        %v492 = vld [vmem:[%s461 + $0x48] sm:$0xff]
        %v493 = vld [vmem:[%s461 + $0x50] sm:$0xff]
        %v494 = vld [vmem:[%s461 + $0x58] sm:$0xff]
        %v495 = vld [vmem:[%s461 + $0x60] sm:$0xff]
        %v496 = vld [vmem:[%s461 + $0x68] sm:$0xff]
        %v497 = vld [vmem:[%s461 + $0x70] sm:$0xff]
        %v498 = vld [vmem:[%s461 + $0x78] sm:$0xff]
        %v499 = vld [vmem:[%s468] sm:$0xff]
        %v500 = vld [vmem:[%s468 + $0x8] sm:$0xff]
        %v501 = vld [vmem:[%s468 + $0x10] sm:$0xff]
        %v502 = vld [vmem:[%s468 + $0x18] sm:$0xff]
        %v503 = vld [vmem:[%s468 + $0x20] sm:$0xff]
        %v504 = vld [vmem:[%s468 + $0x28] sm:$0xff]
        %v505 = vld [vmem:[%s468 + $0x30] sm:$0xff]
        %v506 = vld [vmem:[%s468 + $0x38] sm:$0xff]
        %v507 = vld [vmem:[%s468 + $0x40] sm:$0xff]
        %v508 = vld [vmem:[%s468 + $0x48] sm:$0xff]
        %v509 = vld [vmem:[%s468 + $0x50] sm:$0xff]
        %v510 = vld [vmem:[%s468 + $0x58] sm:$0xff]
        %v511 = vld [vmem:[%s468 + $0x60] sm:$0xff]
        %v512 = vld [vmem:[%s468 + $0x68] sm:$0xff]
        %v513 = vld [vmem:[%s468 + $0x70] sm:$0xff]
        %v514 = vld [vmem:[%s468 + $0x78] sm:$0xff]
        %v515 = vld [vmem:[%s468 + $0x80] sm:$0xff]
        %v516 = vld [vmem:[%s468 + $0x88] sm:$0xff]
        %v517 = vld [vmem:[%s468 + $0x90] sm:$0xff]
        %v518 = vld [vmem:[%s468 + $0x98] sm:$0xff]
        %v519 = vld [vmem:[%s468 + $0xa0] sm:$0xff]
        %v520 = vld [vmem:[%s468 + $0xa8] sm:$0xff]
        %v521 = vld [vmem:[%s468 + $0xb0] sm:$0xff]
        %v522 = vld [vmem:[%s468 + $0xb8] sm:$0xff]
        %v523 = vld [vmem:[%s468 + $0xc0] sm:$0xff]
        %v524 = vld [vmem:[%s468 + $0xc8] sm:$0xff]
        %v525 = vld [vmem:[%s468 + $0xd0] sm:$0xff]
        %v526 = vld [vmem:[%s468 + $0xd8] sm:$0xff]
        %v527 = vld [vmem:[%s468 + $0xe0] sm:$0xff]
        %v528 = vld [vmem:[%s468 + $0xe8] sm:$0xff]
        %v529 = vld [vmem:[%s468 + $0xf0] sm:$0xff]
        %v530 = vld [vmem:[%s468 + $0xf8] sm:$0xff]
        %v531 = vld [vmem:[%s468 + $0x100] sm:$0xff]
        %v532 = vld [vmem:[%s468 + $0x108] sm:$0xff]
        %v533 = vld [vmem:[%s468 + $0x110] sm:$0xff]
        %v534 = vld [vmem:[%s468 + $0x118] sm:$0xff]
        %v535 = vld [vmem:[%s468 + $0x120] sm:$0xff]
        %v536 = vld [vmem:[%s468 + $0x128] sm:$0xff]
        %v537 = vld [vmem:[%s468 + $0x130] sm:$0xff]
        %v538 = vld [vmem:[%s468 + $0x138] sm:$0xff]
        %v539 = vld [vmem:[%s468 + $0x140] sm:$0xff]
        %v540 = vld [vmem:[%s468 + $0x148] sm:$0xff]
        %v541 = vld [vmem:[%s468 + $0x150] sm:$0xff]
        %v542 = vld [vmem:[%s468 + $0x158] sm:$0xff]
        %v543 = vld [vmem:[%s468 + $0x160] sm:$0xff]
        %v544 = vld [vmem:[%s468 + $0x168] sm:$0xff]
        %v545 = vld [vmem:[%s468 + $0x170] sm:$0xff]
        %v546 = vld [vmem:[%s468 + $0x178] sm:$0xff]
        %v547 = vand.u32 2147483647, %v499
        %v548 = vand.u32 2147483647, %v500
        %v549 = vand.u32 2147483647, %v501
        %v550 = vand.u32 2147483647, %v502
        %v551 = vand.u32 2147483647, %v503
        %v552 = vand.u32 2147483647, %v504
        %v553 = vand.u32 2147483647, %v505
        %v554 = vand.u32 2147483647, %v506
        %v555 = vand.u32 2147483647, %v507
        %v556 = vand.u32 2147483647, %v508
        %v557 = vand.u32 2147483647, %v509
        %v558 = vand.u32 2147483647, %v510
        %v559 = vand.u32 2147483647, %v511
        %v560 = vand.u32 2147483647, %v512
        %v561 = vand.u32 2147483647, %v513
        %v562 = vand.u32 2147483647, %v514
        %v563 = vand.u32 2147483647, %v515
        %v564 = vand.u32 2147483647, %v516
        %v565 = vand.u32 2147483647, %v517
        %v566 = vand.u32 2147483647, %v518
        %v567 = vand.u32 2147483647, %v519
        %v568 = vand.u32 2147483647, %v520
        %v569 = vand.u32 2147483647, %v521
        %v570 = vand.u32 2147483647, %v522
        %v571 = vand.u32 2147483647, %v523
        %v572 = vand.u32 2147483647, %v524
        %v573 = vand.u32 2147483647, %v525
        %v574 = vand.u32 2147483647, %v526
        %v575 = vand.u32 2147483647, %v527
        %v576 = vand.u32 2147483647, %v528
        %v577 = vand.u32 2147483647, %v529
        %v578 = vand.u32 2147483647, %v530
        %v579 = vand.u32 2147483647, %v531
        %v580 = vand.u32 2147483647, %v532
        %v581 = vand.u32 2147483647, %v533
        %v582 = vand.u32 2147483647, %v534
        %v583 = vand.u32 2147483647, %v535
        %v584 = vand.u32 2147483647, %v536
        %v585 = vand.u32 2147483647, %v537
        %v586 = vand.u32 2147483647, %v538
        %v587 = vand.u32 2147483647, %v539
        %v588 = vand.u32 2147483647, %v540
        %v589 = vand.u32 2147483647, %v541
        %v590 = vand.u32 2147483647, %v542
        %v591 = vand.u32 2147483647, %v543
        %v592 = vand.u32 2147483647, %v544
        %v593 = vand.u32 2147483647, %v545
        %v594 = vand.u32 2147483647, %v546
        %vm595 = vcmask 130048
        %v596 = vsel %vm595, %v547, 0.0
        %597 = vadd.xlane.f32.xlu0 %v596
        %v598 = vpop.xlane.xlu0 %597
        %v599 = vsel %vm595, %v548, 0.0
        %600 = vadd.xlane.f32.xlu0 %v599
        %v601 = vpop.xlane.xlu0 %600
        %v602 = vsel %vm595, %v549, 0.0
        %603 = vadd.xlane.f32.xlu0 %v602
        %v604 = vpop.xlane.xlu0 %603
        %v605 = vsel %vm595, %v550, 0.0
        %606 = vadd.xlane.f32.xlu0 %v605
        %v607 = vpop.xlane.xlu0 %606
        %v608 = vsel %vm595, %v551, 0.0
        %609 = vadd.xlane.f32.xlu0 %v608
        %v610 = vpop.xlane.xlu0 %609
        %v611 = vsel %vm595, %v552, 0.0
        %612 = vadd.xlane.f32.xlu0 %v611
        %v613 = vpop.xlane.xlu0 %612
        %v614 = vsel %vm595, %v553, 0.0
        %615 = vadd.xlane.f32.xlu0 %v614
        %v616 = vpop.xlane.xlu0 %615
        %v617 = vsel %vm595, %v554, 0.0
        %618 = vadd.xlane.f32.xlu0 %v617
        %v619 = vpop.xlane.xlu0 %618
        %v620 = vsel %vm595, %v555, 0.0
        %621 = vadd.xlane.f32.xlu0 %v620
        %v622 = vpop.xlane.xlu0 %621
        %v623 = vsel %vm595, %v556, 0.0
        %624 = vadd.xlane.f32.xlu0 %v623
        %v625 = vpop.xlane.xlu0 %624
        %v626 = vsel %vm595, %v557, 0.0
        %627 = vadd.xlane.f32.xlu0 %v626
        %v628 = vpop.xlane.xlu0 %627
        %v629 = vsel %vm595, %v558, 0.0
        %630 = vadd.xlane.f32.xlu0 %v629
        %v631 = vpop.xlane.xlu0 %630
        %v632 = vsel %vm595, %v559, 0.0
        %633 = vadd.xlane.f32.xlu0 %v632
        %v634 = vpop.xlane.xlu0 %633
        %v635 = vsel %vm595, %v560, 0.0
        %636 = vadd.xlane.f32.xlu0 %v635
        %v637 = vpop.xlane.xlu0 %636
        %v638 = vsel %vm595, %v561, 0.0
        %639 = vadd.xlane.f32.xlu0 %v638
        %v640 = vpop.xlane.xlu0 %639
        %v641 = vsel %vm595, %v562, 0.0
        %642 = vadd.xlane.f32.xlu0 %v641
        %v643 = vpop.xlane.xlu0 %642
        %v644 = vsel %vm595, %v563, 0.0
        %645 = vadd.xlane.f32.xlu0 %v644
        %v646 = vpop.xlane.xlu0 %645
        %v647 = vsel %vm595, %v564, 0.0
        %648 = vadd.xlane.f32.xlu0 %v647
        %v649 = vpop.xlane.xlu0 %648
        %v650 = vsel %vm595, %v565, 0.0
        %651 = vadd.xlane.f32.xlu0 %v650
        %v652 = vpop.xlane.xlu0 %651
        %v653 = vsel %vm595, %v566, 0.0
        %654 = vadd.xlane.f32.xlu0 %v653
        %v655 = vpop.xlane.xlu0 %654
        %v656 = vsel %vm595, %v567, 0.0
        %657 = vadd.xlane.f32.xlu0 %v656
        %v658 = vpop.xlane.xlu0 %657
        %v659 = vsel %vm595, %v568, 0.0
        %660 = vadd.xlane.f32.xlu0 %v659
        %v661 = vpop.xlane.xlu0 %660
        %v662 = vsel %vm595, %v569, 0.0
        %663 = vadd.xlane.f32.xlu0 %v662
        %v664 = vpop.xlane.xlu0 %663
        %v665 = vsel %vm595, %v570, 0.0
        %666 = vadd.xlane.f32.xlu0 %v665
        %v667 = vpop.xlane.xlu0 %666
        %v668 = vsel %vm595, %v571, 0.0
        %669 = vadd.xlane.f32.xlu0 %v668
        %v670 = vpop.xlane.xlu0 %669
        %v671 = vsel %vm595, %v572, 0.0
        %672 = vadd.xlane.f32.xlu0 %v671
        %v673 = vpop.xlane.xlu0 %672
        %v674 = vsel %vm595, %v573, 0.0
        %675 = vadd.xlane.f32.xlu0 %v674
        %v676 = vpop.xlane.xlu0 %675
        %v677 = vsel %vm595, %v574, 0.0
        %678 = vadd.xlane.f32.xlu0 %v677
        %v679 = vpop.xlane.xlu0 %678
        %v680 = vsel %vm595, %v575, 0.0
        %681 = vadd.xlane.f32.xlu0 %v680
        %v682 = vpop.xlane.xlu0 %681
        %v683 = vsel %vm595, %v576, 0.0
        %684 = vadd.xlane.f32.xlu0 %v683
        %v685 = vpop.xlane.xlu0 %684
        %v686 = vsel %vm595, %v577, 0.0
        %687 = vadd.xlane.f32.xlu0 %v686
        %v688 = vpop.xlane.xlu0 %687
        %v689 = vsel %vm595, %v578, 0.0
        %690 = vadd.xlane.f32.xlu0 %v689
        %v691 = vpop.xlane.xlu0 %690
        %v692 = vsel %vm595, %v579, 0.0
        %693 = vadd.xlane.f32.xlu0 %v692
        %v694 = vpop.xlane.xlu0 %693
        %v695 = vsel %vm595, %v580, 0.0
        %696 = vadd.xlane.f32.xlu0 %v695
        %v697 = vpop.xlane.xlu0 %696
        %v698 = vsel %vm595, %v581, 0.0
        %699 = vadd.xlane.f32.xlu0 %v698
        %v700 = vpop.xlane.xlu0 %699
        %v701 = vsel %vm595, %v582, 0.0
        %702 = vadd.xlane.f32.xlu0 %v701
        %v703 = vpop.xlane.xlu0 %702
        %v704 = vsel %vm595, %v583, 0.0
        %705 = vadd.xlane.f32.xlu0 %v704
        %v706 = vpop.xlane.xlu0 %705
        %v707 = vsel %vm595, %v584, 0.0
        %708 = vadd.xlane.f32.xlu0 %v707
        %v709 = vpop.xlane.xlu0 %708
        %v710 = vsel %vm595, %v585, 0.0
        %711 = vadd.xlane.f32.xlu0 %v710
        %v712 = vpop.xlane.xlu0 %711
        %v713 = vsel %vm595, %v586, 0.0
        %714 = vadd.xlane.f32.xlu0 %v713
        %v715 = vpop.xlane.xlu0 %714
        %v716 = vsel %vm595, %v587, 0.0
        %717 = vadd.xlane.f32.xlu0 %v716
        %v718 = vpop.xlane.xlu0 %717
        %v719 = vsel %vm595, %v588, 0.0
        %720 = vadd.xlane.f32.xlu0 %v719
        %v721 = vpop.xlane.xlu0 %720
        %v722 = vsel %vm595, %v589, 0.0
        %723 = vadd.xlane.f32.xlu0 %v722
        %v724 = vpop.xlane.xlu0 %723
        %v725 = vsel %vm595, %v590, 0.0
        %726 = vadd.xlane.f32.xlu0 %v725
        %v727 = vpop.xlane.xlu0 %726
        %v728 = vsel %vm595, %v591, 0.0
        %729 = vadd.xlane.f32.xlu0 %v728
        %v730 = vpop.xlane.xlu0 %729
        %v731 = vsel %vm595, %v592, 0.0
        %732 = vadd.xlane.f32.xlu0 %v731
        %v733 = vpop.xlane.xlu0 %732
        %v734 = vsel %vm595, %v593, 0.0
        %735 = vadd.xlane.f32.xlu0 %v734
        %v736 = vpop.xlane.xlu0 %735
        %v737 = vsel %vm595, %v594, 0.0
        %738 = vadd.xlane.f32.xlu0 %v737
        %v739 = vpop.xlane.xlu0 %738
        %v740 = vmax.f32 %v598, 1e-12
        %v741 = vmax.f32 %v601, 1e-12
        %v742 = vmax.f32 %v604, 1e-12
        %v743 = vmax.f32 %v607, 1e-12
        %v744 = vmax.f32 %v610, 1e-12
        %v745 = vmax.f32 %v613, 1e-12
        %v746 = vmax.f32 %v616, 1e-12
        %v747 = vmax.f32 %v619, 1e-12
        %v748 = vmax.f32 %v622, 1e-12
        %v749 = vmax.f32 %v625, 1e-12
        %v750 = vmax.f32 %v628, 1e-12
        %v751 = vmax.f32 %v631, 1e-12
        %v752 = vmax.f32 %v634, 1e-12
        %v753 = vmax.f32 %v637, 1e-12
        %v754 = vmax.f32 %v640, 1e-12
        %v755 = vmax.f32 %v643, 1e-12
        %v756 = vmax.f32 %v646, 1e-12
        %v757 = vmax.f32 %v649, 1e-12
        %v758 = vmax.f32 %v652, 1e-12
        %v759 = vmax.f32 %v655, 1e-12
        %v760 = vmax.f32 %v658, 1e-12
        %v761 = vmax.f32 %v661, 1e-12
        %v762 = vmax.f32 %v664, 1e-12
        %v763 = vmax.f32 %v667, 1e-12
        %v764 = vmax.f32 %v670, 1e-12
        %v765 = vmax.f32 %v673, 1e-12
        %v766 = vmax.f32 %v676, 1e-12
        %v767 = vmax.f32 %v679, 1e-12
        %v768 = vmax.f32 %v682, 1e-12
        %v769 = vmax.f32 %v685, 1e-12
        %v770 = vmax.f32 %v688, 1e-12
        %v771 = vmax.f32 %v691, 1e-12
        %v772 = vmax.f32 %v694, 1e-12
        %v773 = vmax.f32 %v697, 1e-12
        %v774 = vmax.f32 %v700, 1e-12
        %v775 = vmax.f32 %v703, 1e-12
        %v776 = vmax.f32 %v706, 1e-12
        %v777 = vmax.f32 %v709, 1e-12
        %v778 = vmax.f32 %v712, 1e-12
        %v779 = vmax.f32 %v715, 1e-12
        %v780 = vmax.f32 %v718, 1e-12
        %v781 = vmax.f32 %v721, 1e-12
        %v782 = vmax.f32 %v724, 1e-12
        %v783 = vmax.f32 %v727, 1e-12
        %v784 = vmax.f32 %v730, 1e-12
        %v785 = vmax.f32 %v733, 1e-12
        %v786 = vmax.f32 %v736, 1e-12
        %v787 = vmax.f32 %v739, 1e-12
        %v788 = vrcp.pop %v740
        %v789 = vrcp.pop %v741
        %v790 = vrcp.pop %v742
        %v791 = vrcp.pop %v743
        %v792 = vrcp.pop %v744
        %v793 = vrcp.pop %v745
        %v794 = vrcp.pop %v746
        %v795 = vrcp.pop %v747
        %v796 = vrcp.pop %v748
        %v797 = vrcp.pop %v749
        %v798 = vrcp.pop %v750
        %v799 = vrcp.pop %v751
        %v800 = vrcp.pop %v752
        %v801 = vrcp.pop %v753
        %v802 = vrcp.pop %v754
        %v803 = vrcp.pop %v755
        %v804 = vrcp.pop %v756
        %v805 = vrcp.pop %v757
        %v806 = vrcp.pop %v758
        %v807 = vrcp.pop %v759
        %v808 = vrcp.pop %v760
        %v809 = vrcp.pop %v761
        %v810 = vrcp.pop %v762
        %v811 = vrcp.pop %v763
        %v812 = vrcp.pop %v764
        %v813 = vrcp.pop %v765
        %v814 = vrcp.pop %v766
        %v815 = vrcp.pop %v767
        %v816 = vrcp.pop %v768
        %v817 = vrcp.pop %v769
        %v818 = vrcp.pop %v770
        %v819 = vrcp.pop %v771
        %v820 = vrcp.pop %v772
        %v821 = vrcp.pop %v773
        %v822 = vrcp.pop %v774
        %v823 = vrcp.pop %v775
        %v824 = vrcp.pop %v776
        %v825 = vrcp.pop %v777
        %v826 = vrcp.pop %v778
        %v827 = vrcp.pop %v779
        %v828 = vrcp.pop %v780
        %v829 = vrcp.pop %v781
        %v830 = vrcp.pop %v782
        %v831 = vrcp.pop %v783
        %v832 = vrcp.pop %v784
        %v833 = vrcp.pop %v785
        %v834 = vrcp.pop %v786
        %v835 = vrcp.pop %v787
        %v836 = vmul.f32 %v499, %v788
        %v837 = vmul.f32 %v500, %v789
        %v838 = vmul.f32 %v501, %v790
        %v839 = vmul.f32 %v502, %v791
        %v840 = vmul.f32 %v503, %v792
        %v841 = vmul.f32 %v504, %v793
        %v842 = vmul.f32 %v505, %v794
        %v843 = vmul.f32 %v506, %v795
        %v844 = vmul.f32 %v507, %v796
        %v845 = vmul.f32 %v508, %v797
        %v846 = vmul.f32 %v509, %v798
        %v847 = vmul.f32 %v510, %v799
        %v848 = vmul.f32 %v511, %v800
        %v849 = vmul.f32 %v512, %v801
        %v850 = vmul.f32 %v513, %v802
        %v851 = vmul.f32 %v514, %v803
        %v852 = vmul.f32 %v515, %v804
        %v853 = vmul.f32 %v516, %v805
        %v854 = vmul.f32 %v517, %v806
        %v855 = vmul.f32 %v518, %v807
        %v856 = vmul.f32 %v519, %v808
        %v857 = vmul.f32 %v520, %v809
        %v858 = vmul.f32 %v521, %v810
        %v859 = vmul.f32 %v522, %v811
        %v860 = vmul.f32 %v523, %v812
        %v861 = vmul.f32 %v524, %v813
        %v862 = vmul.f32 %v525, %v814
        %v863 = vmul.f32 %v526, %v815
        %v864 = vmul.f32 %v527, %v816
        %v865 = vmul.f32 %v528, %v817
        %v866 = vmul.f32 %v529, %v818
        %v867 = vmul.f32 %v530, %v819
        %v868 = vmul.f32 %v531, %v820
        %v869 = vmul.f32 %v532, %v821
        %v870 = vmul.f32 %v533, %v822
        %v871 = vmul.f32 %v534, %v823
        %v872 = vmul.f32 %v535, %v824
        %v873 = vmul.f32 %v536, %v825
        %v874 = vmul.f32 %v537, %v826
        %v875 = vmul.f32 %v538, %v827
        %v876 = vmul.f32 %v539, %v828
        %v877 = vmul.f32 %v540, %v829
        %v878 = vmul.f32 %v541, %v830
        %v879 = vmul.f32 %v542, %v831
        %v880 = vmul.f32 %v543, %v832
        %v881 = vmul.f32 %v544, %v833
        %v882 = vmul.f32 %v545, %v834
        %v883 = vmul.f32 %v546, %v835
        %v884 = vpack.c.bf16 %v837, %v836
        %v885 = vpack.c.bf16 %v839, %v838
        %v886 = vpack.c.bf16 %v841, %v840
        %v887 = vpack.c.bf16 %v843, %v842
        %v888 = vpack.c.bf16 %v845, %v844
        %v889 = vpack.c.bf16 %v847, %v846
        %v890 = vpack.c.bf16 %v849, %v848
        %v891 = vpack.c.bf16 %v851, %v850
        %v892 = vpack.c.bf16 %v853, %v852
        %v893 = vpack.c.bf16 %v855, %v854
        %v894 = vpack.c.bf16 %v857, %v856
        %v895 = vpack.c.bf16 %v859, %v858
        %v896 = vpack.c.bf16 %v861, %v860
        %v897 = vpack.c.bf16 %v863, %v862
        %v898 = vpack.c.bf16 %v865, %v864
        %v899 = vpack.c.bf16 %v867, %v866
        %v900 = vpack.c.bf16 %v869, %v868
        %v901 = vpack.c.bf16 %v871, %v870
        %v902 = vpack.c.bf16 %v873, %v872
        %v903 = vpack.c.bf16 %v875, %v874
        %v904 = vpack.c.bf16 %v877, %v876
        %v905 = vpack.c.bf16 %v879, %v878
        %v906 = vpack.c.bf16 %v881, %v880
        %v907 = vpack.c.bf16 %v883, %v882
        %v908 = vpack.c.bf16 %v484, %v483
        %v909 = vpack.c.bf16 %v486, %v485
        %v910 = vpack.c.bf16 %v488, %v487
        %v911 = vpack.c.bf16 %v490, %v489
        %v912 = vpack.c.bf16 %v492, %v491
        %v913 = vpack.c.bf16 %v494, %v493
        %v914 = vpack.c.bf16 %v496, %v495
        %v915 = vpack.c.bf16 %v498, %v497
        %v917 = vsel %vm595, %v884, 0
        %v920 = vsel %vm595, %v885, 0
        %v923 = vsel %vm595, %v886, 0
        %925 = vmatprep.subr.bf16.mxu0 0
        %926 = vmatpush1.bf16.msra.mxu0 %v908
        %927 = vmatprep.subr.bf16.mxu0 0
        %928 = vmatpush1.bf16.msra.mxu0 0
        %929 = vmatprep.subr.bf16.mxu0 0
        %930 = vmatpush1.bf16.msra.mxu0 0
        %931 = vmatprep.subr.bf16.mxu0 0
        %932 = vmatpush1.bf16.msra.mxu0 0
        %933 = vmatprep.subr.bf16.mxu0 0
        %934 = vmatpush1.bf16.msra.mxu0 0
        %935 = vmatprep.subr.bf16.mxu0 0
        %936 = vmatpush1.bf16.msra.mxu0 0
        %937 = vmatprep.subr.bf16.mxu0 0
        %938 = vmatpush1.bf16.msra.mxu0 0
        %939 = vmatprep.subr.bf16.mxu0 0
        %940 = vmatpush1.bf16.msra.mxu0 0
        %941 = vmatprep.subr.bf16.mxu0 0
        %942 = vmatpush1.bf16.msra.mxu0 0
        %943 = vmatprep.subr.bf16.mxu0 0
        %944 = vmatpush1.bf16.msra.mxu0 0
        %945 = vmatprep.subr.bf16.mxu0 0
        %946 = vmatpush1.bf16.msra.mxu0 0
        %947 = vmatprep.subr.bf16.mxu0 0
        %948 = vmatpush1.bf16.msra.mxu0 0
        %949 = vmatprep.subr.bf16.mxu0 0
        %950 = vmatpush1.bf16.msra.mxu0 0
        %951 = vmatprep.subr.bf16.mxu0 0
        %952 = vmatpush1.bf16.msra.mxu0 0
        %953 = vmatprep.subr.bf16.mxu0 0
        %954 = vmatpush1.bf16.msra.mxu0 0
        %955 = vmatprep.subr.bf16.mxu0 0
        %956 = vmatpush1.bf16.msra.mxu0 0
        %957 = vmatprep.mubr.bf16.mxu0 0
        %958 = vmatmul.mubr.bf16.gmra.mrb[0].mxu0 %v917
        %v959 = vpop.f32.mrb[0].mxu0
        %v960 = vadd.f32 0.0, %v959
        %v961 = vpop.f32.mrb[0].mxu0
        %v962 = vpop.f32.mrb[0].mxu0
        %v963 = vadd.f32 0.0, %v962
        %v964 = vpop.f32.mrb[0].mxu0
        %965 = vmatprep.mubr.bf16.mxu0 0
        %966 = vmatmul.mubr.bf16.gmra.mrb[0].mxu0 %v920
        %v967 = vpop.f32.mrb[0].mxu0
        %v968 = vadd.f32 0.0, %v967
        %v969 = vpop.f32.mrb[0].mxu0
        %v970 = vpop.f32.mrb[0].mxu0
        %v971 = vadd.f32 0.0, %v970
        %v972 = vpop.f32.mrb[0].mxu0
        %973 = vmatprep.mubr.bf16.mxu0 0
        %974 = vmatmul.mubr.bf16.gmra.mrb[0].mxu0 %v923
        %v975 = vpop.f32.mrb[0].mxu0
        %v976 = vadd.f32 0.0, %v975
        %v977 = vpop.f32.mrb[0].mxu0
        %v978 = vpop.f32.mrb[0].mxu0
        %v979 = vadd.f32 0.0, %v978
        %v980 = vpop.f32.mrb[0].mxu0
        %981 = vdwg.mxu0
        %v983 = vsel %vm595, %v887, 0
        %v986 = vsel %vm595, %v888, 0
        %v989 = vsel %vm595, %v889, 0
        %991 = vmatprep.subr.bf16.mxu0 0
        %992 = vmatpush1.bf16.msra.mxu0 %v909
        %993 = vmatprep.subr.bf16.mxu0 0
        %994 = vmatpush1.bf16.msra.mxu0 0
        %995 = vmatprep.subr.bf16.mxu0 0
        %996 = vmatpush1.bf16.msra.mxu0 0
        %997 = vmatprep.subr.bf16.mxu0 0
        %998 = vmatpush1.bf16.msra.mxu0 0
        %999 = vmatprep.subr.bf16.mxu0 0
        %1000 = vmatpush1.bf16.msra.mxu0 0
        %1001 = vmatprep.subr.bf16.mxu0 0
        %1002 = vmatpush1.bf16.msra.mxu0 0
        %1003 = vmatprep.subr.bf16.mxu0 0
        %1004 = vmatpush1.bf16.msra.mxu0 0
        %1005 = vmatprep.subr.bf16.mxu0 0
        %1006 = vmatpush1.bf16.msra.mxu0 0
        %1007 = vmatprep.subr.bf16.mxu0 0
        %1008 = vmatpush1.bf16.msra.mxu0 0
        %1009 = vmatprep.subr.bf16.mxu0 0
        %1010 = vmatpush1.bf16.msra.mxu0 0
        %1011 = vmatprep.subr.bf16.mxu0 0
        %1012 = vmatpush1.bf16.msra.mxu0 0
        %1013 = vmatprep.subr.bf16.mxu0 0
        %1014 = vmatpush1.bf16.msra.mxu0 0
        %1015 = vmatprep.subr.bf16.mxu0 0
        %1016 = vmatpush1.bf16.msra.mxu0 0
        %1017 = vmatprep.subr.bf16.mxu0 0
        %1018 = vmatpush1.bf16.msra.mxu0 0
        %1019 = vmatprep.subr.bf16.mxu0 0
        %1020 = vmatpush1.bf16.msra.mxu0 0
        %1021 = vmatprep.subr.bf16.mxu0 0
        %1022 = vmatpush1.bf16.msra.mxu0 0
        %1023 = vmatprep.mubr.bf16.mxu0 0
        %1024 = vmatmul.mubr.bf16.gmra.mrb[0].mxu0 %v983
        %v1025 = vpop.f32.mrb[0].mxu0
        %v1026 = vadd.f32 0.0, %v1025
        %v1027 = vpop.f32.mrb[0].mxu0
        %v1028 = vpop.f32.mrb[0].mxu0
        %v1029 = vadd.f32 0.0, %v1028
        %v1030 = vpop.f32.mrb[0].mxu0
        %1031 = vmatprep.mubr.bf16.mxu0 0
        %1032 = vmatmul.mubr.bf16.gmra.mrb[0].mxu0 %v986
        %v1033 = vpop.f32.mrb[0].mxu0
        %v1034 = vadd.f32 0.0, %v1033
        %v1035 = vpop.f32.mrb[0].mxu0
        %v1036 = vpop.f32.mrb[0].mxu0
        %v1037 = vadd.f32 0.0, %v1036
        %v1038 = vpop.f32.mrb[0].mxu0
        %1039 = vmatprep.mubr.bf16.mxu0 0
        %1040 = vmatmul.mubr.bf16.gmra.mrb[0].mxu0 %v989
        %v1041 = vpop.f32.mrb[0].mxu0
        %v1042 = vadd.f32 0.0, %v1041
        %v1043 = vpop.f32.mrb[0].mxu0
        %v1044 = vpop.f32.mrb[0].mxu0
        %v1045 = vadd.f32 0.0, %v1044
        %v1046 = vpop.f32.mrb[0].mxu0
        %1047 = vdwg.mxu0
        %v1049 = vsel %vm595, %v890, 0
        %v1052 = vsel %vm595, %v891, 0
        %v1055 = vsel %vm595, %v892, 0
        %1057 = vmatprep.subr.bf16.mxu0 0
        %1058 = vmatpush1.bf16.msra.mxu0 %v910
        %1059 = vmatprep.subr.bf16.mxu0 0
        %1060 = vmatpush1.bf16.msra.mxu0 0
        %1061 = vmatprep.subr.bf16.mxu0 0
        %1062 = vmatpush1.bf16.msra.mxu0 0
        %1063 = vmatprep.subr.bf16.mxu0 0
        %1064 = vmatpush1.bf16.msra.mxu0 0
        %1065 = vmatprep.subr.bf16.mxu0 0
        %1066 = vmatpush1.bf16.msra.mxu0 0
        %1067 = vmatprep.subr.bf16.mxu0 0
        %1068 = vmatpush1.bf16.msra.mxu0 0
        %1069 = vmatprep.subr.bf16.mxu0 0
        %1070 = vmatpush1.bf16.msra.mxu0 0
        %1071 = vmatprep.subr.bf16.mxu0 0
        %1072 = vmatpush1.bf16.msra.mxu0 0
        %1073 = vmatprep.subr.bf16.mxu0 0
        %1074 = vmatpush1.bf16.msra.mxu0 0
        %1075 = vmatprep.subr.bf16.mxu0 0
        %1076 = vmatpush1.bf16.msra.mxu0 0
        %1077 = vmatprep.subr.bf16.mxu0 0
        %1078 = vmatpush1.bf16.msra.mxu0 0
        %1079 = vmatprep.subr.bf16.mxu0 0
        %1080 = vmatpush1.bf16.msra.mxu0 0
        %1081 = vmatprep.subr.bf16.mxu0 0
        %1082 = vmatpush1.bf16.msra.mxu0 0
        %1083 = vmatprep.subr.bf16.mxu0 0
        %1084 = vmatpush1.bf16.msra.mxu0 0
        %1085 = vmatprep.subr.bf16.mxu0 0
        %1086 = vmatpush1.bf16.msra.mxu0 0
        %1087 = vmatprep.subr.bf16.mxu0 0
        %1088 = vmatpush1.bf16.msra.mxu0 0
        %1089 = vmatprep.mubr.bf16.mxu0 0
        %1090 = vmatmul.mubr.bf16.gmra.mrb[0].mxu0 %v1049
        %v1091 = vpop.f32.mrb[0].mxu0
        %v1092 = vadd.f32 0.0, %v1091
        %v1093 = vpop.f32.mrb[0].mxu0
        %v1094 = vpop.f32.mrb[0].mxu0
        %v1095 = vadd.f32 0.0, %v1094
        %v1096 = vpop.f32.mrb[0].mxu0
        %1097 = vmatprep.mubr.bf16.mxu0 0
        %1098 = vmatmul.mubr.bf16.gmra.mrb[0].mxu0 %v1052
        %v1099 = vpop.f32.mrb[0].mxu0
        %v1100 = vadd.f32 0.0, %v1099
        %v1101 = vpop.f32.mrb[0].mxu0
        %v1102 = vpop.f32.mrb[0].mxu0
        %v1103 = vadd.f32 0.0, %v1102
        %v1104 = vpop.f32.mrb[0].mxu0
        %1105 = vmatprep.mubr.bf16.mxu0 0
        %1106 = vmatmul.mubr.bf16.gmra.mrb[0].mxu0 %v1055
        %v1107 = vpop.f32.mrb[0].mxu0
        %v1108 = vadd.f32 0.0, %v1107
        %v1109 = vpop.f32.mrb[0].mxu0
        %v1110 = vpop.f32.mrb[0].mxu0
        %v1111 = vadd.f32 0.0, %v1110
        %v1112 = vpop.f32.mrb[0].mxu0
        %1113 = vdwg.mxu0
        %v1115 = vsel %vm595, %v893, 0
        %v1118 = vsel %vm595, %v894, 0
        %v1121 = vsel %vm595, %v895, 0
        %1123 = vmatprep.subr.bf16.mxu0 0
        %1124 = vmatpush1.bf16.msra.mxu0 %v911
        %1125 = vmatprep.subr.bf16.mxu0 0
        %1126 = vmatpush1.bf16.msra.mxu0 0
        %1127 = vmatprep.subr.bf16.mxu0 0
        %1128 = vmatpush1.bf16.msra.mxu0 0
        %1129 = vmatprep.subr.bf16.mxu0 0
        %1130 = vmatpush1.bf16.msra.mxu0 0
        %1131 = vmatprep.subr.bf16.mxu0 0
        %1132 = vmatpush1.bf16.msra.mxu0 0
        %1133 = vmatprep.subr.bf16.mxu0 0
        %1134 = vmatpush1.bf16.msra.mxu0 0
        %1135 = vmatprep.subr.bf16.mxu0 0
        %1136 = vmatpush1.bf16.msra.mxu0 0
        %1137 = vmatprep.subr.bf16.mxu0 0
        %1138 = vmatpush1.bf16.msra.mxu0 0
        %1139 = vmatprep.subr.bf16.mxu0 0
        %1140 = vmatpush1.bf16.msra.mxu0 0
        %1141 = vmatprep.subr.bf16.mxu0 0
        %1142 = vmatpush1.bf16.msra.mxu0 0
        %1143 = vmatprep.subr.bf16.mxu0 0
        %1144 = vmatpush1.bf16.msra.mxu0 0
        %1145 = vmatprep.subr.bf16.mxu0 0
        %1146 = vmatpush1.bf16.msra.mxu0 0
        %1147 = vmatprep.subr.bf16.mxu0 0
        %1148 = vmatpush1.bf16.msra.mxu0 0
        %1149 = vmatprep.subr.bf16.mxu0 0
        %1150 = vmatpush1.bf16.msra.mxu0 0
        %1151 = vmatprep.subr.bf16.mxu0 0
        %1152 = vmatpush1.bf16.msra.mxu0 0
        %1153 = vmatprep.subr.bf16.mxu0 0
        %1154 = vmatpush1.bf16.msra.mxu0 0
        %1155 = vmatprep.mubr.bf16.mxu0 0
        %1156 = vmatmul.mubr.bf16.gmra.mrb[0].mxu0 %v1115
        %v1157 = vpop.f32.mrb[0].mxu0
        %v1158 = vadd.f32 0.0, %v1157
        %v1159 = vpop.f32.mrb[0].mxu0
        %v1160 = vpop.f32.mrb[0].mxu0
        %v1161 = vadd.f32 0.0, %v1160
        %v1162 = vpop.f32.mrb[0].mxu0
        %1163 = vmatprep.mubr.bf16.mxu0 0
        %1164 = vmatmul.mubr.bf16.gmra.mrb[0].mxu0 %v1118
        %v1165 = vpop.f32.mrb[0].mxu0
        %v1166 = vadd.f32 0.0, %v1165
        %v1167 = vpop.f32.mrb[0].mxu0
        %v1168 = vpop.f32.mrb[0].mxu0
        %v1169 = vadd.f32 0.0, %v1168
        %v1170 = vpop.f32.mrb[0].mxu0
        %1171 = vmatprep.mubr.bf16.mxu0 0
        %1172 = vmatmul.mubr.bf16.gmra.mrb[0].mxu0 %v1121
        %v1173 = vpop.f32.mrb[0].mxu0
        %v1174 = vadd.f32 0.0, %v1173
        %v1175 = vpop.f32.mrb[0].mxu0
        %v1176 = vpop.f32.mrb[0].mxu0
        %v1177 = vadd.f32 0.0, %v1176
        %v1178 = vpop.f32.mrb[0].mxu0
        %1179 = vdwg.mxu0
        %v1181 = vsel %vm595, %v896, 0
        %v1184 = vsel %vm595, %v897, 0
        %v1187 = vsel %vm595, %v898, 0
        %1189 = vmatprep.subr.bf16.mxu0 0
        %1190 = vmatpush1.bf16.msra.mxu0 %v912
        %1191 = vmatprep.subr.bf16.mxu0 0
        %1192 = vmatpush1.bf16.msra.mxu0 0
        %1193 = vmatprep.subr.bf16.mxu0 0
        %1194 = vmatpush1.bf16.msra.mxu0 0
        %1195 = vmatprep.subr.bf16.mxu0 0
        %1196 = vmatpush1.bf16.msra.mxu0 0
        %1197 = vmatprep.subr.bf16.mxu0 0
        %1198 = vmatpush1.bf16.msra.mxu0 0
        %1199 = vmatprep.subr.bf16.mxu0 0
        %1200 = vmatpush1.bf16.msra.mxu0 0
        %1201 = vmatprep.subr.bf16.mxu0 0
        %1202 = vmatpush1.bf16.msra.mxu0 0
        %1203 = vmatprep.subr.bf16.mxu0 0
        %1204 = vmatpush1.bf16.msra.mxu0 0
        %1205 = vmatprep.subr.bf16.mxu0 0
        %1206 = vmatpush1.bf16.msra.mxu0 0
        %1207 = vmatprep.subr.bf16.mxu0 0
        %1208 = vmatpush1.bf16.msra.mxu0 0
        %1209 = vmatprep.subr.bf16.mxu0 0
        %1210 = vmatpush1.bf16.msra.mxu0 0
        %1211 = vmatprep.subr.bf16.mxu0 0
        %1212 = vmatpush1.bf16.msra.mxu0 0
        %1213 = vmatprep.subr.bf16.mxu0 0
        %1214 = vmatpush1.bf16.msra.mxu0 0
        %1215 = vmatprep.subr.bf16.mxu0 0
        %1216 = vmatpush1.bf16.msra.mxu0 0
        %1217 = vmatprep.subr.bf16.mxu0 0
        %1218 = vmatpush1.bf16.msra.mxu0 0
        %1219 = vmatprep.subr.bf16.mxu0 0
        %1220 = vmatpush1.bf16.msra.mxu0 0
        %1221 = vmatprep.mubr.bf16.mxu0 0
        %1222 = vmatmul.mubr.bf16.gmra.mrb[0].mxu0 %v1181
        %v1223 = vpop.f32.mrb[0].mxu0
        %v1224 = vadd.f32 0.0, %v1223
        %v1225 = vpop.f32.mrb[0].mxu0
        %v1226 = vpop.f32.mrb[0].mxu0
        %v1227 = vadd.f32 0.0, %v1226
        %v1228 = vpop.f32.mrb[0].mxu0
        %1229 = vmatprep.mubr.bf16.mxu0 0
        %1230 = vmatmul.mubr.bf16.gmra.mrb[0].mxu0 %v1184
        %v1231 = vpop.f32.mrb[0].mxu0
        %v1232 = vadd.f32 0.0, %v1231
        %v1233 = vpop.f32.mrb[0].mxu0
        %v1234 = vpop.f32.mrb[0].mxu0
        %v1235 = vadd.f32 0.0, %v1234
        %v1236 = vpop.f32.mrb[0].mxu0
        %1237 = vmatprep.mubr.bf16.mxu0 0
        %1238 = vmatmul.mubr.bf16.gmra.mrb[0].mxu0 %v1187
        %v1239 = vpop.f32.mrb[0].mxu0
        %v1240 = vadd.f32 0.0, %v1239
        %v1241 = vpop.f32.mrb[0].mxu0
        %v1242 = vpop.f32.mrb[0].mxu0
        %v1243 = vadd.f32 0.0, %v1242
        %v1244 = vpop.f32.mrb[0].mxu0
        %1245 = vdwg.mxu0
        %v1247 = vsel %vm595, %v899, 0
        %v1250 = vsel %vm595, %v900, 0
        %v1253 = vsel %vm595, %v901, 0
        %1255 = vmatprep.subr.bf16.mxu0 0
        %1256 = vmatpush1.bf16.msra.mxu0 %v913
        %1257 = vmatprep.subr.bf16.mxu0 0
        %1258 = vmatpush1.bf16.msra.mxu0 0
        %1259 = vmatprep.subr.bf16.mxu0 0
        %1260 = vmatpush1.bf16.msra.mxu0 0
        %1261 = vmatprep.subr.bf16.mxu0 0
        %1262 = vmatpush1.bf16.msra.mxu0 0
        %1263 = vmatprep.subr.bf16.mxu0 0
        %1264 = vmatpush1.bf16.msra.mxu0 0
        %1265 = vmatprep.subr.bf16.mxu0 0
        %1266 = vmatpush1.bf16.msra.mxu0 0
        %1267 = vmatprep.subr.bf16.mxu0 0
        %1268 = vmatpush1.bf16.msra.mxu0 0
        %1269 = vmatprep.subr.bf16.mxu0 0
        %1270 = vmatpush1.bf16.msra.mxu0 0
        %1271 = vmatprep.subr.bf16.mxu0 0
        %1272 = vmatpush1.bf16.msra.mxu0 0
        %1273 = vmatprep.subr.bf16.mxu0 0
        %1274 = vmatpush1.bf16.msra.mxu0 0
        %1275 = vmatprep.subr.bf16.mxu0 0
        %1276 = vmatpush1.bf16.msra.mxu0 0
        %1277 = vmatprep.subr.bf16.mxu0 0
        %1278 = vmatpush1.bf16.msra.mxu0 0
        %1279 = vmatprep.subr.bf16.mxu0 0
        %1280 = vmatpush1.bf16.msra.mxu0 0
        %1281 = vmatprep.subr.bf16.mxu0 0
        %1282 = vmatpush1.bf16.msra.mxu0 0
        %1283 = vmatprep.subr.bf16.mxu0 0
        %1284 = vmatpush1.bf16.msra.mxu0 0
        %1285 = vmatprep.subr.bf16.mxu0 0
        %1286 = vmatpush1.bf16.msra.mxu0 0
        %1287 = vmatprep.mubr.bf16.mxu0 0
        %1288 = vmatmul.mubr.bf16.gmra.mrb[0].mxu0 %v1247
        %v1289 = vpop.f32.mrb[0].mxu0
        %v1290 = vadd.f32 0.0, %v1289
        %v1291 = vpop.f32.mrb[0].mxu0
        %v1292 = vpop.f32.mrb[0].mxu0
        %v1293 = vadd.f32 0.0, %v1292
        %v1294 = vpop.f32.mrb[0].mxu0
        %1295 = vmatprep.mubr.bf16.mxu0 0
        %1296 = vmatmul.mubr.bf16.gmra.mrb[0].mxu0 %v1250
        %v1297 = vpop.f32.mrb[0].mxu0
        %v1298 = vadd.f32 0.0, %v1297
        %v1299 = vpop.f32.mrb[0].mxu0
        %v1300 = vpop.f32.mrb[0].mxu0
        %v1301 = vadd.f32 0.0, %v1300
        %v1302 = vpop.f32.mrb[0].mxu0
        %1303 = vmatprep.mubr.bf16.mxu0 0
        %1304 = vmatmul.mubr.bf16.gmra.mrb[0].mxu0 %v1253
        %v1305 = vpop.f32.mrb[0].mxu0
        %v1306 = vadd.f32 0.0, %v1305
        %v1307 = vpop.f32.mrb[0].mxu0
        %v1308 = vpop.f32.mrb[0].mxu0
        %v1309 = vadd.f32 0.0, %v1308
        %v1310 = vpop.f32.mrb[0].mxu0
        %1311 = vdwg.mxu0
        %v1313 = vsel %vm595, %v902, 0
        %v1316 = vsel %vm595, %v903, 0
        %v1319 = vsel %vm595, %v904, 0
        %1321 = vmatprep.subr.bf16.mxu0 0
        %1322 = vmatpush1.bf16.msra.mxu0 %v914
        %1323 = vmatprep.subr.bf16.mxu0 0
        %1324 = vmatpush1.bf16.msra.mxu0 0
        %1325 = vmatprep.subr.bf16.mxu0 0
        %1326 = vmatpush1.bf16.msra.mxu0 0
        %1327 = vmatprep.subr.bf16.mxu0 0
        %1328 = vmatpush1.bf16.msra.mxu0 0
        %1329 = vmatprep.subr.bf16.mxu0 0
        %1330 = vmatpush1.bf16.msra.mxu0 0
        %1331 = vmatprep.subr.bf16.mxu0 0
        %1332 = vmatpush1.bf16.msra.mxu0 0
        %1333 = vmatprep.subr.bf16.mxu0 0
        %1334 = vmatpush1.bf16.msra.mxu0 0
        %1335 = vmatprep.subr.bf16.mxu0 0
        %1336 = vmatpush1.bf16.msra.mxu0 0
        %1337 = vmatprep.subr.bf16.mxu0 0
        %1338 = vmatpush1.bf16.msra.mxu0 0
        %1339 = vmatprep.subr.bf16.mxu0 0
        %1340 = vmatpush1.bf16.msra.mxu0 0
        %1341 = vmatprep.subr.bf16.mxu0 0
        %1342 = vmatpush1.bf16.msra.mxu0 0
        %1343 = vmatprep.subr.bf16.mxu0 0
        %1344 = vmatpush1.bf16.msra.mxu0 0
        %1345 = vmatprep.subr.bf16.mxu0 0
        %1346 = vmatpush1.bf16.msra.mxu0 0
        %1347 = vmatprep.subr.bf16.mxu0 0
        %1348 = vmatpush1.bf16.msra.mxu0 0
        %1349 = vmatprep.subr.bf16.mxu0 0
        %1350 = vmatpush1.bf16.msra.mxu0 0
        %1351 = vmatprep.subr.bf16.mxu0 0
        %1352 = vmatpush1.bf16.msra.mxu0 0
        %1353 = vmatprep.mubr.bf16.mxu0 0
        %1354 = vmatmul.mubr.bf16.gmra.mrb[0].mxu0 %v1313
        %v1355 = vpop.f32.mrb[0].mxu0
        %v1356 = vadd.f32 0.0, %v1355
        %v1357 = vpop.f32.mrb[0].mxu0
        %v1358 = vpop.f32.mrb[0].mxu0
        %v1359 = vadd.f32 0.0, %v1358
        %v1360 = vpop.f32.mrb[0].mxu0
        %1361 = vmatprep.mubr.bf16.mxu0 0
        %1362 = vmatmul.mubr.bf16.gmra.mrb[0].mxu0 %v1316
        %v1363 = vpop.f32.mrb[0].mxu0
        %v1364 = vadd.f32 0.0, %v1363
        %v1365 = vpop.f32.mrb[0].mxu0
        %v1366 = vpop.f32.mrb[0].mxu0
        %v1367 = vadd.f32 0.0, %v1366
        %v1368 = vpop.f32.mrb[0].mxu0
        %1369 = vmatprep.mubr.bf16.mxu0 0
        %1370 = vmatmul.mubr.bf16.gmra.mrb[0].mxu0 %v1319
        %v1371 = vpop.f32.mrb[0].mxu0
        %v1372 = vadd.f32 0.0, %v1371
        %v1373 = vpop.f32.mrb[0].mxu0
        %v1374 = vpop.f32.mrb[0].mxu0
        %v1375 = vadd.f32 0.0, %v1374
        %v1376 = vpop.f32.mrb[0].mxu0
        %1377 = vdwg.mxu0
        %v1379 = vsel %vm595, %v905, 0
        %v1382 = vsel %vm595, %v906, 0
        %v1385 = vsel %vm595, %v907, 0
        %1387 = vmatprep.subr.bf16.mxu0 0
        %1388 = vmatpush1.bf16.msra.mxu0 %v915
        %1389 = vmatprep.subr.bf16.mxu0 0
        %1390 = vmatpush1.bf16.msra.mxu0 0
        %1391 = vmatprep.subr.bf16.mxu0 0
        %1392 = vmatpush1.bf16.msra.mxu0 0
        %1393 = vmatprep.subr.bf16.mxu0 0
        %1394 = vmatpush1.bf16.msra.mxu0 0
        %1395 = vmatprep.subr.bf16.mxu0 0
        %1396 = vmatpush1.bf16.msra.mxu0 0
        %1397 = vmatprep.subr.bf16.mxu0 0
        %1398 = vmatpush1.bf16.msra.mxu0 0
        %1399 = vmatprep.subr.bf16.mxu0 0
        %1400 = vmatpush1.bf16.msra.mxu0 0
        %1401 = vmatprep.subr.bf16.mxu0 0
        %1402 = vmatpush1.bf16.msra.mxu0 0
        %1403 = vmatprep.subr.bf16.mxu0 0
        %1404 = vmatpush1.bf16.msra.mxu0 0
        %1405 = vmatprep.subr.bf16.mxu0 0
        %1406 = vmatpush1.bf16.msra.mxu0 0
        %1407 = vmatprep.subr.bf16.mxu0 0
        %1408 = vmatpush1.bf16.msra.mxu0 0
        %1409 = vmatprep.subr.bf16.mxu0 0
        %1410 = vmatpush1.bf16.msra.mxu0 0
        %1411 = vmatprep.subr.bf16.mxu0 0
        %1412 = vmatpush1.bf16.msra.mxu0 0
        %1413 = vmatprep.subr.bf16.mxu0 0
        %1414 = vmatpush1.bf16.msra.mxu0 0
        %1415 = vmatprep.subr.bf16.mxu0 0
        %1416 = vmatpush1.bf16.msra.mxu0 0
        %1417 = vmatprep.subr.bf16.mxu0 0
        %1418 = vmatpush1.bf16.msra.mxu0 0
        %1419 = vmatprep.mubr.bf16.mxu0 0
        %1420 = vmatmul.mubr.bf16.gmra.mrb[0].mxu0 %v1379
        %v1421 = vpop.f32.mrb[0].mxu0
        %v1422 = vadd.f32 0.0, %v1421
        %v1423 = vpop.f32.mrb[0].mxu0
        %v1424 = vpop.f32.mrb[0].mxu0
        %v1425 = vadd.f32 0.0, %v1424
        %v1426 = vpop.f32.mrb[0].mxu0
        %1427 = vmatprep.mubr.bf16.mxu0 0
        %1428 = vmatmul.mubr.bf16.gmra.mrb[0].mxu0 %v1382
        %v1429 = vpop.f32.mrb[0].mxu0
        %v1430 = vadd.f32 0.0, %v1429
        %v1431 = vpop.f32.mrb[0].mxu0
        %v1432 = vpop.f32.mrb[0].mxu0
        %v1433 = vadd.f32 0.0, %v1432
        %v1434 = vpop.f32.mrb[0].mxu0
        %1435 = vmatprep.mubr.bf16.mxu0 0
        %1436 = vmatmul.mubr.bf16.gmra.mrb[0].mxu0 %v1385
        %v1437 = vpop.f32.mrb[0].mxu0
        %v1438 = vadd.f32 0.0, %v1437
        %v1439 = vpop.f32.mrb[0].mxu0
        %v1440 = vpop.f32.mrb[0].mxu0
        %v1441 = vadd.f32 0.0, %v1440
        %v1442 = vpop.f32.mrb[0].mxu0
        %1443 = vdwg.mxu0
        %v1444 = vld [vmem:[%s475] sm:$0xff]
        %v1445 = vld [vmem:[%s475 + $0x8] sm:$0xff]
        %v1446 = vld [vmem:[%s475 + $0x10] sm:$0xff]
        %v1447 = vld [vmem:[%s475 + $0x18] sm:$0xff]
        %v1448 = vld [vmem:[%s475 + $0x20] sm:$0xff]
        %v1449 = vld [vmem:[%s475 + $0x28] sm:$0xff]
        %v1450 = vld [vmem:[%s475 + $0x30] sm:$0xff]
        %v1451 = vld [vmem:[%s475 + $0x38] sm:$0xff]
        %v1452 = vld [vmem:[%s475 + $0x40] sm:$0xff]
        %v1453 = vld [vmem:[%s475 + $0x48] sm:$0xff]
        %v1454 = vld [vmem:[%s475 + $0x50] sm:$0xff]
        %v1455 = vld [vmem:[%s475 + $0x58] sm:$0xff]
        %v1456 = vld [vmem:[%s475 + $0x60] sm:$0xff]
        %v1457 = vld [vmem:[%s475 + $0x68] sm:$0xff]
        %v1458 = vld [vmem:[%s475 + $0x70] sm:$0xff]
        %v1459 = vld [vmem:[%s475 + $0x78] sm:$0xff]
        %v1460 = vld [vmem:[%s400] sm:$0xff]
        %v1461 = vld [vmem:[%s400 + $0x8] sm:$0xff]
        %v1462 = vld [vmem:[%s400 + $0x10] sm:$0xff]
        %v1463 = vld [vmem:[%s400 + $0x18] sm:$0xff]
        %v1464 = vld [vmem:[%s400 + $0x20] sm:$0xff]
        %v1465 = vld [vmem:[%s400 + $0x28] sm:$0xff]
        %v1466 = vld [vmem:[%s400 + $0x30] sm:$0xff]
        %v1467 = vld [vmem:[%s400 + $0x38] sm:$0xff]
        %v1468 = vld [vmem:[%s400 + $0x40] sm:$0xff]
        %v1469 = vld [vmem:[%s400 + $0x48] sm:$0xff]
        %v1470 = vld [vmem:[%s400 + $0x50] sm:$0xff]
        %v1471 = vld [vmem:[%s400 + $0x58] sm:$0xff]
        %v1472 = vld [vmem:[%s400 + $0x60] sm:$0xff]
        %v1473 = vld [vmem:[%s400 + $0x68] sm:$0xff]
        %v1474 = vld [vmem:[%s400 + $0x70] sm:$0xff]
        %v1475 = vld [vmem:[%s400 + $0x78] sm:$0xff]
        %v1476 = vld [vmem:[%s400 + $0x80] sm:$0xff]
        %v1477 = vld [vmem:[%s400 + $0x88] sm:$0xff]
        %v1478 = vld [vmem:[%s400 + $0x90] sm:$0xff]
        %v1479 = vld [vmem:[%s400 + $0x98] sm:$0xff]
        %v1480 = vld [vmem:[%s400 + $0xa0] sm:$0xff]
        %v1481 = vld [vmem:[%s400 + $0xa8] sm:$0xff]
        %v1482 = vld [vmem:[%s400 + $0xb0] sm:$0xff]
        %v1483 = vld [vmem:[%s400 + $0xb8] sm:$0xff]
        %v1484 = vld [vmem:[%s400 + $0xc0] sm:$0xff]
        %v1485 = vld [vmem:[%s400 + $0xc8] sm:$0xff]
        %v1486 = vld [vmem:[%s400 + $0xd0] sm:$0xff]
        %v1487 = vld [vmem:[%s400 + $0xd8] sm:$0xff]
        %v1488 = vld [vmem:[%s400 + $0xe0] sm:$0xff]
        %v1489 = vld [vmem:[%s400 + $0xe8] sm:$0xff]
        %v1490 = vld [vmem:[%s400 + $0xf0] sm:$0xff]
        %v1491 = vld [vmem:[%s400 + $0xf8] sm:$0xff]
        %v1492 = vld [vmem:[%s400 + $0x100] sm:$0xff]
        %v1493 = vld [vmem:[%s400 + $0x108] sm:$0xff]
        %v1494 = vld [vmem:[%s400 + $0x110] sm:$0xff]
        %v1495 = vld [vmem:[%s400 + $0x118] sm:$0xff]
        %v1496 = vld [vmem:[%s400 + $0x120] sm:$0xff]
        %v1497 = vld [vmem:[%s400 + $0x128] sm:$0xff]
        %v1498 = vld [vmem:[%s400 + $0x130] sm:$0xff]
        %v1499 = vld [vmem:[%s400 + $0x138] sm:$0xff]
        %v1500 = vld [vmem:[%s400 + $0x140] sm:$0xff]
        %v1501 = vld [vmem:[%s400 + $0x148] sm:$0xff]
        %v1502 = vld [vmem:[%s400 + $0x150] sm:$0xff]
        %v1503 = vld [vmem:[%s400 + $0x158] sm:$0xff]
        %v1504 = vld [vmem:[%s400 + $0x160] sm:$0xff]
        %v1505 = vld [vmem:[%s400 + $0x168] sm:$0xff]
        %v1506 = vld [vmem:[%s400 + $0x170] sm:$0xff]
        %v1507 = vld [vmem:[%s400 + $0x178] sm:$0xff]
        %v1508 = vand.u32 2147483647, %v1460
        %v1509 = vand.u32 2147483647, %v1461
        %v1510 = vand.u32 2147483647, %v1462
        %v1511 = vand.u32 2147483647, %v1463
        %v1512 = vand.u32 2147483647, %v1464
        %v1513 = vand.u32 2147483647, %v1465
        %v1514 = vand.u32 2147483647, %v1466
        %v1515 = vand.u32 2147483647, %v1467
        %v1516 = vand.u32 2147483647, %v1468
        %v1517 = vand.u32 2147483647, %v1469
        %v1518 = vand.u32 2147483647, %v1470
        %v1519 = vand.u32 2147483647, %v1471
        %v1520 = vand.u32 2147483647, %v1472
        %v1521 = vand.u32 2147483647, %v1473
        %v1522 = vand.u32 2147483647, %v1474
        %v1523 = vand.u32 2147483647, %v1475
        %v1524 = vand.u32 2147483647, %v1476
        %v1525 = vand.u32 2147483647, %v1477
        %v1526 = vand.u32 2147483647, %v1478
        %v1527 = vand.u32 2147483647, %v1479
        %v1528 = vand.u32 2147483647, %v1480
        %v1529 = vand.u32 2147483647, %v1481
        %v1530 = vand.u32 2147483647, %v1482
        %v1531 = vand.u32 2147483647, %v1483
        %v1532 = vand.u32 2147483647, %v1484
        %v1533 = vand.u32 2147483647, %v1485
        %v1534 = vand.u32 2147483647, %v1486
        %v1535 = vand.u32 2147483647, %v1487
        %v1536 = vand.u32 2147483647, %v1488
        %v1537 = vand.u32 2147483647, %v1489
        %v1538 = vand.u32 2147483647, %v1490
        %v1539 = vand.u32 2147483647, %v1491
        %v1540 = vand.u32 2147483647, %v1492
        %v1541 = vand.u32 2147483647, %v1493
        %v1542 = vand.u32 2147483647, %v1494
        %v1543 = vand.u32 2147483647, %v1495
        %v1544 = vand.u32 2147483647, %v1496
        %v1545 = vand.u32 2147483647, %v1497
        %v1546 = vand.u32 2147483647, %v1498
        %v1547 = vand.u32 2147483647, %v1499
        %v1548 = vand.u32 2147483647, %v1500
        %v1549 = vand.u32 2147483647, %v1501
        %v1550 = vand.u32 2147483647, %v1502
        %v1551 = vand.u32 2147483647, %v1503
        %v1552 = vand.u32 2147483647, %v1504
        %v1553 = vand.u32 2147483647, %v1505
        %v1554 = vand.u32 2147483647, %v1506
        %v1555 = vand.u32 2147483647, %v1507
        %v1556 = vsel %vm595, %v1508, 0.0
        %1557 = vadd.xlane.f32.xlu0 %v1556
        %v1558 = vpop.xlane.xlu0 %1557
        %v1559 = vsel %vm595, %v1509, 0.0
        %1560 = vadd.xlane.f32.xlu0 %v1559
        %v1561 = vpop.xlane.xlu0 %1560
        %v1562 = vsel %vm595, %v1510, 0.0
        %1563 = vadd.xlane.f32.xlu0 %v1562
        %v1564 = vpop.xlane.xlu0 %1563
        %v1565 = vsel %vm595, %v1511, 0.0
        %1566 = vadd.xlane.f32.xlu0 %v1565
        %v1567 = vpop.xlane.xlu0 %1566
        %v1568 = vsel %vm595, %v1512, 0.0
        %1569 = vadd.xlane.f32.xlu0 %v1568
        %v1570 = vpop.xlane.xlu0 %1569
        %v1571 = vsel %vm595, %v1513, 0.0
        %1572 = vadd.xlane.f32.xlu0 %v1571
        %v1573 = vpop.xlane.xlu0 %1572
        %v1574 = vsel %vm595, %v1514, 0.0
        %1575 = vadd.xlane.f32.xlu0 %v1574
        %v1576 = vpop.xlane.xlu0 %1575
        %v1577 = vsel %vm595, %v1515, 0.0
        %1578 = vadd.xlane.f32.xlu0 %v1577
        %v1579 = vpop.xlane.xlu0 %1578
        %v1580 = vsel %vm595, %v1516, 0.0
        %1581 = vadd.xlane.f32.xlu0 %v1580
        %v1582 = vpop.xlane.xlu0 %1581
        %v1583 = vsel %vm595, %v1517, 0.0
        %1584 = vadd.xlane.f32.xlu0 %v1583
        %v1585 = vpop.xlane.xlu0 %1584
        %v1586 = vsel %vm595, %v1518, 0.0
        %1587 = vadd.xlane.f32.xlu0 %v1586
        %v1588 = vpop.xlane.xlu0 %1587
        %v1589 = vsel %vm595, %v1519, 0.0
        %1590 = vadd.xlane.f32.xlu0 %v1589
        %v1591 = vpop.xlane.xlu0 %1590
        %v1592 = vsel %vm595, %v1520, 0.0
        %1593 = vadd.xlane.f32.xlu0 %v1592
        %v1594 = vpop.xlane.xlu0 %1593
        %v1595 = vsel %vm595, %v1521, 0.0
        %1596 = vadd.xlane.f32.xlu0 %v1595
        %v1597 = vpop.xlane.xlu0 %1596
        %v1598 = vsel %vm595, %v1522, 0.0
        %1599 = vadd.xlane.f32.xlu0 %v1598
        %v1600 = vpop.xlane.xlu0 %1599
        %v1601 = vsel %vm595, %v1523, 0.0
        %1602 = vadd.xlane.f32.xlu0 %v1601
        %v1603 = vpop.xlane.xlu0 %1602
        %v1604 = vsel %vm595, %v1524, 0.0
        %1605 = vadd.xlane.f32.xlu0 %v1604
        %v1606 = vpop.xlane.xlu0 %1605
        %v1607 = vsel %vm595, %v1525, 0.0
        %1608 = vadd.xlane.f32.xlu0 %v1607
        %v1609 = vpop.xlane.xlu0 %1608
        %v1610 = vsel %vm595, %v1526, 0.0
        %1611 = vadd.xlane.f32.xlu0 %v1610
        %v1612 = vpop.xlane.xlu0 %1611
        %v1613 = vsel %vm595, %v1527, 0.0
        %1614 = vadd.xlane.f32.xlu0 %v1613
        %v1615 = vpop.xlane.xlu0 %1614
        %v1616 = vsel %vm595, %v1528, 0.0
        %1617 = vadd.xlane.f32.xlu0 %v1616
        %v1618 = vpop.xlane.xlu0 %1617
        %v1619 = vsel %vm595, %v1529, 0.0
        %1620 = vadd.xlane.f32.xlu0 %v1619
        %v1621 = vpop.xlane.xlu0 %1620
        %v1622 = vsel %vm595, %v1530, 0.0
        %1623 = vadd.xlane.f32.xlu0 %v1622
        %v1624 = vpop.xlane.xlu0 %1623
        %v1625 = vsel %vm595, %v1531, 0.0
        %1626 = vadd.xlane.f32.xlu0 %v1625
        %v1627 = vpop.xlane.xlu0 %1626
        %v1628 = vsel %vm595, %v1532, 0.0
        %1629 = vadd.xlane.f32.xlu0 %v1628
        %v1630 = vpop.xlane.xlu0 %1629
        %v1631 = vsel %vm595, %v1533, 0.0
        %1632 = vadd.xlane.f32.xlu0 %v1631
        %v1633 = vpop.xlane.xlu0 %1632
        %v1634 = vsel %vm595, %v1534, 0.0
        %1635 = vadd.xlane.f32.xlu0 %v1634
        %v1636 = vpop.xlane.xlu0 %1635
        %v1637 = vsel %vm595, %v1535, 0.0
        %1638 = vadd.xlane.f32.xlu0 %v1637
        %v1639 = vpop.xlane.xlu0 %1638
        %v1640 = vsel %vm595, %v1536, 0.0
        %1641 = vadd.xlane.f32.xlu0 %v1640
        %v1642 = vpop.xlane.xlu0 %1641
        %v1643 = vsel %vm595, %v1537, 0.0
        %1644 = vadd.xlane.f32.xlu0 %v1643
        %v1645 = vpop.xlane.xlu0 %1644
        %v1646 = vsel %vm595, %v1538, 0.0
        %1647 = vadd.xlane.f32.xlu0 %v1646
        %v1648 = vpop.xlane.xlu0 %1647
        %v1649 = vsel %vm595, %v1539, 0.0
        %1650 = vadd.xlane.f32.xlu0 %v1649
        %v1651 = vpop.xlane.xlu0 %1650
        %v1652 = vsel %vm595, %v1540, 0.0
        %1653 = vadd.xlane.f32.xlu0 %v1652
        %v1654 = vpop.xlane.xlu0 %1653
        %v1655 = vsel %vm595, %v1541, 0.0
        %1656 = vadd.xlane.f32.xlu0 %v1655
        %v1657 = vpop.xlane.xlu0 %1656
        %v1658 = vsel %vm595, %v1542, 0.0
        %1659 = vadd.xlane.f32.xlu0 %v1658
        %v1660 = vpop.xlane.xlu0 %1659
        %v1661 = vsel %vm595, %v1543, 0.0
        %1662 = vadd.xlane.f32.xlu0 %v1661
        %v1663 = vpop.xlane.xlu0 %1662
        %v1664 = vsel %vm595, %v1544, 0.0
        %1665 = vadd.xlane.f32.xlu0 %v1664
        %v1666 = vpop.xlane.xlu0 %1665
        %v1667 = vsel %vm595, %v1545, 0.0
        %1668 = vadd.xlane.f32.xlu0 %v1667
        %v1669 = vpop.xlane.xlu0 %1668
        %v1670 = vsel %vm595, %v1546, 0.0
        %1671 = vadd.xlane.f32.xlu0 %v1670
        %v1672 = vpop.xlane.xlu0 %1671
        %v1673 = vsel %vm595, %v1547, 0.0
        %1674 = vadd.xlane.f32.xlu0 %v1673
        %v1675 = vpop.xlane.xlu0 %1674
        %v1676 = vsel %vm595, %v1548, 0.0
        %1677 = vadd.xlane.f32.xlu0 %v1676
        %v1678 = vpop.xlane.xlu0 %1677
        %v1679 = vsel %vm595, %v1549, 0.0
        %1680 = vadd.xlane.f32.xlu0 %v1679
        %v1681 = vpop.xlane.xlu0 %1680
        %v1682 = vsel %vm595, %v1550, 0.0
        %1683 = vadd.xlane.f32.xlu0 %v1682
        %v1684 = vpop.xlane.xlu0 %1683
        %v1685 = vsel %vm595, %v1551, 0.0
        %1686 = vadd.xlane.f32.xlu0 %v1685
        %v1687 = vpop.xlane.xlu0 %1686
        %v1688 = vsel %vm595, %v1552, 0.0
        %1689 = vadd.xlane.f32.xlu0 %v1688
        %v1690 = vpop.xlane.xlu0 %1689
        %v1691 = vsel %vm595, %v1553, 0.0
        %1692 = vadd.xlane.f32.xlu0 %v1691
        %v1693 = vpop.xlane.xlu0 %1692
        %v1694 = vsel %vm595, %v1554, 0.0
        %1695 = vadd.xlane.f32.xlu0 %v1694
        %v1696 = vpop.xlane.xlu0 %1695
        %v1697 = vsel %vm595, %v1555, 0.0
        %1698 = vadd.xlane.f32.xlu0 %v1697
        %v1699 = vpop.xlane.xlu0 %1698
        %v1700 = vmax.f32 %v1558, 1e-12
        %v1701 = vmax.f32 %v1561, 1e-12
        %v1702 = vmax.f32 %v1564, 1e-12
        %v1703 = vmax.f32 %v1567, 1e-12
        %v1704 = vmax.f32 %v1570, 1e-12
        %v1705 = vmax.f32 %v1573, 1e-12
        %v1706 = vmax.f32 %v1576, 1e-12
        %v1707 = vmax.f32 %v1579, 1e-12
        %v1708 = vmax.f32 %v1582, 1e-12
        %v1709 = vmax.f32 %v1585, 1e-12
        %v1710 = vmax.f32 %v1588, 1e-12
        %v1711 = vmax.f32 %v1591, 1e-12
        %v1712 = vmax.f32 %v1594, 1e-12
        %v1713 = vmax.f32 %v1597, 1e-12
        %v1714 = vmax.f32 %v1600, 1e-12
        %v1715 = vmax.f32 %v1603, 1e-12
        %v1716 = vmax.f32 %v1606, 1e-12
        %v1717 = vmax.f32 %v1609, 1e-12
        %v1718 = vmax.f32 %v1612, 1e-12
        %v1719 = vmax.f32 %v1615, 1e-12
        %v1720 = vmax.f32 %v1618, 1e-12
        %v1721 = vmax.f32 %v1621, 1e-12
        %v1722 = vmax.f32 %v1624, 1e-12
        %v1723 = vmax.f32 %v1627, 1e-12
        %v1724 = vmax.f32 %v1630, 1e-12
        %v1725 = vmax.f32 %v1633, 1e-12
        %v1726 = vmax.f32 %v1636, 1e-12
        %v1727 = vmax.f32 %v1639, 1e-12
        %v1728 = vmax.f32 %v1642, 1e-12
        %v1729 = vmax.f32 %v1645, 1e-12
        %v1730 = vmax.f32 %v1648, 1e-12
        %v1731 = vmax.f32 %v1651, 1e-12
        %v1732 = vmax.f32 %v1654, 1e-12
        %v1733 = vmax.f32 %v1657, 1e-12
        %v1734 = vmax.f32 %v1660, 1e-12
        %v1735 = vmax.f32 %v1663, 1e-12
        %v1736 = vmax.f32 %v1666, 1e-12
        %v1737 = vmax.f32 %v1669, 1e-12
        %v1738 = vmax.f32 %v1672, 1e-12
        %v1739 = vmax.f32 %v1675, 1e-12
        %v1740 = vmax.f32 %v1678, 1e-12
        %v1741 = vmax.f32 %v1681, 1e-12
        %v1742 = vmax.f32 %v1684, 1e-12
        %v1743 = vmax.f32 %v1687, 1e-12
        %v1744 = vmax.f32 %v1690, 1e-12
        %v1745 = vmax.f32 %v1693, 1e-12
        %v1746 = vmax.f32 %v1696, 1e-12
        %v1747 = vmax.f32 %v1699, 1e-12
        %v1748 = vrcp.pop %v1700
        %v1749 = vrcp.pop %v1701
        %v1750 = vrcp.pop %v1702
        %v1751 = vrcp.pop %v1703
        %v1752 = vrcp.pop %v1704
        %v1753 = vrcp.pop %v1705
        %v1754 = vrcp.pop %v1706
        %v1755 = vrcp.pop %v1707
        %v1756 = vrcp.pop %v1708
        %v1757 = vrcp.pop %v1709
        %v1758 = vrcp.pop %v1710
        %v1759 = vrcp.pop %v1711
        %v1760 = vrcp.pop %v1712
        %v1761 = vrcp.pop %v1713
        %v1762 = vrcp.pop %v1714
        %v1763 = vrcp.pop %v1715
        %v1764 = vrcp.pop %v1716
        %v1765 = vrcp.pop %v1717
        %v1766 = vrcp.pop %v1718
        %v1767 = vrcp.pop %v1719
        %v1768 = vrcp.pop %v1720
        %v1769 = vrcp.pop %v1721
        %v1770 = vrcp.pop %v1722
        %v1771 = vrcp.pop %v1723
        %v1772 = vrcp.pop %v1724
        %v1773 = vrcp.pop %v1725
        %v1774 = vrcp.pop %v1726
        %v1775 = vrcp.pop %v1727
        %v1776 = vrcp.pop %v1728
        %v1777 = vrcp.pop %v1729
        %v1778 = vrcp.pop %v1730
        %v1779 = vrcp.pop %v1731
        %v1780 = vrcp.pop %v1732
        %v1781 = vrcp.pop %v1733
        %v1782 = vrcp.pop %v1734
        %v1783 = vrcp.pop %v1735
        %v1784 = vrcp.pop %v1736
        %v1785 = vrcp.pop %v1737
        %v1786 = vrcp.pop %v1738
        %v1787 = vrcp.pop %v1739
        %v1788 = vrcp.pop %v1740
        %v1789 = vrcp.pop %v1741
        %v1790 = vrcp.pop %v1742
        %v1791 = vrcp.pop %v1743
        %v1792 = vrcp.pop %v1744
        %v1793 = vrcp.pop %v1745
        %v1794 = vrcp.pop %v1746
        %v1795 = vrcp.pop %v1747
        %v1796 = vmul.f32 %v1460, %v1748
        %v1797 = vmul.f32 %v1461, %v1749
        %v1798 = vmul.f32 %v1462, %v1750
        %v1799 = vmul.f32 %v1463, %v1751
        %v1800 = vmul.f32 %v1464, %v1752
        %v1801 = vmul.f32 %v1465, %v1753
        %v1802 = vmul.f32 %v1466, %v1754
        %v1803 = vmul.f32 %v1467, %v1755
        %v1804 = vmul.f32 %v1468, %v1756
        %v1805 = vmul.f32 %v1469, %v1757
        %v1806 = vmul.f32 %v1470, %v1758
        %v1807 = vmul.f32 %v1471, %v1759
        %v1808 = vmul.f32 %v1472, %v1760
        %v1809 = vmul.f32 %v1473, %v1761
        %v1810 = vmul.f32 %v1474, %v1762
        %v1811 = vmul.f32 %v1475, %v1763
        %v1812 = vmul.f32 %v1476, %v1764
        %v1813 = vmul.f32 %v1477, %v1765
        %v1814 = vmul.f32 %v1478, %v1766
        %v1815 = vmul.f32 %v1479, %v1767
        %v1816 = vmul.f32 %v1480, %v1768
        %v1817 = vmul.f32 %v1481, %v1769
        %v1818 = vmul.f32 %v1482, %v1770
        %v1819 = vmul.f32 %v1483, %v1771
        %v1820 = vmul.f32 %v1484, %v1772
        %v1821 = vmul.f32 %v1485, %v1773
        %v1822 = vmul.f32 %v1486, %v1774
        %v1823 = vmul.f32 %v1487, %v1775
        %v1824 = vmul.f32 %v1488, %v1776
        %v1825 = vmul.f32 %v1489, %v1777
        %v1826 = vmul.f32 %v1490, %v1778
        %v1827 = vmul.f32 %v1491, %v1779
        %v1828 = vmul.f32 %v1492, %v1780
        %v1829 = vmul.f32 %v1493, %v1781
        %v1830 = vmul.f32 %v1494, %v1782
        %v1831 = vmul.f32 %v1495, %v1783
        %v1832 = vmul.f32 %v1496, %v1784
        %v1833 = vmul.f32 %v1497, %v1785
        %v1834 = vmul.f32 %v1498, %v1786
        %v1835 = vmul.f32 %v1499, %v1787
        %v1836 = vmul.f32 %v1500, %v1788
        %v1837 = vmul.f32 %v1501, %v1789
        %v1838 = vmul.f32 %v1502, %v1790
        %v1839 = vmul.f32 %v1503, %v1791
        %v1840 = vmul.f32 %v1504, %v1792
        %v1841 = vmul.f32 %v1505, %v1793
        %v1842 = vmul.f32 %v1506, %v1794
        %v1843 = vmul.f32 %v1507, %v1795
        %v1844 = vpack.c.bf16 %v1797, %v1796
        %v1845 = vpack.c.bf16 %v1799, %v1798
        %v1846 = vpack.c.bf16 %v1801, %v1800
        %v1847 = vpack.c.bf16 %v1803, %v1802
        %v1848 = vpack.c.bf16 %v1805, %v1804
        %v1849 = vpack.c.bf16 %v1807, %v1806
        %v1850 = vpack.c.bf16 %v1809, %v1808
        %v1851 = vpack.c.bf16 %v1811, %v1810
        %v1852 = vpack.c.bf16 %v1813, %v1812
        %v1853 = vpack.c.bf16 %v1815, %v1814
        %v1854 = vpack.c.bf16 %v1817, %v1816
        %v1855 = vpack.c.bf16 %v1819, %v1818
        %v1856 = vpack.c.bf16 %v1821, %v1820
        %v1857 = vpack.c.bf16 %v1823, %v1822
        %v1858 = vpack.c.bf16 %v1825, %v1824
        %v1859 = vpack.c.bf16 %v1827, %v1826
        %v1860 = vpack.c.bf16 %v1829, %v1828
        %v1861 = vpack.c.bf16 %v1831, %v1830
        %v1862 = vpack.c.bf16 %v1833, %v1832
        %v1863 = vpack.c.bf16 %v1835, %v1834
        %v1864 = vpack.c.bf16 %v1837, %v1836
        %v1865 = vpack.c.bf16 %v1839, %v1838
        %v1866 = vpack.c.bf16 %v1841, %v1840
        %v1867 = vpack.c.bf16 %v1843, %v1842
        %v1868 = vpack.c.bf16 %v1445, %v1444
        %v1869 = vpack.c.bf16 %v1447, %v1446
        %v1870 = vpack.c.bf16 %v1449, %v1448
        %v1871 = vpack.c.bf16 %v1451, %v1450
        %v1872 = vpack.c.bf16 %v1453, %v1452
        %v1873 = vpack.c.bf16 %v1455, %v1454
        %v1874 = vpack.c.bf16 %v1457, %v1456
        %v1875 = vpack.c.bf16 %v1459, %v1458
        %v1877 = vsel %vm595, %v1844, 0
        %v1880 = vsel %vm595, %v1845, 0
        %v1883 = vsel %vm595, %v1846, 0
        %1885 = vmatprep.subr.bf16.mxu0 0
        %1886 = vmatpush1.bf16.msra.mxu0 %v1868
        %1887 = vmatprep.subr.bf16.mxu0 0
        %1888 = vmatpush1.bf16.msra.mxu0 0
        %1889 = vmatprep.subr.bf16.mxu0 0
        %1890 = vmatpush1.bf16.msra.mxu0 0
        %1891 = vmatprep.subr.bf16.mxu0 0
        %1892 = vmatpush1.bf16.msra.mxu0 0
        %1893 = vmatprep.subr.bf16.mxu0 0
        %1894 = vmatpush1.bf16.msra.mxu0 0
        %1895 = vmatprep.subr.bf16.mxu0 0
        %1896 = vmatpush1.bf16.msra.mxu0 0
        %1897 = vmatprep.subr.bf16.mxu0 0
        %1898 = vmatpush1.bf16.msra.mxu0 0
        %1899 = vmatprep.subr.bf16.mxu0 0
        %1900 = vmatpush1.bf16.msra.mxu0 0
        %1901 = vmatprep.subr.bf16.mxu0 0
        %1902 = vmatpush1.bf16.msra.mxu0 0
        %1903 = vmatprep.subr.bf16.mxu0 0
        %1904 = vmatpush1.bf16.msra.mxu0 0
        %1905 = vmatprep.subr.bf16.mxu0 0
        %1906 = vmatpush1.bf16.msra.mxu0 0
        %1907 = vmatprep.subr.bf16.mxu0 0
        %1908 = vmatpush1.bf16.msra.mxu0 0
        %1909 = vmatprep.subr.bf16.mxu0 0
        %1910 = vmatpush1.bf16.msra.mxu0 0
        %1911 = vmatprep.subr.bf16.mxu0 0
        %1912 = vmatpush1.bf16.msra.mxu0 0
        %1913 = vmatprep.subr.bf16.mxu0 0
        %1914 = vmatpush1.bf16.msra.mxu0 0
        %1915 = vmatprep.subr.bf16.mxu0 0
        %1916 = vmatpush1.bf16.msra.mxu0 0
        %1917 = vmatprep.mubr.bf16.mxu0 0
        %1918 = vmatmul.mubr.bf16.gmra.mrb[0].mxu0 %v1877
        %v1919 = vpop.f32.mrb[0].mxu0
        %v1920 = vadd.f32 0.0, %v1919
        %v1921 = vpop.f32.mrb[0].mxu0
        %v1922 = vpop.f32.mrb[0].mxu0
        %v1923 = vadd.f32 0.0, %v1922
        %v1924 = vpop.f32.mrb[0].mxu0
        %1925 = vmatprep.mubr.bf16.mxu0 0
        %1926 = vmatmul.mubr.bf16.gmra.mrb[0].mxu0 %v1880
        %v1927 = vpop.f32.mrb[0].mxu0
        %v1928 = vadd.f32 0.0, %v1927
        %v1929 = vpop.f32.mrb[0].mxu0
        %v1930 = vpop.f32.mrb[0].mxu0
        %v1931 = vadd.f32 0.0, %v1930
        %v1932 = vpop.f32.mrb[0].mxu0
        %1933 = vmatprep.mubr.bf16.mxu0 0
        %1934 = vmatmul.mubr.bf16.gmra.mrb[0].mxu0 %v1883
        %v1935 = vpop.f32.mrb[0].mxu0
        %v1936 = vadd.f32 0.0, %v1935
        %v1937 = vpop.f32.mrb[0].mxu0
        %v1938 = vpop.f32.mrb[0].mxu0
        %v1939 = vadd.f32 0.0, %v1938
        %v1940 = vpop.f32.mrb[0].mxu0
        %1941 = vdwg.mxu0
        %v1943 = vsel %vm595, %v1847, 0
        %v1946 = vsel %vm595, %v1848, 0
        %v1949 = vsel %vm595, %v1849, 0
        %1951 = vmatprep.subr.bf16.mxu0 0
        %1952 = vmatpush1.bf16.msra.mxu0 %v1869
        %1953 = vmatprep.subr.bf16.mxu0 0
        %1954 = vmatpush1.bf16.msra.mxu0 0
        %1955 = vmatprep.subr.bf16.mxu0 0
        %1956 = vmatpush1.bf16.msra.mxu0 0
        %1957 = vmatprep.subr.bf16.mxu0 0
        %1958 = vmatpush1.bf16.msra.mxu0 0
        %1959 = vmatprep.subr.bf16.mxu0 0
        %1960 = vmatpush1.bf16.msra.mxu0 0
        %1961 = vmatprep.subr.bf16.mxu0 0
        %1962 = vmatpush1.bf16.msra.mxu0 0
        %1963 = vmatprep.subr.bf16.mxu0 0
        %1964 = vmatpush1.bf16.msra.mxu0 0
        %1965 = vmatprep.subr.bf16.mxu0 0
        %1966 = vmatpush1.bf16.msra.mxu0 0
        %1967 = vmatprep.subr.bf16.mxu0 0
        %1968 = vmatpush1.bf16.msra.mxu0 0
        %1969 = vmatprep.subr.bf16.mxu0 0
        %1970 = vmatpush1.bf16.msra.mxu0 0
        %1971 = vmatprep.subr.bf16.mxu0 0
        %1972 = vmatpush1.bf16.msra.mxu0 0
        %1973 = vmatprep.subr.bf16.mxu0 0
        %1974 = vmatpush1.bf16.msra.mxu0 0
        %1975 = vmatprep.subr.bf16.mxu0 0
        %1976 = vmatpush1.bf16.msra.mxu0 0
        %1977 = vmatprep.subr.bf16.mxu0 0
        %1978 = vmatpush1.bf16.msra.mxu0 0
        %1979 = vmatprep.subr.bf16.mxu0 0
        %1980 = vmatpush1.bf16.msra.mxu0 0
        %1981 = vmatprep.subr.bf16.mxu0 0
        %1982 = vmatpush1.bf16.msra.mxu0 0
        %1983 = vmatprep.mubr.bf16.mxu0 0
        %1984 = vmatmul.mubr.bf16.gmra.mrb[0].mxu0 %v1943
        %v1985 = vpop.f32.mrb[0].mxu0
        %v1986 = vadd.f32 0.0, %v1985
        %v1987 = vpop.f32.mrb[0].mxu0
        %v1988 = vpop.f32.mrb[0].mxu0
        %v1989 = vadd.f32 0.0, %v1988
        %v1990 = vpop.f32.mrb[0].mxu0
        %1991 = vmatprep.mubr.bf16.mxu0 0
        %1992 = vmatmul.mubr.bf16.gmra.mrb[0].mxu0 %v1946
        %v1993 = vpop.f32.mrb[0].mxu0
        %v1994 = vadd.f32 0.0, %v1993
        %v1995 = vpop.f32.mrb[0].mxu0
        %v1996 = vpop.f32.mrb[0].mxu0
        %v1997 = vadd.f32 0.0, %v1996
        %v1998 = vpop.f32.mrb[0].mxu0
        %1999 = vmatprep.mubr.bf16.mxu0 0
        %2000 = vmatmul.mubr.bf16.gmra.mrb[0].mxu0 %v1949
        %v2001 = vpop.f32.mrb[0].mxu0
        %v2002 = vadd.f32 0.0, %v2001
        %v2003 = vpop.f32.mrb[0].mxu0
        %v2004 = vpop.f32.mrb[0].mxu0
        %v2005 = vadd.f32 0.0, %v2004
        %v2006 = vpop.f32.mrb[0].mxu0
        %2007 = vdwg.mxu0
        %v2009 = vsel %vm595, %v1850, 0
        %v2012 = vsel %vm595, %v1851, 0
        %v2015 = vsel %vm595, %v1852, 0
        %2017 = vmatprep.subr.bf16.mxu0 0
        %2018 = vmatpush1.bf16.msra.mxu0 %v1870
        %2019 = vmatprep.subr.bf16.mxu0 0
        %2020 = vmatpush1.bf16.msra.mxu0 0
        %2021 = vmatprep.subr.bf16.mxu0 0
        %2022 = vmatpush1.bf16.msra.mxu0 0
        %2023 = vmatprep.subr.bf16.mxu0 0
        %2024 = vmatpush1.bf16.msra.mxu0 0
        %2025 = vmatprep.subr.bf16.mxu0 0
        %2026 = vmatpush1.bf16.msra.mxu0 0
        %2027 = vmatprep.subr.bf16.mxu0 0
        %2028 = vmatpush1.bf16.msra.mxu0 0
        %2029 = vmatprep.subr.bf16.mxu0 0
        %2030 = vmatpush1.bf16.msra.mxu0 0
        %2031 = vmatprep.subr.bf16.mxu0 0
        %2032 = vmatpush1.bf16.msra.mxu0 0
        %2033 = vmatprep.subr.bf16.mxu0 0
        %2034 = vmatpush1.bf16.msra.mxu0 0
        %2035 = vmatprep.subr.bf16.mxu0 0
        %2036 = vmatpush1.bf16.msra.mxu0 0
        %2037 = vmatprep.subr.bf16.mxu0 0
        %2038 = vmatpush1.bf16.msra.mxu0 0
        %2039 = vmatprep.subr.bf16.mxu0 0
        %2040 = vmatpush1.bf16.msra.mxu0 0
        %2041 = vmatprep.subr.bf16.mxu0 0
        %2042 = vmatpush1.bf16.msra.mxu0 0
        %2043 = vmatprep.subr.bf16.mxu0 0
        %2044 = vmatpush1.bf16.msra.mxu0 0
        %2045 = vmatprep.subr.bf16.mxu0 0
        %2046 = vmatpush1.bf16.msra.mxu0 0
        %2047 = vmatprep.subr.bf16.mxu0 0
        %2048 = vmatpush1.bf16.msra.mxu0 0
        %2049 = vmatprep.mubr.bf16.mxu0 0
        %2050 = vmatmul.mubr.bf16.gmra.mrb[0].mxu0 %v2009
        %v2051 = vpop.f32.mrb[0].mxu0
        %v2052 = vadd.f32 0.0, %v2051
        %v2053 = vpop.f32.mrb[0].mxu0
        %v2054 = vpop.f32.mrb[0].mxu0
        %v2055 = vadd.f32 0.0, %v2054
        %v2056 = vpop.f32.mrb[0].mxu0
        %2057 = vmatprep.mubr.bf16.mxu0 0
        %2058 = vmatmul.mubr.bf16.gmra.mrb[0].mxu0 %v2012
        %v2059 = vpop.f32.mrb[0].mxu0
        %v2060 = vadd.f32 0.0, %v2059
        %v2061 = vpop.f32.mrb[0].mxu0
        %v2062 = vpop.f32.mrb[0].mxu0
        %v2063 = vadd.f32 0.0, %v2062
        %v2064 = vpop.f32.mrb[0].mxu0
        %2065 = vmatprep.mubr.bf16.mxu0 0
        %2066 = vmatmul.mubr.bf16.gmra.mrb[0].mxu0 %v2015
        %v2067 = vpop.f32.mrb[0].mxu0
        %v2068 = vadd.f32 0.0, %v2067
        %v2069 = vpop.f32.mrb[0].mxu0
        %v2070 = vpop.f32.mrb[0].mxu0
        %v2071 = vadd.f32 0.0, %v2070
        %v2072 = vpop.f32.mrb[0].mxu0
        %2073 = vdwg.mxu0
        %v2075 = vsel %vm595, %v1853, 0
        %v2078 = vsel %vm595, %v1854, 0
        %v2081 = vsel %vm595, %v1855, 0
        %2083 = vmatprep.subr.bf16.mxu0 0
        %2084 = vmatpush1.bf16.msra.mxu0 %v1871
        %2085 = vmatprep.subr.bf16.mxu0 0
        %2086 = vmatpush1.bf16.msra.mxu0 0
        %2087 = vmatprep.subr.bf16.mxu0 0
        %2088 = vmatpush1.bf16.msra.mxu0 0
        %2089 = vmatprep.subr.bf16.mxu0 0
        %2090 = vmatpush1.bf16.msra.mxu0 0
        %2091 = vmatprep.subr.bf16.mxu0 0
        %2092 = vmatpush1.bf16.msra.mxu0 0
        %2093 = vmatprep.subr.bf16.mxu0 0
        %2094 = vmatpush1.bf16.msra.mxu0 0
        %2095 = vmatprep.subr.bf16.mxu0 0
        %2096 = vmatpush1.bf16.msra.mxu0 0
        %2097 = vmatprep.subr.bf16.mxu0 0
        %2098 = vmatpush1.bf16.msra.mxu0 0
        %2099 = vmatprep.subr.bf16.mxu0 0
        %2100 = vmatpush1.bf16.msra.mxu0 0
        %2101 = vmatprep.subr.bf16.mxu0 0
        %2102 = vmatpush1.bf16.msra.mxu0 0
        %2103 = vmatprep.subr.bf16.mxu0 0
        %2104 = vmatpush1.bf16.msra.mxu0 0
        %2105 = vmatprep.subr.bf16.mxu0 0
        %2106 = vmatpush1.bf16.msra.mxu0 0
        %2107 = vmatprep.subr.bf16.mxu0 0
        %2108 = vmatpush1.bf16.msra.mxu0 0
        %2109 = vmatprep.subr.bf16.mxu0 0
        %2110 = vmatpush1.bf16.msra.mxu0 0
        %2111 = vmatprep.subr.bf16.mxu0 0
        %2112 = vmatpush1.bf16.msra.mxu0 0
        %2113 = vmatprep.subr.bf16.mxu0 0
        %2114 = vmatpush1.bf16.msra.mxu0 0
        %2115 = vmatprep.mubr.bf16.mxu0 0
        %2116 = vmatmul.mubr.bf16.gmra.mrb[0].mxu0 %v2075
        %v2117 = vpop.f32.mrb[0].mxu0
        %v2118 = vadd.f32 0.0, %v2117
        %v2119 = vpop.f32.mrb[0].mxu0
        %v2120 = vpop.f32.mrb[0].mxu0
        %v2121 = vadd.f32 0.0, %v2120
        %v2122 = vpop.f32.mrb[0].mxu0
        %2123 = vmatprep.mubr.bf16.mxu0 0
        %2124 = vmatmul.mubr.bf16.gmra.mrb[0].mxu0 %v2078
        %v2125 = vpop.f32.mrb[0].mxu0
        %v2126 = vadd.f32 0.0, %v2125
        %v2127 = vpop.f32.mrb[0].mxu0
        %v2128 = vpop.f32.mrb[0].mxu0
        %v2129 = vadd.f32 0.0, %v2128
        %v2130 = vpop.f32.mrb[0].mxu0
        %2131 = vmatprep.mubr.bf16.mxu0 0
        %2132 = vmatmul.mubr.bf16.gmra.mrb[0].mxu0 %v2081
        %v2133 = vpop.f32.mrb[0].mxu0
        %v2134 = vadd.f32 0.0, %v2133
        %v2135 = vpop.f32.mrb[0].mxu0
        %v2136 = vpop.f32.mrb[0].mxu0
        %v2137 = vadd.f32 0.0, %v2136
        %v2138 = vpop.f32.mrb[0].mxu0
        %2139 = vdwg.mxu0
        %v2141 = vsel %vm595, %v1856, 0
        %v2144 = vsel %vm595, %v1857, 0
        %v2147 = vsel %vm595, %v1858, 0
        %2149 = vmatprep.subr.bf16.mxu0 0
        %2150 = vmatpush1.bf16.msra.mxu0 %v1872
        %2151 = vmatprep.subr.bf16.mxu0 0
        %2152 = vmatpush1.bf16.msra.mxu0 0
        %2153 = vmatprep.subr.bf16.mxu0 0
        %2154 = vmatpush1.bf16.msra.mxu0 0
        %2155 = vmatprep.subr.bf16.mxu0 0
        %2156 = vmatpush1.bf16.msra.mxu0 0
        %2157 = vmatprep.subr.bf16.mxu0 0
        %2158 = vmatpush1.bf16.msra.mxu0 0
        %2159 = vmatprep.subr.bf16.mxu0 0
        %2160 = vmatpush1.bf16.msra.mxu0 0
        %2161 = vmatprep.subr.bf16.mxu0 0
        %2162 = vmatpush1.bf16.msra.mxu0 0
        %2163 = vmatprep.subr.bf16.mxu0 0
        %2164 = vmatpush1.bf16.msra.mxu0 0
        %2165 = vmatprep.subr.bf16.mxu0 0
        %2166 = vmatpush1.bf16.msra.mxu0 0
        %2167 = vmatprep.subr.bf16.mxu0 0
        %2168 = vmatpush1.bf16.msra.mxu0 0
        %2169 = vmatprep.subr.bf16.mxu0 0
        %2170 = vmatpush1.bf16.msra.mxu0 0
        %2171 = vmatprep.subr.bf16.mxu0 0
        %2172 = vmatpush1.bf16.msra.mxu0 0
        %2173 = vmatprep.subr.bf16.mxu0 0
        %2174 = vmatpush1.bf16.msra.mxu0 0
        %2175 = vmatprep.subr.bf16.mxu0 0
        %2176 = vmatpush1.bf16.msra.mxu0 0
        %2177 = vmatprep.subr.bf16.mxu0 0
        %2178 = vmatpush1.bf16.msra.mxu0 0
        %2179 = vmatprep.subr.bf16.mxu0 0
        %2180 = vmatpush1.bf16.msra.mxu0 0
        %2181 = vmatprep.mubr.bf16.mxu0 0
        %2182 = vmatmul.mubr.bf16.gmra.mrb[0].mxu0 %v2141
        %v2183 = vpop.f32.mrb[0].mxu0
        %v2184 = vadd.f32 0.0, %v2183
        %v2185 = vpop.f32.mrb[0].mxu0
        %v2186 = vpop.f32.mrb[0].mxu0
        %v2187 = vadd.f32 0.0, %v2186
        %v2188 = vpop.f32.mrb[0].mxu0
        %2189 = vmatprep.mubr.bf16.mxu0 0
        %2190 = vmatmul.mubr.bf16.gmra.mrb[0].mxu0 %v2144
        %v2191 = vpop.f32.mrb[0].mxu0
        %v2192 = vadd.f32 0.0, %v2191
        %v2193 = vpop.f32.mrb[0].mxu0
        %v2194 = vpop.f32.mrb[0].mxu0
        %v2195 = vadd.f32 0.0, %v2194
        %v2196 = vpop.f32.mrb[0].mxu0
        %2197 = vmatprep.mubr.bf16.mxu0 0
        %2198 = vmatmul.mubr.bf16.gmra.mrb[0].mxu0 %v2147
        %v2199 = vpop.f32.mrb[0].mxu0
        %v2200 = vadd.f32 0.0, %v2199
        %v2201 = vpop.f32.mrb[0].mxu0
        %v2202 = vpop.f32.mrb[0].mxu0
        %v2203 = vadd.f32 0.0, %v2202
        %v2204 = vpop.f32.mrb[0].mxu0
        %2205 = vdwg.mxu0
        %v2207 = vsel %vm595, %v1859, 0
        %v2210 = vsel %vm595, %v1860, 0
        %v2213 = vsel %vm595, %v1861, 0
        %2215 = vmatprep.subr.bf16.mxu0 0
        %2216 = vmatpush1.bf16.msra.mxu0 %v1873
        %2217 = vmatprep.subr.bf16.mxu0 0
        %2218 = vmatpush1.bf16.msra.mxu0 0
        %2219 = vmatprep.subr.bf16.mxu0 0
        %2220 = vmatpush1.bf16.msra.mxu0 0
        %2221 = vmatprep.subr.bf16.mxu0 0
        %2222 = vmatpush1.bf16.msra.mxu0 0
        %2223 = vmatprep.subr.bf16.mxu0 0
        %2224 = vmatpush1.bf16.msra.mxu0 0
        %2225 = vmatprep.subr.bf16.mxu0 0
        %2226 = vmatpush1.bf16.msra.mxu0 0
        %2227 = vmatprep.subr.bf16.mxu0 0
        %2228 = vmatpush1.bf16.msra.mxu0 0
        %2229 = vmatprep.subr.bf16.mxu0 0
        %2230 = vmatpush1.bf16.msra.mxu0 0
        %2231 = vmatprep.subr.bf16.mxu0 0
        %2232 = vmatpush1.bf16.msra.mxu0 0
        %2233 = vmatprep.subr.bf16.mxu0 0
        %2234 = vmatpush1.bf16.msra.mxu0 0
        %2235 = vmatprep.subr.bf16.mxu0 0
        %2236 = vmatpush1.bf16.msra.mxu0 0
        %2237 = vmatprep.subr.bf16.mxu0 0
        %2238 = vmatpush1.bf16.msra.mxu0 0
        %2239 = vmatprep.subr.bf16.mxu0 0
        %2240 = vmatpush1.bf16.msra.mxu0 0
        %2241 = vmatprep.subr.bf16.mxu0 0
        %2242 = vmatpush1.bf16.msra.mxu0 0
        %2243 = vmatprep.subr.bf16.mxu0 0
        %2244 = vmatpush1.bf16.msra.mxu0 0
        %2245 = vmatprep.subr.bf16.mxu0 0
        %2246 = vmatpush1.bf16.msra.mxu0 0
        %2247 = vmatprep.mubr.bf16.mxu0 0
        %2248 = vmatmul.mubr.bf16.gmra.mrb[0].mxu0 %v2207
        %v2249 = vpop.f32.mrb[0].mxu0
        %v2250 = vadd.f32 0.0, %v2249
        %v2251 = vpop.f32.mrb[0].mxu0
        %v2252 = vpop.f32.mrb[0].mxu0
        %v2253 = vadd.f32 0.0, %v2252
        %v2254 = vpop.f32.mrb[0].mxu0
        %2255 = vmatprep.mubr.bf16.mxu0 0
        %2256 = vmatmul.mubr.bf16.gmra.mrb[0].mxu0 %v2210
        %v2257 = vpop.f32.mrb[0].mxu0
        %v2258 = vadd.f32 0.0, %v2257
        %v2259 = vpop.f32.mrb[0].mxu0
        %v2260 = vpop.f32.mrb[0].mxu0
        %v2261 = vadd.f32 0.0, %v2260
        %v2262 = vpop.f32.mrb[0].mxu0
        %2263 = vmatprep.mubr.bf16.mxu0 0
        %2264 = vmatmul.mubr.bf16.gmra.mrb[0].mxu0 %v2213
        %v2265 = vpop.f32.mrb[0].mxu0
        %v2266 = vadd.f32 0.0, %v2265
        %v2267 = vpop.f32.mrb[0].mxu0
        %v2268 = vpop.f32.mrb[0].mxu0
        %v2269 = vadd.f32 0.0, %v2268
        %v2270 = vpop.f32.mrb[0].mxu0
        %2271 = vdwg.mxu0
        %v2273 = vsel %vm595, %v1862, 0
        %v2276 = vsel %vm595, %v1863, 0
        %v2279 = vsel %vm595, %v1864, 0
        %2281 = vmatprep.subr.bf16.mxu0 0
        %2282 = vmatpush1.bf16.msra.mxu0 %v1874
        %2283 = vmatprep.subr.bf16.mxu0 0
        %2284 = vmatpush1.bf16.msra.mxu0 0
        %2285 = vmatprep.subr.bf16.mxu0 0
        %2286 = vmatpush1.bf16.msra.mxu0 0
        %2287 = vmatprep.subr.bf16.mxu0 0
        %2288 = vmatpush1.bf16.msra.mxu0 0
        %2289 = vmatprep.subr.bf16.mxu0 0
        %2290 = vmatpush1.bf16.msra.mxu0 0
        %2291 = vmatprep.subr.bf16.mxu0 0
        %2292 = vmatpush1.bf16.msra.mxu0 0
        %2293 = vmatprep.subr.bf16.mxu0 0
        %2294 = vmatpush1.bf16.msra.mxu0 0
        %2295 = vmatprep.subr.bf16.mxu0 0
        %2296 = vmatpush1.bf16.msra.mxu0 0
        %2297 = vmatprep.subr.bf16.mxu0 0
        %2298 = vmatpush1.bf16.msra.mxu0 0
        %2299 = vmatprep.subr.bf16.mxu0 0
        %2300 = vmatpush1.bf16.msra.mxu0 0
        %2301 = vmatprep.subr.bf16.mxu0 0
        %2302 = vmatpush1.bf16.msra.mxu0 0
        %2303 = vmatprep.subr.bf16.mxu0 0
        %2304 = vmatpush1.bf16.msra.mxu0 0
        %2305 = vmatprep.subr.bf16.mxu0 0
        %2306 = vmatpush1.bf16.msra.mxu0 0
        %2307 = vmatprep.subr.bf16.mxu0 0
        %2308 = vmatpush1.bf16.msra.mxu0 0
        %2309 = vmatprep.subr.bf16.mxu0 0
        %2310 = vmatpush1.bf16.msra.mxu0 0
        %2311 = vmatprep.subr.bf16.mxu0 0
        %2312 = vmatpush1.bf16.msra.mxu0 0
        %2313 = vmatprep.mubr.bf16.mxu0 0
        %2314 = vmatmul.mubr.bf16.gmra.mrb[0].mxu0 %v2273
        %v2315 = vpop.f32.mrb[0].mxu0
        %v2316 = vadd.f32 0.0, %v2315
        %v2317 = vpop.f32.mrb[0].mxu0
        %v2318 = vpop.f32.mrb[0].mxu0
        %v2319 = vadd.f32 0.0, %v2318
        %v2320 = vpop.f32.mrb[0].mxu0
        %2321 = vmatprep.mubr.bf16.mxu0 0
        %2322 = vmatmul.mubr.bf16.gmra.mrb[0].mxu0 %v2276
        %v2323 = vpop.f32.mrb[0].mxu0
        %v2324 = vadd.f32 0.0, %v2323
        %v2325 = vpop.f32.mrb[0].mxu0
        %v2326 = vpop.f32.mrb[0].mxu0
        %v2327 = vadd.f32 0.0, %v2326
        %v2328 = vpop.f32.mrb[0].mxu0
        %2329 = vmatprep.mubr.bf16.mxu0 0
        %2330 = vmatmul.mubr.bf16.gmra.mrb[0].mxu0 %v2279
        %v2331 = vpop.f32.mrb[0].mxu0
        %v2332 = vadd.f32 0.0, %v2331
        %v2333 = vpop.f32.mrb[0].mxu0
        %v2334 = vpop.f32.mrb[0].mxu0
        %v2335 = vadd.f32 0.0, %v2334
        %v2336 = vpop.f32.mrb[0].mxu0
        %2337 = vdwg.mxu0
        %v2339 = vsel %vm595, %v1865, 0
        %v2342 = vsel %vm595, %v1866, 0
        %v2345 = vsel %vm595, %v1867, 0
        %2347 = vmatprep.subr.bf16.mxu0 0
        %2348 = vmatpush1.bf16.msra.mxu0 %v1875
        %2349 = vmatprep.subr.bf16.mxu0 0
        %2350 = vmatpush1.bf16.msra.mxu0 0
        %2351 = vmatprep.subr.bf16.mxu0 0
        %2352 = vmatpush1.bf16.msra.mxu0 0
        %2353 = vmatprep.subr.bf16.mxu0 0
        %2354 = vmatpush1.bf16.msra.mxu0 0
        %2355 = vmatprep.subr.bf16.mxu0 0
        %2356 = vmatpush1.bf16.msra.mxu0 0
        %2357 = vmatprep.subr.bf16.mxu0 0
        %2358 = vmatpush1.bf16.msra.mxu0 0
        %2359 = vmatprep.subr.bf16.mxu0 0
        %2360 = vmatpush1.bf16.msra.mxu0 0
        %2361 = vmatprep.subr.bf16.mxu0 0
        %2362 = vmatpush1.bf16.msra.mxu0 0
        %2363 = vmatprep.subr.bf16.mxu0 0
        %2364 = vmatpush1.bf16.msra.mxu0 0
        %2365 = vmatprep.subr.bf16.mxu0 0
        %2366 = vmatpush1.bf16.msra.mxu0 0
        %2367 = vmatprep.subr.bf16.mxu0 0
        %2368 = vmatpush1.bf16.msra.mxu0 0
        %2369 = vmatprep.subr.bf16.mxu0 0
        %2370 = vmatpush1.bf16.msra.mxu0 0
        %2371 = vmatprep.subr.bf16.mxu0 0
        %2372 = vmatpush1.bf16.msra.mxu0 0
        %2373 = vmatprep.subr.bf16.mxu0 0
        %2374 = vmatpush1.bf16.msra.mxu0 0
        %2375 = vmatprep.subr.bf16.mxu0 0
        %2376 = vmatpush1.bf16.msra.mxu0 0
        %2377 = vmatprep.subr.bf16.mxu0 0
        %2378 = vmatpush1.bf16.msra.mxu0 0
        %2379 = vmatprep.mubr.bf16.mxu0 0
        %2380 = vmatmul.mubr.bf16.gmra.mrb[0].mxu0 %v2339
        %v2381 = vpop.f32.mrb[0].mxu0
        %v2382 = vadd.f32 0.0, %v2381
        %v2383 = vpop.f32.mrb[0].mxu0
        %v2384 = vpop.f32.mrb[0].mxu0
        %v2385 = vadd.f32 0.0, %v2384
        %v2386 = vpop.f32.mrb[0].mxu0
        %2387 = vmatprep.mubr.bf16.mxu0 0
        %2388 = vmatmul.mubr.bf16.gmra.mrb[0].mxu0 %v2342
        %v2389 = vpop.f32.mrb[0].mxu0
        %v2390 = vadd.f32 0.0, %v2389
        %v2391 = vpop.f32.mrb[0].mxu0
        %v2392 = vpop.f32.mrb[0].mxu0
        %v2393 = vadd.f32 0.0, %v2392
        %v2394 = vpop.f32.mrb[0].mxu0
        %2395 = vmatprep.mubr.bf16.mxu0 0
        %2396 = vmatmul.mubr.bf16.gmra.mrb[0].mxu0 %v2345
        %v2397 = vpop.f32.mrb[0].mxu0
        %v2398 = vadd.f32 0.0, %v2397
        %v2399 = vpop.f32.mrb[0].mxu0
        %v2400 = vpop.f32.mrb[0].mxu0
        %v2401 = vadd.f32 0.0, %v2400
        %v2402 = vpop.f32.mrb[0].mxu0
        %2403 = vdwg.mxu0
        %2420 = vrot.lane.b32.xlu0 %v968, 8
        %v2421 = vpop.permute.xlu0 %2420
        %2422 = vrot.lane.b32.xlu0 %v971, 8
        %v2423 = vpop.permute.xlu0 %2422
        %2424 = vrot.lane.b32.xlu0 %v1034, 8
        %v2425 = vpop.permute.xlu0 %2424
        %2426 = vrot.lane.b32.xlu0 %v1037, 8
        %v2427 = vpop.permute.xlu0 %2426
        %2428 = vrot.lane.b32.xlu0 %v1100, 8
        %v2429 = vpop.permute.xlu0 %2428
        %2430 = vrot.lane.b32.xlu0 %v1103, 8
        %v2431 = vpop.permute.xlu0 %2430
        %2432 = vrot.lane.b32.xlu0 %v1166, 8
        %v2433 = vpop.permute.xlu0 %2432
        %2434 = vrot.lane.b32.xlu0 %v1169, 8
        %v2435 = vpop.permute.xlu0 %2434
        %2436 = vrot.lane.b32.xlu0 %v1232, 8
        %v2437 = vpop.permute.xlu0 %2436
        %2438 = vrot.lane.b32.xlu0 %v1235, 8
        %v2439 = vpop.permute.xlu0 %2438
        %2440 = vrot.lane.b32.xlu0 %v1298, 8
        %v2441 = vpop.permute.xlu0 %2440
        %2442 = vrot.lane.b32.xlu0 %v1301, 8
        %v2443 = vpop.permute.xlu0 %2442
        %2444 = vrot.lane.b32.xlu0 %v1364, 8
        %v2445 = vpop.permute.xlu0 %2444
        %2446 = vrot.lane.b32.xlu0 %v1367, 8
        %v2447 = vpop.permute.xlu0 %2446
        %2448 = vrot.lane.b32.xlu0 %v1430, 8
        %v2449 = vpop.permute.xlu0 %2448
        %2450 = vrot.lane.b32.xlu0 %v1433, 8
        %v2451 = vpop.permute.xlu0 %2450
        %2484 = vrot.lane.b32.xlu0 %v976, 16
        %v2485 = vpop.permute.xlu0 %2484
        %2486 = vrot.lane.b32.xlu0 %v979, 16
        %v2487 = vpop.permute.xlu0 %2486
        %2488 = vrot.lane.b32.xlu0 %v1042, 16
        %v2489 = vpop.permute.xlu0 %2488
        %2490 = vrot.lane.b32.xlu0 %v1045, 16
        %v2491 = vpop.permute.xlu0 %2490
        %2492 = vrot.lane.b32.xlu0 %v1108, 16
        %v2493 = vpop.permute.xlu0 %2492
        %2494 = vrot.lane.b32.xlu0 %v1111, 16
        %v2495 = vpop.permute.xlu0 %2494
        %2496 = vrot.lane.b32.xlu0 %v1174, 16
        %v2497 = vpop.permute.xlu0 %2496
        %2498 = vrot.lane.b32.xlu0 %v1177, 16
        %v2499 = vpop.permute.xlu0 %2498
        %2500 = vrot.lane.b32.xlu0 %v1240, 16
        %v2501 = vpop.permute.xlu0 %2500
        %2502 = vrot.lane.b32.xlu0 %v1243, 16
        %v2503 = vpop.permute.xlu0 %2502
        %2504 = vrot.lane.b32.xlu0 %v1306, 16
        %v2505 = vpop.permute.xlu0 %2504
        %2506 = vrot.lane.b32.xlu0 %v1309, 16
        %v2507 = vpop.permute.xlu0 %2506
        %2508 = vrot.lane.b32.xlu0 %v1372, 16
        %v2509 = vpop.permute.xlu0 %2508
        %2510 = vrot.lane.b32.xlu0 %v1375, 16
        %v2511 = vpop.permute.xlu0 %2510
        %2512 = vrot.lane.b32.xlu0 %v1438, 16
        %v2513 = vpop.permute.xlu0 %2512
        %2514 = vrot.lane.b32.xlu0 %v1441, 16
        %v2515 = vpop.permute.xlu0 %2514
        %2548 = vrot.lane.b32.xlu0 %v1920, 24
        %v2549 = vpop.permute.xlu0 %2548
        %2550 = vrot.lane.b32.xlu0 %v1923, 24
        %v2551 = vpop.permute.xlu0 %2550
        %2552 = vrot.lane.b32.xlu0 %v1986, 24
        %v2553 = vpop.permute.xlu0 %2552
        %2554 = vrot.lane.b32.xlu0 %v1989, 24
        %v2555 = vpop.permute.xlu0 %2554
        %2556 = vrot.lane.b32.xlu0 %v2052, 24
        %v2557 = vpop.permute.xlu0 %2556
        %2558 = vrot.lane.b32.xlu0 %v2055, 24
        %v2559 = vpop.permute.xlu0 %2558
        %2560 = vrot.lane.b32.xlu0 %v2118, 24
        %v2561 = vpop.permute.xlu0 %2560
        %2562 = vrot.lane.b32.xlu0 %v2121, 24
        %v2563 = vpop.permute.xlu0 %2562
        %2564 = vrot.lane.b32.xlu0 %v2184, 24
        %v2565 = vpop.permute.xlu0 %2564
        %2566 = vrot.lane.b32.xlu0 %v2187, 24
        %v2567 = vpop.permute.xlu0 %2566
        %2568 = vrot.lane.b32.xlu0 %v2250, 24
        %v2569 = vpop.permute.xlu0 %2568
        %2570 = vrot.lane.b32.xlu0 %v2253, 24
        %v2571 = vpop.permute.xlu0 %2570
        %2572 = vrot.lane.b32.xlu0 %v2316, 24
        %v2573 = vpop.permute.xlu0 %2572
        %2574 = vrot.lane.b32.xlu0 %v2319, 24
        %v2575 = vpop.permute.xlu0 %2574
        %2576 = vrot.lane.b32.xlu0 %v2382, 24
        %v2577 = vpop.permute.xlu0 %2576
        %2578 = vrot.lane.b32.xlu0 %v2385, 24
        %v2579 = vpop.permute.xlu0 %2578
        %2612 = vrot.lane.b32.xlu0 %v1928, 32
        %v2613 = vpop.permute.xlu0 %2612
        %2614 = vrot.lane.b32.xlu0 %v1931, 32
        %v2615 = vpop.permute.xlu0 %2614
        %2616 = vrot.lane.b32.xlu0 %v1994, 32
        %v2617 = vpop.permute.xlu0 %2616
        %2618 = vrot.lane.b32.xlu0 %v1997, 32
        %v2619 = vpop.permute.xlu0 %2618
        %2620 = vrot.lane.b32.xlu0 %v2060, 32
        %v2621 = vpop.permute.xlu0 %2620
        %2622 = vrot.lane.b32.xlu0 %v2063, 32
        %v2623 = vpop.permute.xlu0 %2622
        %2624 = vrot.lane.b32.xlu0 %v2126, 32
        %v2625 = vpop.permute.xlu0 %2624
        %2626 = vrot.lane.b32.xlu0 %v2129, 32
        %v2627 = vpop.permute.xlu0 %2626
        %2628 = vrot.lane.b32.xlu0 %v2192, 32
        %v2629 = vpop.permute.xlu0 %2628
        %2630 = vrot.lane.b32.xlu0 %v2195, 32
        %v2631 = vpop.permute.xlu0 %2630
        %2632 = vrot.lane.b32.xlu0 %v2258, 32
        %v2633 = vpop.permute.xlu0 %2632
        %2634 = vrot.lane.b32.xlu0 %v2261, 32
        %v2635 = vpop.permute.xlu0 %2634
        %2636 = vrot.lane.b32.xlu0 %v2324, 32
        %v2637 = vpop.permute.xlu0 %2636
        %2638 = vrot.lane.b32.xlu0 %v2327, 32
        %v2639 = vpop.permute.xlu0 %2638
        %2640 = vrot.lane.b32.xlu0 %v2390, 32
        %v2641 = vpop.permute.xlu0 %2640
        %2642 = vrot.lane.b32.xlu0 %v2393, 32
        %v2643 = vpop.permute.xlu0 %2642
        %2676 = vrot.lane.b32.xlu0 %v1936, 40
        %v2677 = vpop.permute.xlu0 %2676
        %2678 = vrot.lane.b32.xlu0 %v1939, 40
        %v2679 = vpop.permute.xlu0 %2678
        %2680 = vrot.lane.b32.xlu0 %v2002, 40
        %v2681 = vpop.permute.xlu0 %2680
        %2682 = vrot.lane.b32.xlu0 %v2005, 40
        %v2683 = vpop.permute.xlu0 %2682
        %2684 = vrot.lane.b32.xlu0 %v2068, 40
        %v2685 = vpop.permute.xlu0 %2684
        %2686 = vrot.lane.b32.xlu0 %v2071, 40
        %v2687 = vpop.permute.xlu0 %2686
        %2688 = vrot.lane.b32.xlu0 %v2134, 40
        %v2689 = vpop.permute.xlu0 %2688
        %2690 = vrot.lane.b32.xlu0 %v2137, 40
        %v2691 = vpop.permute.xlu0 %2690
        %2692 = vrot.lane.b32.xlu0 %v2200, 40
        %v2693 = vpop.permute.xlu0 %2692
        %2694 = vrot.lane.b32.xlu0 %v2203, 40
        %v2695 = vpop.permute.xlu0 %2694
        %2696 = vrot.lane.b32.xlu0 %v2266, 40
        %v2697 = vpop.permute.xlu0 %2696
        %2698 = vrot.lane.b32.xlu0 %v2269, 40
        %v2699 = vpop.permute.xlu0 %2698
        %2700 = vrot.lane.b32.xlu0 %v2332, 40
        %v2701 = vpop.permute.xlu0 %2700
        %2702 = vrot.lane.b32.xlu0 %v2335, 40
        %v2703 = vpop.permute.xlu0 %2702
        %2704 = vrot.lane.b32.xlu0 %v2398, 40
        %v2705 = vpop.permute.xlu0 %2704
        %2706 = vrot.lane.b32.xlu0 %v2401, 40
        %v2707 = vpop.permute.xlu0 %2706
        %vm2724 = vcmask 64512
        %v2725 = vsel %vm2724, %v960, %v2421
        %v2726 = vsel %vm2724, %v963, %v2423
        %v2727 = vsel %vm2724, %v1026, %v2425
        %v2728 = vsel %vm2724, %v1029, %v2427
        %v2729 = vsel %vm2724, %v1092, %v2429
        %v2730 = vsel %vm2724, %v1095, %v2431
        %v2731 = vsel %vm2724, %v1158, %v2433
        %v2732 = vsel %vm2724, %v1161, %v2435
        %v2733 = vsel %vm2724, %v1224, %v2437
        %v2734 = vsel %vm2724, %v1227, %v2439
        %v2735 = vsel %vm2724, %v1290, %v2441
        %v2736 = vsel %vm2724, %v1293, %v2443
        %v2737 = vsel %vm2724, %v1356, %v2445
        %v2738 = vsel %vm2724, %v1359, %v2447
        %v2739 = vsel %vm2724, %v1422, %v2449
        %v2740 = vsel %vm2724, %v1425, %v2451
        %v2741 = vsel %vm595, %v2725, %v2485
        %v2742 = vsel %vm595, %v2726, %v2487
        %v2743 = vsel %vm595, %v2727, %v2489
        %v2744 = vsel %vm595, %v2728, %v2491
        %v2745 = vsel %vm595, %v2729, %v2493
        %v2746 = vsel %vm595, %v2730, %v2495
        %v2747 = vsel %vm595, %v2731, %v2497
        %v2748 = vsel %vm595, %v2732, %v2499
        %v2749 = vsel %vm595, %v2733, %v2501
        %v2750 = vsel %vm595, %v2734, %v2503
        %v2751 = vsel %vm595, %v2735, %v2505
        %v2752 = vsel %vm595, %v2736, %v2507
        %v2753 = vsel %vm595, %v2737, %v2509
        %v2754 = vsel %vm595, %v2738, %v2511
        %v2755 = vsel %vm595, %v2739, %v2513
        %v2756 = vsel %vm595, %v2740, %v2515
        %vm2757 = vcmask 195584
        %v2758 = vsel %vm2757, %v2741, %v2549
        %v2759 = vsel %vm2757, %v2742, %v2551
        %v2760 = vsel %vm2757, %v2743, %v2553
        %v2761 = vsel %vm2757, %v2744, %v2555
        %v2762 = vsel %vm2757, %v2745, %v2557
        %v2763 = vsel %vm2757, %v2746, %v2559
        %v2764 = vsel %vm2757, %v2747, %v2561
        %v2765 = vsel %vm2757, %v2748, %v2563
        %v2766 = vsel %vm2757, %v2749, %v2565
        %v2767 = vsel %vm2757, %v2750, %v2567
        %v2768 = vsel %vm2757, %v2751, %v2569
        %v2769 = vsel %vm2757, %v2752, %v2571
        %v2770 = vsel %vm2757, %v2753, %v2573
        %v2771 = vsel %vm2757, %v2754, %v2575
        %v2772 = vsel %vm2757, %v2755, %v2577
        %v2773 = vsel %vm2757, %v2756, %v2579
        %vm2774 = vcmask 261120
        %v2775 = vsel %vm2774, %v2758, %v2613
        %v2776 = vsel %vm2774, %v2759, %v2615
        %v2777 = vsel %vm2774, %v2760, %v2617
        %v2778 = vsel %vm2774, %v2761, %v2619
        %v2779 = vsel %vm2774, %v2762, %v2621
        %v2780 = vsel %vm2774, %v2763, %v2623
        %v2781 = vsel %vm2774, %v2764, %v2625
        %v2782 = vsel %vm2774, %v2765, %v2627
        %v2783 = vsel %vm2774, %v2766, %v2629
        %v2784 = vsel %vm2774, %v2767, %v2631
        %v2785 = vsel %vm2774, %v2768, %v2633
        %v2786 = vsel %vm2774, %v2769, %v2635
        %v2787 = vsel %vm2774, %v2770, %v2637
        %v2788 = vsel %vm2774, %v2771, %v2639
        %v2789 = vsel %vm2774, %v2772, %v2641
        %v2790 = vsel %vm2774, %v2773, %v2643
        %vm2791 = vcmask 326656
        %v2792 = vsel %vm2791, %v2775, %v2677
        %v2793 = vsel %vm2791, %v2776, %v2679
        %v2794 = vsel %vm2791, %v2777, %v2681
        %v2795 = vsel %vm2791, %v2778, %v2683
        %v2796 = vsel %vm2791, %v2779, %v2685
        %v2797 = vsel %vm2791, %v2780, %v2687
        %v2798 = vsel %vm2791, %v2781, %v2689
        %v2799 = vsel %vm2791, %v2782, %v2691
        %v2800 = vsel %vm2791, %v2783, %v2693
        %v2801 = vsel %vm2791, %v2784, %v2695
        %v2802 = vsel %vm2791, %v2785, %v2697
        %v2803 = vsel %vm2791, %v2786, %v2699
        %v2804 = vsel %vm2791, %v2787, %v2701
        %v2805 = vsel %vm2791, %v2788, %v2703
        %v2806 = vsel %vm2791, %v2789, %v2705
        %v2807 = vsel %vm2791, %v2790, %v2707
        %v2808 = vpack.c.bf16 %v2793, %v2792
        %v2809 = vpack.c.bf16 %v2795, %v2794
        %v2810 = vpack.c.bf16 %v2797, %v2796
        %v2811 = vpack.c.bf16 %v2799, %v2798
        %v2812 = vpack.c.bf16 %v2801, %v2800
        %v2813 = vpack.c.bf16 %v2803, %v2802
        %v2814 = vpack.c.bf16 %v2805, %v2804
        %v2815 = vpack.c.bf16 %v2807, %v2806
        %v2816 = vld [vmem:[%s4] sm:$0xf]
        %v2817 = vld [vmem:[%s4 + $0x4] sm:$0xf]
        %v2818 = vld [vmem:[%s4 + $0x8] sm:$0xf]
        %v2819 = vld [vmem:[%s4 + $0xc] sm:$0xf]
        %v2820 = vld [vmem:[%s4 + $0x10] sm:$0xf]
        %v2821 = vld [vmem:[%s4 + $0x14] sm:$0xf]
        %v2828 = vunpack.c.l.b16 %v2816
        %v2829 = vunpack.c.l.b16 %v2817
        %v2830 = vunpack.c.l.b16 %v2818
        %v2831 = vunpack.c.l.b16 %v2819
        %v2832 = vunpack.c.l.b16 %v2820
        %v2833 = vunpack.c.l.b16 %v2821
        %v2834 = vpack.c.b16 %v2829, %v2828
        %v2835 = vpack.c.b16 %v2831, %v2830
        %v2836 = vpack.c.b16 %v2833, %v2832
        %vm2840 = vcmask 392192
        %v2842 = vsel %vm2840, %v2808, 0
        %v2845 = vsel %vm2840, %v2809, 0
        %v2848 = vsel %vm2840, %v2810, 0
        %v2851 = vsel %vm2840, %v2811, 0
        %v2854 = vsel %vm2840, %v2812, 0
        %v2857 = vsel %vm2840, %v2813, 0
        %v2860 = vsel %vm2840, %v2814, 0
        %v2863 = vsel %vm2840, %v2815, 0
        %2865 = vmatprep.subr.bf16.mxu0 0
        %2866 = vmatpush1.bf16.msra.mxu0 %v2834
        %2867 = vmatprep.subr.bf16.mxu0 0
        %2868 = vmatpush1.bf16.msra.mxu0 %v2835
        %2869 = vmatprep.subr.bf16.mxu0 0
        %2870 = vmatpush1.bf16.msra.mxu0 %v2836
        %2871 = vmatprep.subr.bf16.mxu0 0
        %2872 = vmatpush1.bf16.msra.mxu0 0
        %2873 = vmatprep.subr.bf16.mxu0 0
        %2874 = vmatpush1.bf16.msra.mxu0 0
        %2875 = vmatprep.subr.bf16.mxu0 0
        %2876 = vmatpush1.bf16.msra.mxu0 0
        %2877 = vmatprep.subr.bf16.mxu0 0
        %2878 = vmatpush1.bf16.msra.mxu0 0
        %2879 = vmatprep.subr.bf16.mxu0 0
        %2880 = vmatpush1.bf16.msra.mxu0 0
        %2881 = vmatprep.subr.bf16.mxu0 0
        %2882 = vmatpush1.bf16.msra.mxu0 0
        %2883 = vmatprep.subr.bf16.mxu0 0
        %2884 = vmatpush1.bf16.msra.mxu0 0
        %2885 = vmatprep.subr.bf16.mxu0 0
        %2886 = vmatpush1.bf16.msra.mxu0 0
        %2887 = vmatprep.subr.bf16.mxu0 0
        %2888 = vmatpush1.bf16.msra.mxu0 0
        %2889 = vmatprep.subr.bf16.mxu0 0
        %2890 = vmatpush1.bf16.msra.mxu0 0
        %2891 = vmatprep.subr.bf16.mxu0 0
        %2892 = vmatpush1.bf16.msra.mxu0 0
        %2893 = vmatprep.subr.bf16.mxu0 0
        %2894 = vmatpush1.bf16.msra.mxu0 0
        %2895 = vmatprep.subr.bf16.mxu0 0
        %2896 = vmatpush1.bf16.msra.mxu0 0
        %2897 = vmatprep.mubr.bf16.mxu0 0
        %2898 = vmatmul.mubr.bf16.gmra.mrb[0].mxu0 %v2842
        %v2899 = vpop.f32.mrb[0].mxu0
        %v2900 = vadd.f32 0.0, %v2899
        %v2901 = vpop.f32.mrb[0].mxu0
        %v2902 = vpop.f32.mrb[0].mxu0
        %v2903 = vadd.f32 0.0, %v2902
        %v2904 = vpop.f32.mrb[0].mxu0
        %2905 = vmatprep.mubr.bf16.mxu0 0
        %2906 = vmatmul.mubr.bf16.gmra.mrb[0].mxu0 %v2845
        %v2907 = vpop.f32.mrb[0].mxu0
        %v2908 = vadd.f32 0.0, %v2907
        %v2909 = vpop.f32.mrb[0].mxu0
        %v2910 = vpop.f32.mrb[0].mxu0
        %v2911 = vadd.f32 0.0, %v2910
        %v2912 = vpop.f32.mrb[0].mxu0
        %2913 = vmatprep.mubr.bf16.mxu0 0
        %2914 = vmatmul.mubr.bf16.gmra.mrb[0].mxu0 %v2848
        %v2915 = vpop.f32.mrb[0].mxu0
        %v2916 = vadd.f32 0.0, %v2915
        %v2917 = vpop.f32.mrb[0].mxu0
        %v2918 = vpop.f32.mrb[0].mxu0
        %v2919 = vadd.f32 0.0, %v2918
        %v2920 = vpop.f32.mrb[0].mxu0
        %2921 = vmatprep.mubr.bf16.mxu0 0
        %2922 = vmatmul.mubr.bf16.gmra.mrb[0].mxu0 %v2851
        %v2923 = vpop.f32.mrb[0].mxu0
        %v2924 = vadd.f32 0.0, %v2923
        %v2925 = vpop.f32.mrb[0].mxu0
        %v2926 = vpop.f32.mrb[0].mxu0
        %v2927 = vadd.f32 0.0, %v2926
        %v2928 = vpop.f32.mrb[0].mxu0
        %2929 = vmatprep.mubr.bf16.mxu0 0
        %2930 = vmatmul.mubr.bf16.gmra.mrb[0].mxu0 %v2854
        %v2931 = vpop.f32.mrb[0].mxu0
        %v2932 = vadd.f32 0.0, %v2931
        %v2933 = vpop.f32.mrb[0].mxu0
        %v2934 = vpop.f32.mrb[0].mxu0
        %v2935 = vadd.f32 0.0, %v2934
        %v2936 = vpop.f32.mrb[0].mxu0
        %2937 = vmatprep.mubr.bf16.mxu0 0
        %2938 = vmatmul.mubr.bf16.gmra.mrb[0].mxu0 %v2857
        %v2939 = vpop.f32.mrb[0].mxu0
        %v2940 = vadd.f32 0.0, %v2939
        %v2941 = vpop.f32.mrb[0].mxu0
        %v2942 = vpop.f32.mrb[0].mxu0
        %v2943 = vadd.f32 0.0, %v2942
        %v2944 = vpop.f32.mrb[0].mxu0
        %2945 = vmatprep.mubr.bf16.mxu0 0
        %2946 = vmatmul.mubr.bf16.gmra.mrb[0].mxu0 %v2860
        %v2947 = vpop.f32.mrb[0].mxu0
        %v2948 = vadd.f32 0.0, %v2947
        %v2949 = vpop.f32.mrb[0].mxu0
        %v2950 = vpop.f32.mrb[0].mxu0
        %v2951 = vadd.f32 0.0, %v2950
        %v2952 = vpop.f32.mrb[0].mxu0
        %2953 = vmatprep.mubr.bf16.mxu0 0
        %2954 = vmatmul.mubr.bf16.gmra.mrb[0].mxu0 %v2863
        %v2955 = vpop.f32.mrb[0].mxu0
        %v2956 = vadd.f32 0.0, %v2955
        %v2957 = vpop.f32.mrb[0].mxu0
        %v2958 = vpop.f32.mrb[0].mxu0
        %v2959 = vadd.f32 0.0, %v2958
        %v2960 = vpop.f32.mrb[0].mxu0
        %2961 = vdwg.mxu0
        %v2962 = vld [vmem:[%s5] sm:$0xff]
        %v2963 = vld [vmem:[%s5 + $0x8] sm:$0xff]
        %v2964 = vadd.f32 %v2900, %v2962
        %v2965 = vadd.f32 %v2903, %v2963
        %v2966 = vadd.f32 %v2908, %v2962
        %v2967 = vadd.f32 %v2911, %v2963
        %v2968 = vadd.f32 %v2916, %v2962
        %v2969 = vadd.f32 %v2919, %v2963
        %v2970 = vadd.f32 %v2924, %v2962
        %v2971 = vadd.f32 %v2927, %v2963
        %v2972 = vadd.f32 %v2932, %v2962
        %v2973 = vadd.f32 %v2935, %v2963
        %v2974 = vadd.f32 %v2940, %v2962
        %v2975 = vadd.f32 %v2943, %v2963
        %v2976 = vadd.f32 %v2948, %v2962
        %v2977 = vadd.f32 %v2951, %v2963
        %v2978 = vadd.f32 %v2956, %v2962
        %v2979 = vadd.f32 %v2959, %v2963
        %v2980 = vmax.f32 %v2964, 0.0
        %v2981 = vmax.f32 %v2965, 0.0
        %v2982 = vmax.f32 %v2966, 0.0
        %v2983 = vmax.f32 %v2967, 0.0
        %v2984 = vmax.f32 %v2968, 0.0
        %v2985 = vmax.f32 %v2969, 0.0
        %v2986 = vmax.f32 %v2970, 0.0
        %v2987 = vmax.f32 %v2971, 0.0
        %v2988 = vmax.f32 %v2972, 0.0
        %v2989 = vmax.f32 %v2973, 0.0
        %v2990 = vmax.f32 %v2974, 0.0
        %v2991 = vmax.f32 %v2975, 0.0
        %v2992 = vmax.f32 %v2976, 0.0
        %v2993 = vmax.f32 %v2977, 0.0
        %v2994 = vmax.f32 %v2978, 0.0
        %v2995 = vmax.f32 %v2979, 0.0
        %v3012 = vcombine.high %v2980, %v2980
        %v3013 = vcombine.high %v2981, %v2981
        %v3014 = vcombine.high %v2982, %v2982
        %v3015 = vcombine.high %v2983, %v2983
        %v3016 = vcombine.high %v2984, %v2984
        %v3017 = vcombine.high %v2985, %v2985
        %v3018 = vcombine.high %v2986, %v2986
        %v3019 = vcombine.high %v2987, %v2987
        %v3020 = vcombine.high %v2988, %v2988
        %v3021 = vcombine.high %v2989, %v2989
        %v3022 = vcombine.high %v2990, %v2990
        %v3023 = vcombine.high %v2991, %v2991
        %v3024 = vcombine.high %v2992, %v2992
        %v3025 = vcombine.high %v2993, %v2993
        %v3026 = vcombine.high %v2994, %v2994
        %v3027 = vcombine.high %v2995, %v2995
        %vm3044 = vcmask 519168
        %v3045 = vsel %vm3044, %v2980, -inf
        %v3046 = vrot.slane %v3045, 4
        %v3047 = vmax.f32 %v3045, %v3046
        %v3048 = vrot.slane %v3047, 2
        %v3049 = vmax.f32 %v3047, %v3048
        %v3050 = vrot.slane %v3049, 1
        %v3051 = vmax.f32 %v3049, %v3050
        %v3052 = vsel %vm3044, %v3012, -inf
        %v3053 = vrot.slane %v3052, 4
        %v3054 = vmax.f32 %v3052, %v3053
        %v3055 = vrot.slane %v3054, 2
        %v3056 = vmax.f32 %v3054, %v3055
        %v3057 = vrot.slane %v3056, 1
        %v3058 = vmax.f32 %v3056, %v3057
        %v3059 = vsel %vm3044, %v2981, -inf
        %v3060 = vrot.slane %v3059, 4
        %v3061 = vmax.f32 %v3059, %v3060
        %v3062 = vrot.slane %v3061, 2
        %v3063 = vmax.f32 %v3061, %v3062
        %v3064 = vrot.slane %v3063, 1
        %v3065 = vmax.f32 %v3063, %v3064
        %v3066 = vsel %vm3044, %v3013, -inf
        %v3067 = vrot.slane %v3066, 4
        %v3068 = vmax.f32 %v3066, %v3067
        %v3069 = vrot.slane %v3068, 2
        %v3070 = vmax.f32 %v3068, %v3069
        %v3071 = vrot.slane %v3070, 1
        %v3072 = vmax.f32 %v3070, %v3071
        %v3073 = vsel %vm3044, %v2982, -inf
        %v3074 = vrot.slane %v3073, 4
        %v3075 = vmax.f32 %v3073, %v3074
        %v3076 = vrot.slane %v3075, 2
        %v3077 = vmax.f32 %v3075, %v3076
        %v3078 = vrot.slane %v3077, 1
        %v3079 = vmax.f32 %v3077, %v3078
        %v3080 = vsel %vm3044, %v3014, -inf
        %v3081 = vrot.slane %v3080, 4
        %v3082 = vmax.f32 %v3080, %v3081
        %v3083 = vrot.slane %v3082, 2
        %v3084 = vmax.f32 %v3082, %v3083
        %v3085 = vrot.slane %v3084, 1
        %v3086 = vmax.f32 %v3084, %v3085
        %v3087 = vsel %vm3044, %v2983, -inf
        %v3088 = vrot.slane %v3087, 4
        %v3089 = vmax.f32 %v3087, %v3088
        %v3090 = vrot.slane %v3089, 2
        %v3091 = vmax.f32 %v3089, %v3090
        %v3092 = vrot.slane %v3091, 1
        %v3093 = vmax.f32 %v3091, %v3092
        %v3094 = vsel %vm3044, %v3015, -inf
        %v3095 = vrot.slane %v3094, 4
        %v3096 = vmax.f32 %v3094, %v3095
        %v3097 = vrot.slane %v3096, 2
        %v3098 = vmax.f32 %v3096, %v3097
        %v3099 = vrot.slane %v3098, 1
        %v3100 = vmax.f32 %v3098, %v3099
        %v3101 = vsel %vm3044, %v2984, -inf
        %v3102 = vrot.slane %v3101, 4
        %v3103 = vmax.f32 %v3101, %v3102
        %v3104 = vrot.slane %v3103, 2
        %v3105 = vmax.f32 %v3103, %v3104
        %v3106 = vrot.slane %v3105, 1
        %v3107 = vmax.f32 %v3105, %v3106
        %v3108 = vsel %vm3044, %v3016, -inf
        %v3109 = vrot.slane %v3108, 4
        %v3110 = vmax.f32 %v3108, %v3109
        %v3111 = vrot.slane %v3110, 2
        %v3112 = vmax.f32 %v3110, %v3111
        %v3113 = vrot.slane %v3112, 1
        %v3114 = vmax.f32 %v3112, %v3113
        %v3115 = vsel %vm3044, %v2985, -inf
        %v3116 = vrot.slane %v3115, 4
        %v3117 = vmax.f32 %v3115, %v3116
        %v3118 = vrot.slane %v3117, 2
        %v3119 = vmax.f32 %v3117, %v3118
        %v3120 = vrot.slane %v3119, 1
        %v3121 = vmax.f32 %v3119, %v3120
        %v3122 = vsel %vm3044, %v3017, -inf
        %v3123 = vrot.slane %v3122, 4
        %v3124 = vmax.f32 %v3122, %v3123
        %v3125 = vrot.slane %v3124, 2
        %v3126 = vmax.f32 %v3124, %v3125
        %v3127 = vrot.slane %v3126, 1
        %v3128 = vmax.f32 %v3126, %v3127
        %v3129 = vsel %vm3044, %v2986, -inf
        %v3130 = vrot.slane %v3129, 4
        %v3131 = vmax.f32 %v3129, %v3130
        %v3132 = vrot.slane %v3131, 2
        %v3133 = vmax.f32 %v3131, %v3132
        %v3134 = vrot.slane %v3133, 1
        %v3135 = vmax.f32 %v3133, %v3134
        %v3136 = vsel %vm3044, %v3018, -inf
        %v3137 = vrot.slane %v3136, 4
        %v3138 = vmax.f32 %v3136, %v3137
        %v3139 = vrot.slane %v3138, 2
        %v3140 = vmax.f32 %v3138, %v3139
        %v3141 = vrot.slane %v3140, 1
        %v3142 = vmax.f32 %v3140, %v3141
        %v3143 = vsel %vm3044, %v2987, -inf
        %v3144 = vrot.slane %v3143, 4
        %v3145 = vmax.f32 %v3143, %v3144
        %v3146 = vrot.slane %v3145, 2
        %v3147 = vmax.f32 %v3145, %v3146
        %v3148 = vrot.slane %v3147, 1
        %v3149 = vmax.f32 %v3147, %v3148
        %v3150 = vsel %vm3044, %v3019, -inf
        %v3151 = vrot.slane %v3150, 4
        %v3152 = vmax.f32 %v3150, %v3151
        %v3153 = vrot.slane %v3152, 2
        %v3154 = vmax.f32 %v3152, %v3153
        %v3155 = vrot.slane %v3154, 1
        %v3156 = vmax.f32 %v3154, %v3155
        %v3157 = vsel %vm3044, %v2988, -inf
        %v3158 = vrot.slane %v3157, 4
        %v3159 = vmax.f32 %v3157, %v3158
        %v3160 = vrot.slane %v3159, 2
        %v3161 = vmax.f32 %v3159, %v3160
        %v3162 = vrot.slane %v3161, 1
        %v3163 = vmax.f32 %v3161, %v3162
        %v3164 = vsel %vm3044, %v3020, -inf
        %v3165 = vrot.slane %v3164, 4
        %v3166 = vmax.f32 %v3164, %v3165
        %v3167 = vrot.slane %v3166, 2
        %v3168 = vmax.f32 %v3166, %v3167
        %v3169 = vrot.slane %v3168, 1
        %v3170 = vmax.f32 %v3168, %v3169
        %v3171 = vsel %vm3044, %v2989, -inf
        %v3172 = vrot.slane %v3171, 4
        %v3173 = vmax.f32 %v3171, %v3172
        %v3174 = vrot.slane %v3173, 2
        %v3175 = vmax.f32 %v3173, %v3174
        %v3176 = vrot.slane %v3175, 1
        %v3177 = vmax.f32 %v3175, %v3176
        %v3178 = vsel %vm3044, %v3021, -inf
        %v3179 = vrot.slane %v3178, 4
        %v3180 = vmax.f32 %v3178, %v3179
        %v3181 = vrot.slane %v3180, 2
        %v3182 = vmax.f32 %v3180, %v3181
        %v3183 = vrot.slane %v3182, 1
        %v3184 = vmax.f32 %v3182, %v3183
        %v3185 = vsel %vm3044, %v2990, -inf
        %v3186 = vrot.slane %v3185, 4
        %v3187 = vmax.f32 %v3185, %v3186
        %v3188 = vrot.slane %v3187, 2
        %v3189 = vmax.f32 %v3187, %v3188
        %v3190 = vrot.slane %v3189, 1
        %v3191 = vmax.f32 %v3189, %v3190
        %v3192 = vsel %vm3044, %v3022, -inf
        %v3193 = vrot.slane %v3192, 4
        %v3194 = vmax.f32 %v3192, %v3193
        %v3195 = vrot.slane %v3194, 2
        %v3196 = vmax.f32 %v3194, %v3195
        %v3197 = vrot.slane %v3196, 1
        %v3198 = vmax.f32 %v3196, %v3197
        %v3199 = vsel %vm3044, %v2991, -inf
        %v3200 = vrot.slane %v3199, 4
        %v3201 = vmax.f32 %v3199, %v3200
        %v3202 = vrot.slane %v3201, 2
        %v3203 = vmax.f32 %v3201, %v3202
        %v3204 = vrot.slane %v3203, 1
        %v3205 = vmax.f32 %v3203, %v3204
        %v3206 = vsel %vm3044, %v3023, -inf
        %v3207 = vrot.slane %v3206, 4
        %v3208 = vmax.f32 %v3206, %v3207
        %v3209 = vrot.slane %v3208, 2
        %v3210 = vmax.f32 %v3208, %v3209
        %v3211 = vrot.slane %v3210, 1
        %v3212 = vmax.f32 %v3210, %v3211
        %v3213 = vsel %vm3044, %v2992, -inf
        %v3214 = vrot.slane %v3213, 4
        %v3215 = vmax.f32 %v3213, %v3214
        %v3216 = vrot.slane %v3215, 2
        %v3217 = vmax.f32 %v3215, %v3216
        %v3218 = vrot.slane %v3217, 1
        %v3219 = vmax.f32 %v3217, %v3218
        %v3220 = vsel %vm3044, %v3024, -inf
        %v3221 = vrot.slane %v3220, 4
        %v3222 = vmax.f32 %v3220, %v3221
        %v3223 = vrot.slane %v3222, 2
        %v3224 = vmax.f32 %v3222, %v3223
        %v3225 = vrot.slane %v3224, 1
        %v3226 = vmax.f32 %v3224, %v3225
        %v3227 = vsel %vm3044, %v2993, -inf
        %v3228 = vrot.slane %v3227, 4
        %v3229 = vmax.f32 %v3227, %v3228
        %v3230 = vrot.slane %v3229, 2
        %v3231 = vmax.f32 %v3229, %v3230
        %v3232 = vrot.slane %v3231, 1
        %v3233 = vmax.f32 %v3231, %v3232
        %v3234 = vsel %vm3044, %v3025, -inf
        %v3235 = vrot.slane %v3234, 4
        %v3236 = vmax.f32 %v3234, %v3235
        %v3237 = vrot.slane %v3236, 2
        %v3238 = vmax.f32 %v3236, %v3237
        %v3239 = vrot.slane %v3238, 1
        %v3240 = vmax.f32 %v3238, %v3239
        %v3241 = vsel %vm3044, %v2994, -inf
        %v3242 = vrot.slane %v3241, 4
        %v3243 = vmax.f32 %v3241, %v3242
        %v3244 = vrot.slane %v3243, 2
        %v3245 = vmax.f32 %v3243, %v3244
        %v3246 = vrot.slane %v3245, 1
        %v3247 = vmax.f32 %v3245, %v3246
        %v3248 = vsel %vm3044, %v3026, -inf
        %v3249 = vrot.slane %v3248, 4
        %v3250 = vmax.f32 %v3248, %v3249
        %v3251 = vrot.slane %v3250, 2
        %v3252 = vmax.f32 %v3250, %v3251
        %v3253 = vrot.slane %v3252, 1
        %v3254 = vmax.f32 %v3252, %v3253
        %v3255 = vsel %vm3044, %v2995, -inf
        %v3256 = vrot.slane %v3255, 4
        %v3257 = vmax.f32 %v3255, %v3256
        %v3258 = vrot.slane %v3257, 2
        %v3259 = vmax.f32 %v3257, %v3258
        %v3260 = vrot.slane %v3259, 1
        %v3261 = vmax.f32 %v3259, %v3260
        %v3262 = vsel %vm3044, %v3027, -inf
        %v3263 = vrot.slane %v3262, 4
        %v3264 = vmax.f32 %v3262, %v3263
        %v3265 = vrot.slane %v3264, 2
        %v3266 = vmax.f32 %v3264, %v3265
        %v3267 = vrot.slane %v3266, 1
        %v3268 = vmax.f32 %v3266, %v3267
        %v3269 = vld [vmem:[%s6] sm:$0xf]
        %vm3302 = vcmask 1041409
        %v3303 = vsel %vm3302, %v3058, %v3051
        %vm3304 = vcmask 1042434
        %v3305 = vsel %vm3304, %v3065, %v3303
        %vm3306 = vcmask 1043459
        %v3307 = vsel %vm3306, %v3072, %v3305
        %v3308 = vsel %vm3302, %v3086, %v3079
        %v3309 = vsel %vm3304, %v3093, %v3308
        %v3310 = vsel %vm3306, %v3100, %v3309
        %v3311 = vsel %vm3302, %v3114, %v3107
        %v3312 = vsel %vm3304, %v3121, %v3311
        %v3313 = vsel %vm3306, %v3128, %v3312
        %v3314 = vsel %vm3302, %v3142, %v3135
        %v3315 = vsel %vm3304, %v3149, %v3314
        %v3316 = vsel %vm3306, %v3156, %v3315
        %v3317 = vsel %vm3302, %v3170, %v3163
        %v3318 = vsel %vm3304, %v3177, %v3317
        %v3319 = vsel %vm3306, %v3184, %v3318
        %v3320 = vsel %vm3302, %v3198, %v3191
        %v3321 = vsel %vm3304, %v3205, %v3320
        %v3322 = vsel %vm3306, %v3212, %v3321
        %v3323 = vsel %vm3302, %v3226, %v3219
        %v3324 = vsel %vm3304, %v3233, %v3323
        %v3325 = vsel %vm3306, %v3240, %v3324
        %v3326 = vsel %vm3302, %v3254, %v3247
        %v3327 = vsel %vm3304, %v3261, %v3326
        %v3328 = vsel %vm3306, %v3268, %v3327
        %v3337 = vmul.f32 %v3269, %v3307
        %v3338 = vmul.f32 %v3269, %v3310
        %v3339 = vmul.f32 %v3269, %v3313
        %v3340 = vmul.f32 %v3269, %v3316
        %v3341 = vmul.f32 %v3269, %v3319
        %v3342 = vmul.f32 %v3269, %v3322
        %v3343 = vmul.f32 %v3269, %v3325
        %v3344 = vmul.f32 %v3269, %v3328
        %v3345 = vsel %vm3044, %v3337, 0.0
        %v3346 = vrot.slane %v3345, 4
        %v3347 = vadd.f32 %v3345, %v3346
        %v3348 = vrot.slane %v3347, 2
        %v3349 = vadd.f32 %v3347, %v3348
        %v3350 = vrot.slane %v3349, 1
        %v3351 = vadd.f32 %v3349, %v3350
        %v3352 = vsel %vm3044, %v3338, 0.0
        %v3353 = vrot.slane %v3352, 4
        %v3354 = vadd.f32 %v3352, %v3353
        %v3355 = vrot.slane %v3354, 2
        %v3356 = vadd.f32 %v3354, %v3355
        %v3357 = vrot.slane %v3356, 1
        %v3358 = vadd.f32 %v3356, %v3357
        %v3359 = vsel %vm3044, %v3339, 0.0
        %v3360 = vrot.slane %v3359, 4
        %v3361 = vadd.f32 %v3359, %v3360
        %v3362 = vrot.slane %v3361, 2
        %v3363 = vadd.f32 %v3361, %v3362
        %v3364 = vrot.slane %v3363, 1
        %v3365 = vadd.f32 %v3363, %v3364
        %v3366 = vsel %vm3044, %v3340, 0.0
        %v3367 = vrot.slane %v3366, 4
        %v3368 = vadd.f32 %v3366, %v3367
        %v3369 = vrot.slane %v3368, 2
        %v3370 = vadd.f32 %v3368, %v3369
        %v3371 = vrot.slane %v3370, 1
        %v3372 = vadd.f32 %v3370, %v3371
        %v3373 = vsel %vm3044, %v3341, 0.0
        %v3374 = vrot.slane %v3373, 4
        %v3375 = vadd.f32 %v3373, %v3374
        %v3376 = vrot.slane %v3375, 2
        %v3377 = vadd.f32 %v3375, %v3376
        %v3378 = vrot.slane %v3377, 1
        %v3379 = vadd.f32 %v3377, %v3378
        %v3380 = vsel %vm3044, %v3342, 0.0
        %v3381 = vrot.slane %v3380, 4
        %v3382 = vadd.f32 %v3380, %v3381
        %v3383 = vrot.slane %v3382, 2
        %v3384 = vadd.f32 %v3382, %v3383
        %v3385 = vrot.slane %v3384, 1
        %v3386 = vadd.f32 %v3384, %v3385
        %v3387 = vsel %vm3044, %v3343, 0.0
        %v3388 = vrot.slane %v3387, 4
        %v3389 = vadd.f32 %v3387, %v3388
        %v3390 = vrot.slane %v3389, 2
        %v3391 = vadd.f32 %v3389, %v3390
        %v3392 = vrot.slane %v3391, 1
        %v3393 = vadd.f32 %v3391, %v3392
        %v3394 = vsel %vm3044, %v3344, 0.0
        %v3395 = vrot.slane %v3394, 4
        %v3396 = vadd.f32 %v3394, %v3395
        %v3397 = vrot.slane %v3396, 2
        %v3398 = vadd.f32 %v3396, %v3397
        %v3399 = vrot.slane %v3398, 1
        %v3400 = vadd.f32 %v3398, %v3399
        %v3401 = vld [vmem:[%s7] sm:$0xff]
        %v3402 = vld [vmem:[%s7 + $0x8] sm:$0xff]
        %v3403 = vld [vmem:[%s7 + $0x10] sm:$0xff]
        %v3404 = vld [vmem:[%s7 + $0x18] sm:$0xff]
        %v3405 = vld [vmem:[%s7 + $0x20] sm:$0xff]
        %v3406 = vld [vmem:[%s7 + $0x28] sm:$0xff]
        %v3407 = vld [vmem:[%s7 + $0x30] sm:$0xff]
        %v3408 = vld [vmem:[%s7 + $0x38] sm:$0xff]
        %v3409 = vld [vmem:[%s8] sm:$0x1]
        %v3411 = vlaneseq
        %v3412 = vshrl.u32 %v3411, 7
        %v3413 = vsub.s32 0, %v3412
        %v3414 = vrot.slane %v3409, %v3413
        %v3424 = vsel %vm3302, %v3358, %v3351
        %v3425 = vsel %vm3304, %v3365, %v3424
        %v3426 = vsel %vm3306, %v3372, %v3425
        %vm3427 = vcmask 1044484
        %v3428 = vsel %vm3427, %v3379, %v3426
        %vm3429 = vcmask 1045509
        %v3430 = vsel %vm3429, %v3386, %v3428
        %vm3431 = vcmask 1046534
        %v3432 = vsel %vm3431, %v3393, %v3430
        %vm3433 = vcmask 1047559
        %v3434 = vsel %vm3433, %v3400, %v3432
        %vm3435 = vcmask 523264
        %v3436 = vsel %vm3435, %v3434, 0
        %3438 = vmatprep.subr.mxu0 0.0
        %v3439 = vand.u32 %v3401, 4294901760
        %3440 = vmatpush1.msra.mxu0 %v3439
        %3441 = vmatprep.subr.mxu0 0.0
        %v3442 = vand.u32 %v3402, 4294901760
        %3443 = vmatpush1.msra.mxu0 %v3442
        %3444 = vmatprep.subr.mxu0 0.0
        %v3445 = vand.u32 %v3403, 4294901760
        %3446 = vmatpush1.msra.mxu0 %v3445
        %3447 = vmatprep.subr.mxu0 0.0
        %v3448 = vand.u32 %v3404, 4294901760
        %3449 = vmatpush1.msra.mxu0 %v3448
        %3450 = vmatprep.subr.mxu0 0.0
        %v3451 = vand.u32 %v3405, 4294901760
        %3452 = vmatpush1.msra.mxu0 %v3451
        %3453 = vmatprep.subr.mxu0 0.0
        %v3454 = vand.u32 %v3406, 4294901760
        %3455 = vmatpush1.msra.mxu0 %v3454
        %3456 = vmatprep.subr.mxu0 0.0
        %v3457 = vand.u32 %v3407, 4294901760
        %3458 = vmatpush1.msra.mxu0 %v3457
        %3459 = vmatprep.subr.mxu0 0.0
        %v3460 = vand.u32 %v3408, 4294901760
        %3461 = vmatpush1.msra.mxu0 %v3460
        %3462 = vmatprep.subr.mxu0 0.0
        %3463 = vmatpush1.msra.mxu0 0.0
        %3464 = vmatprep.subr.mxu0 0.0
        %3465 = vmatpush1.msra.mxu0 0.0
        %3466 = vmatprep.subr.mxu0 0.0
        %3467 = vmatpush1.msra.mxu0 0.0
        %3468 = vmatprep.subr.mxu0 0.0
        %3469 = vmatpush1.msra.mxu0 0.0
        %3470 = vmatprep.subr.mxu0 0.0
        %3471 = vmatpush1.msra.mxu0 0.0
        %3472 = vmatprep.subr.mxu0 0.0
        %3473 = vmatpush1.msra.mxu0 0.0
        %3474 = vmatprep.subr.mxu0 0.0
        %3475 = vmatpush1.msra.mxu0 0.0
        %3476 = vmatprep.subr.mxu0 0.0
        %3477 = vmatpush1.msra.mxu0 0.0
        %3478 = vmatprep.subr.mxu0 0.0
        %3479 = vmatpush1.msra.mxu0 0.0
        %3480 = vmatprep.subr.mxu0 0.0
        %3481 = vmatpush1.msra.mxu0 0.0
        %3482 = vmatprep.subr.mxu0 0.0
        %3483 = vmatpush1.msra.mxu0 0.0
        %3484 = vmatprep.subr.mxu0 0.0
        %3485 = vmatpush1.msra.mxu0 0.0
        %3486 = vmatprep.subr.mxu0 0.0
        %3487 = vmatpush1.msra.mxu0 0.0
        %3488 = vmatprep.subr.mxu0 0.0
        %3489 = vmatpush1.msra.mxu0 0.0
        %3490 = vmatprep.subr.mxu0 0.0
        %3491 = vmatpush1.msra.mxu0 0.0
        %3492 = vmatprep.subr.mxu0 0.0
        %3493 = vmatpush1.msra.mxu0 0.0
        %3494 = vmatprep.subr.mxu0 0.0
        %3495 = vmatpush1.msra.mxu0 0.0
        %3496 = vmatprep.subr.mxu0 0.0
        %3497 = vmatpush1.msra.mxu0 0.0
        %3498 = vmatprep.subr.mxu0 0.0
        %3499 = vmatpush1.msra.mxu0 0.0
        %3500 = vmatprep.subr.mxu0 0.0
        %3501 = vmatpush1.msra.mxu0 0.0
        %3502 = vmatprep.subr.mxu0 0.0
        %3503 = vmatpush1.msra.mxu0 0.0
        %3504 = vmatprep.subr.mxu0 0.0
        %3505 = vmatpush1.msra.mxu0 0.0
        %3506 = vmatprep.subr.mxu0 0.0
        %3507 = vmatpush1.msra.mxu0 0.0
        %3508 = vmatprep.subr.mxu0 0.0
        %3509 = vmatpush1.msra.mxu0 0.0
        %3510 = vmatprep.mubr.f32.mxu0 0.0
        %v3511 = vand.u32 %v3436, 4294901760
        %v3512 = vsub.f32 %v3436, %v3511
        %v3513 = vand.u32 %v3512, 4294901760
        %v3514 = vsub.f32 %v3512, %v3513
        %v3515 = vand.u32 %v3514, 4294901760
        %3516 = vmatmul.mubr.f32.gmra.mrb[0].mxu0 %v3515
        %v3517 = vpop.f32.mrb[0].mxu0
        %v3518 = vadd.f32 %v3414, %v3517
        %v3519 = vpop.f32.mrb[0].mxu0
        %3520 = vdwg.mxu0
        %3521 = vmatprep.subr.mxu0 0.0
        %v3522 = vand.u32 %v3401, 4294901760
        %v3523 = vsub.f32 %v3401, %v3522
        %v3524 = vand.u32 %v3523, 4294901760
        %v3525 = vsub.f32 %v3523, %v3524
        %v3526 = vand.u32 %v3525, 4294901760
        %3527 = vmatpush1.msra.mxu0 %v3526
        %3528 = vmatprep.subr.mxu0 0.0
        %v3529 = vand.u32 %v3402, 4294901760
        %v3530 = vsub.f32 %v3402, %v3529
        %v3531 = vand.u32 %v3530, 4294901760
        %v3532 = vsub.f32 %v3530, %v3531
        %v3533 = vand.u32 %v3532, 4294901760
        %3534 = vmatpush1.msra.mxu0 %v3533
        %3535 = vmatprep.subr.mxu0 0.0
        %v3536 = vand.u32 %v3403, 4294901760
        %v3537 = vsub.f32 %v3403, %v3536
        %v3538 = vand.u32 %v3537, 4294901760
        %v3539 = vsub.f32 %v3537, %v3538
        %v3540 = vand.u32 %v3539, 4294901760
        %3541 = vmatpush1.msra.mxu0 %v3540
        %3542 = vmatprep.subr.mxu0 0.0
        %v3543 = vand.u32 %v3404, 4294901760
        %v3544 = vsub.f32 %v3404, %v3543
        %v3545 = vand.u32 %v3544, 4294901760
        %v3546 = vsub.f32 %v3544, %v3545
        %v3547 = vand.u32 %v3546, 4294901760
        %3548 = vmatpush1.msra.mxu0 %v3547
        %3549 = vmatprep.subr.mxu0 0.0
        %v3550 = vand.u32 %v3405, 4294901760
        %v3551 = vsub.f32 %v3405, %v3550
        %v3552 = vand.u32 %v3551, 4294901760
        %v3553 = vsub.f32 %v3551, %v3552
        %v3554 = vand.u32 %v3553, 4294901760
        %3555 = vmatpush1.msra.mxu0 %v3554
        %3556 = vmatprep.subr.mxu0 0.0
        %v3557 = vand.u32 %v3406, 4294901760
        %v3558 = vsub.f32 %v3406, %v3557
        %v3559 = vand.u32 %v3558, 4294901760
        %v3560 = vsub.f32 %v3558, %v3559
        %v3561 = vand.u32 %v3560, 4294901760
        %3562 = vmatpush1.msra.mxu0 %v3561
        %3563 = vmatprep.subr.mxu0 0.0
        %v3564 = vand.u32 %v3407, 4294901760
        %v3565 = vsub.f32 %v3407, %v3564
        %v3566 = vand.u32 %v3565, 4294901760
        %v3567 = vsub.f32 %v3565, %v3566
        %v3568 = vand.u32 %v3567, 4294901760
        %3569 = vmatpush1.msra.mxu0 %v3568
        %3570 = vmatprep.subr.mxu0 0.0
        %v3571 = vand.u32 %v3408, 4294901760
        %v3572 = vsub.f32 %v3408, %v3571
        %v3573 = vand.u32 %v3572, 4294901760
        %v3574 = vsub.f32 %v3572, %v3573
        %v3575 = vand.u32 %v3574, 4294901760
        %3576 = vmatpush1.msra.mxu0 %v3575
        %3577 = vmatprep.subr.mxu0 0.0
        %3578 = vmatpush1.msra.mxu0 0.0
        %3579 = vmatprep.subr.mxu0 0.0
        %3580 = vmatpush1.msra.mxu0 0.0
        %3581 = vmatprep.subr.mxu0 0.0
        %3582 = vmatpush1.msra.mxu0 0.0
        %3583 = vmatprep.subr.mxu0 0.0
        %3584 = vmatpush1.msra.mxu0 0.0
        %3585 = vmatprep.subr.mxu0 0.0
        %3586 = vmatpush1.msra.mxu0 0.0
        %3587 = vmatprep.subr.mxu0 0.0
        %3588 = vmatpush1.msra.mxu0 0.0
        %3589 = vmatprep.subr.mxu0 0.0
        %3590 = vmatpush1.msra.mxu0 0.0
        %3591 = vmatprep.subr.mxu0 0.0
        %3592 = vmatpush1.msra.mxu0 0.0
        %3593 = vmatprep.subr.mxu0 0.0
        %3594 = vmatpush1.msra.mxu0 0.0
        %3595 = vmatprep.subr.mxu0 0.0
        %3596 = vmatpush1.msra.mxu0 0.0
        %3597 = vmatprep.subr.mxu0 0.0
        %3598 = vmatpush1.msra.mxu0 0.0
        %3599 = vmatprep.subr.mxu0 0.0
        %3600 = vmatpush1.msra.mxu0 0.0
        %3601 = vmatprep.subr.mxu0 0.0
        %3602 = vmatpush1.msra.mxu0 0.0
        %3603 = vmatprep.subr.mxu0 0.0
        %3604 = vmatpush1.msra.mxu0 0.0
        %3605 = vmatprep.subr.mxu0 0.0
        %3606 = vmatpush1.msra.mxu0 0.0
        %3607 = vmatprep.subr.mxu0 0.0
        %3608 = vmatpush1.msra.mxu0 0.0
        %3609 = vmatprep.subr.mxu0 0.0
        %3610 = vmatpush1.msra.mxu0 0.0
        %3611 = vmatprep.subr.mxu0 0.0
        %3612 = vmatpush1.msra.mxu0 0.0
        %3613 = vmatprep.subr.mxu0 0.0
        %3614 = vmatpush1.msra.mxu0 0.0
        %3615 = vmatprep.subr.mxu0 0.0
        %3616 = vmatpush1.msra.mxu0 0.0
        %3617 = vmatprep.subr.mxu0 0.0
        %3618 = vmatpush1.msra.mxu0 0.0
        %3619 = vmatprep.subr.mxu0 0.0
        %3620 = vmatpush1.msra.mxu0 0.0
        %3621 = vmatprep.subr.mxu0 0.0
        %3622 = vmatpush1.msra.mxu0 0.0
        %3623 = vmatprep.subr.mxu0 0.0
        %3624 = vmatpush1.msra.mxu0 0.0
        %3625 = vmatprep.mubr.f32.mxu0 0.0
        %v3626 = vand.u32 %v3436, 4294901760
        %3627 = vmatmul.mubr.f32.gmra.mrb[0].mxu0 %v3626
        %v3628 = vpop.f32.mrb[0].mxu0
        %v3629 = vadd.f32 %v3518, %v3628
        %v3630 = vpop.f32.mrb[0].mxu0
        %3631 = vdwg.mxu0
        %3632 = vmatprep.subr.mxu0 0.0
        %v3633 = vand.u32 %v3401, 4294901760
        %v3634 = vsub.f32 %v3401, %v3633
        %3635 = vmatpush1.msra.mxu0 %v3634
        %3636 = vmatprep.subr.mxu0 0.0
        %v3637 = vand.u32 %v3402, 4294901760
        %v3638 = vsub.f32 %v3402, %v3637
        %3639 = vmatpush1.msra.mxu0 %v3638
        %3640 = vmatprep.subr.mxu0 0.0
        %v3641 = vand.u32 %v3403, 4294901760
        %v3642 = vsub.f32 %v3403, %v3641
        %3643 = vmatpush1.msra.mxu0 %v3642
        %3644 = vmatprep.subr.mxu0 0.0
        %v3645 = vand.u32 %v3404, 4294901760
        %v3646 = vsub.f32 %v3404, %v3645
        %3647 = vmatpush1.msra.mxu0 %v3646
        %3648 = vmatprep.subr.mxu0 0.0
        %v3649 = vand.u32 %v3405, 4294901760
        %v3650 = vsub.f32 %v3405, %v3649
        %3651 = vmatpush1.msra.mxu0 %v3650
        %3652 = vmatprep.subr.mxu0 0.0
        %v3653 = vand.u32 %v3406, 4294901760
        %v3654 = vsub.f32 %v3406, %v3653
        %3655 = vmatpush1.msra.mxu0 %v3654
        %3656 = vmatprep.subr.mxu0 0.0
        %v3657 = vand.u32 %v3407, 4294901760
        %v3658 = vsub.f32 %v3407, %v3657
        %3659 = vmatpush1.msra.mxu0 %v3658
        %3660 = vmatprep.subr.mxu0 0.0
        %v3661 = vand.u32 %v3408, 4294901760
        %v3662 = vsub.f32 %v3408, %v3661
        %3663 = vmatpush1.msra.mxu0 %v3662
        %3664 = vmatprep.subr.mxu0 0.0
        %3665 = vmatpush1.msra.mxu0 0.0
        %3666 = vmatprep.subr.mxu0 0.0
        %3667 = vmatpush1.msra.mxu0 0.0
        %3668 = vmatprep.subr.mxu0 0.0
        %3669 = vmatpush1.msra.mxu0 0.0
        %3670 = vmatprep.subr.mxu0 0.0
        %3671 = vmatpush1.msra.mxu0 0.0
        %3672 = vmatprep.subr.mxu0 0.0
        %3673 = vmatpush1.msra.mxu0 0.0
        %3674 = vmatprep.subr.mxu0 0.0
        %3675 = vmatpush1.msra.mxu0 0.0
        %3676 = vmatprep.subr.mxu0 0.0
        %3677 = vmatpush1.msra.mxu0 0.0
        %3678 = vmatprep.subr.mxu0 0.0
        %3679 = vmatpush1.msra.mxu0 0.0
        %3680 = vmatprep.subr.mxu0 0.0
        %3681 = vmatpush1.msra.mxu0 0.0
        %3682 = vmatprep.subr.mxu0 0.0
        %3683 = vmatpush1.msra.mxu0 0.0
        %3684 = vmatprep.subr.mxu0 0.0
        %3685 = vmatpush1.msra.mxu0 0.0
        %3686 = vmatprep.subr.mxu0 0.0
        %3687 = vmatpush1.msra.mxu0 0.0
        %3688 = vmatprep.subr.mxu0 0.0
        %3689 = vmatpush1.msra.mxu0 0.0
        %3690 = vmatprep.subr.mxu0 0.0
        %3691 = vmatpush1.msra.mxu0 0.0
        %3692 = vmatprep.subr.mxu0 0.0
        %3693 = vmatpush1.msra.mxu0 0.0
        %3694 = vmatprep.subr.mxu0 0.0
        %3695 = vmatpush1.msra.mxu0 0.0
        %3696 = vmatprep.subr.mxu0 0.0
        %3697 = vmatpush1.msra.mxu0 0.0
        %3698 = vmatprep.subr.mxu0 0.0
        %3699 = vmatpush1.msra.mxu0 0.0
        %3700 = vmatprep.subr.mxu0 0.0
        %3701 = vmatpush1.msra.mxu0 0.0
        %3702 = vmatprep.subr.mxu0 0.0
        %3703 = vmatpush1.msra.mxu0 0.0
        %3704 = vmatprep.subr.mxu0 0.0
        %3705 = vmatpush1.msra.mxu0 0.0
        %3706 = vmatprep.subr.mxu0 0.0
        %3707 = vmatpush1.msra.mxu0 0.0
        %3708 = vmatprep.subr.mxu0 0.0
        %3709 = vmatpush1.msra.mxu0 0.0
        %3710 = vmatprep.subr.mxu0 0.0
        %3711 = vmatpush1.msra.mxu0 0.0
        %3712 = vmatprep.mubr.f32.mxu0 0.0
        %v3713 = vand.u32 %v3436, 4294901760
        %v3714 = vsub.f32 %v3436, %v3713
        %3715 = vmatmul.mubr.f32.gmra.mrb[0].mxu0 %v3714
        %v3716 = vpop.f32.mrb[0].mxu0
        %v3717 = vadd.f32 %v3629, %v3716
        %v3718 = vpop.f32.mrb[0].mxu0
        %3719 = vdwg.mxu0
        %3720 = vmatprep.subr.mxu0 0.0
        %v3721 = vand.u32 %v3401, 4294901760
        %3722 = vmatpush1.msra.mxu0 %v3721
        %3723 = vmatprep.subr.mxu0 0.0
        %v3724 = vand.u32 %v3402, 4294901760
        %3725 = vmatpush1.msra.mxu0 %v3724
        %3726 = vmatprep.subr.mxu0 0.0
        %v3727 = vand.u32 %v3403, 4294901760
        %3728 = vmatpush1.msra.mxu0 %v3727
        %3729 = vmatprep.subr.mxu0 0.0
        %v3730 = vand.u32 %v3404, 4294901760
        %3731 = vmatpush1.msra.mxu0 %v3730
        %3732 = vmatprep.subr.mxu0 0.0
        %v3733 = vand.u32 %v3405, 4294901760
        %3734 = vmatpush1.msra.mxu0 %v3733
        %3735 = vmatprep.subr.mxu0 0.0
        %v3736 = vand.u32 %v3406, 4294901760
        %3737 = vmatpush1.msra.mxu0 %v3736
        %3738 = vmatprep.subr.mxu0 0.0
        %v3739 = vand.u32 %v3407, 4294901760
        %3740 = vmatpush1.msra.mxu0 %v3739
        %3741 = vmatprep.subr.mxu0 0.0
        %v3742 = vand.u32 %v3408, 4294901760
        %3743 = vmatpush1.msra.mxu0 %v3742
        %3744 = vmatprep.subr.mxu0 0.0
        %3745 = vmatpush1.msra.mxu0 0.0
        %3746 = vmatprep.subr.mxu0 0.0
        %3747 = vmatpush1.msra.mxu0 0.0
        %3748 = vmatprep.subr.mxu0 0.0
        %3749 = vmatpush1.msra.mxu0 0.0
        %3750 = vmatprep.subr.mxu0 0.0
        %3751 = vmatpush1.msra.mxu0 0.0
        %3752 = vmatprep.subr.mxu0 0.0
        %3753 = vmatpush1.msra.mxu0 0.0
        %3754 = vmatprep.subr.mxu0 0.0
        %3755 = vmatpush1.msra.mxu0 0.0
        %3756 = vmatprep.subr.mxu0 0.0
        %3757 = vmatpush1.msra.mxu0 0.0
        %3758 = vmatprep.subr.mxu0 0.0
        %3759 = vmatpush1.msra.mxu0 0.0
        %3760 = vmatprep.subr.mxu0 0.0
        %3761 = vmatpush1.msra.mxu0 0.0
        %3762 = vmatprep.subr.mxu0 0.0
        %3763 = vmatpush1.msra.mxu0 0.0
        %3764 = vmatprep.subr.mxu0 0.0
        %3765 = vmatpush1.msra.mxu0 0.0
        %3766 = vmatprep.subr.mxu0 0.0
        %3767 = vmatpush1.msra.mxu0 0.0
        %3768 = vmatprep.subr.mxu0 0.0
        %3769 = vmatpush1.msra.mxu0 0.0
        %3770 = vmatprep.subr.mxu0 0.0
        %3771 = vmatpush1.msra.mxu0 0.0
        %3772 = vmatprep.subr.mxu0 0.0
        %3773 = vmatpush1.msra.mxu0 0.0
        %3774 = vmatprep.subr.mxu0 0.0
        %3775 = vmatpush1.msra.mxu0 0.0
        %3776 = vmatprep.subr.mxu0 0.0
        %3777 = vmatpush1.msra.mxu0 0.0
        %3778 = vmatprep.subr.mxu0 0.0
        %3779 = vmatpush1.msra.mxu0 0.0
        %3780 = vmatprep.subr.mxu0 0.0
        %3781 = vmatpush1.msra.mxu0 0.0
        %3782 = vmatprep.subr.mxu0 0.0
        %3783 = vmatpush1.msra.mxu0 0.0
        %3784 = vmatprep.subr.mxu0 0.0
        %3785 = vmatpush1.msra.mxu0 0.0
        %3786 = vmatprep.subr.mxu0 0.0
        %3787 = vmatpush1.msra.mxu0 0.0
        %3788 = vmatprep.subr.mxu0 0.0
        %3789 = vmatpush1.msra.mxu0 0.0
        %3790 = vmatprep.subr.mxu0 0.0
        %3791 = vmatpush1.msra.mxu0 0.0
        %3792 = vmatprep.mubr.f32.mxu0 0.0
        %v3793 = vand.u32 %v3436, 4294901760
        %v3794 = vsub.f32 %v3436, %v3793
        %v3795 = vand.u32 %v3794, 4294901760
        %3796 = vmatmul.mubr.f32.gmra.mrb[0].mxu0 %v3795
        %v3797 = vpop.f32.mrb[0].mxu0
        %v3798 = vadd.f32 %v3717, %v3797
        %v3799 = vpop.f32.mrb[0].mxu0
        %3800 = vdwg.mxu0
        %3801 = vmatprep.subr.mxu0 0.0
        %v3802 = vand.u32 %v3401, 4294901760
        %v3803 = vsub.f32 %v3401, %v3802
        %v3804 = vand.u32 %v3803, 4294901760
        %3805 = vmatpush1.msra.mxu0 %v3804
        %3806 = vmatprep.subr.mxu0 0.0
        %v3807 = vand.u32 %v3402, 4294901760
        %v3808 = vsub.f32 %v3402, %v3807
        %v3809 = vand.u32 %v3808, 4294901760
        %3810 = vmatpush1.msra.mxu0 %v3809
        %3811 = vmatprep.subr.mxu0 0.0
        %v3812 = vand.u32 %v3403, 4294901760
        %v3813 = vsub.f32 %v3403, %v3812
        %v3814 = vand.u32 %v3813, 4294901760
        %3815 = vmatpush1.msra.mxu0 %v3814
        %3816 = vmatprep.subr.mxu0 0.0
        %v3817 = vand.u32 %v3404, 4294901760
        %v3818 = vsub.f32 %v3404, %v3817
        %v3819 = vand.u32 %v3818, 4294901760
        %3820 = vmatpush1.msra.mxu0 %v3819
        %3821 = vmatprep.subr.mxu0 0.0
        %v3822 = vand.u32 %v3405, 4294901760
        %v3823 = vsub.f32 %v3405, %v3822
        %v3824 = vand.u32 %v3823, 4294901760
        %3825 = vmatpush1.msra.mxu0 %v3824
        %3826 = vmatprep.subr.mxu0 0.0
        %v3827 = vand.u32 %v3406, 4294901760
        %v3828 = vsub.f32 %v3406, %v3827
        %v3829 = vand.u32 %v3828, 4294901760
        %3830 = vmatpush1.msra.mxu0 %v3829
        %3831 = vmatprep.subr.mxu0 0.0
        %v3832 = vand.u32 %v3407, 4294901760
        %v3833 = vsub.f32 %v3407, %v3832
        %v3834 = vand.u32 %v3833, 4294901760
        %3835 = vmatpush1.msra.mxu0 %v3834
        %3836 = vmatprep.subr.mxu0 0.0
        %v3837 = vand.u32 %v3408, 4294901760
        %v3838 = vsub.f32 %v3408, %v3837
        %v3839 = vand.u32 %v3838, 4294901760
        %3840 = vmatpush1.msra.mxu0 %v3839
        %3841 = vmatprep.subr.mxu0 0.0
        %3842 = vmatpush1.msra.mxu0 0.0
        %3843 = vmatprep.subr.mxu0 0.0
        %3844 = vmatpush1.msra.mxu0 0.0
        %3845 = vmatprep.subr.mxu0 0.0
        %3846 = vmatpush1.msra.mxu0 0.0
        %3847 = vmatprep.subr.mxu0 0.0
        %3848 = vmatpush1.msra.mxu0 0.0
        %3849 = vmatprep.subr.mxu0 0.0
        %3850 = vmatpush1.msra.mxu0 0.0
        %3851 = vmatprep.subr.mxu0 0.0
        %3852 = vmatpush1.msra.mxu0 0.0
        %3853 = vmatprep.subr.mxu0 0.0
        %3854 = vmatpush1.msra.mxu0 0.0
        %3855 = vmatprep.subr.mxu0 0.0
        %3856 = vmatpush1.msra.mxu0 0.0
        %3857 = vmatprep.subr.mxu0 0.0
        %3858 = vmatpush1.msra.mxu0 0.0
        %3859 = vmatprep.subr.mxu0 0.0
        %3860 = vmatpush1.msra.mxu0 0.0
        %3861 = vmatprep.subr.mxu0 0.0
        %3862 = vmatpush1.msra.mxu0 0.0
        %3863 = vmatprep.subr.mxu0 0.0
        %3864 = vmatpush1.msra.mxu0 0.0
        %3865 = vmatprep.subr.mxu0 0.0
        %3866 = vmatpush1.msra.mxu0 0.0
        %3867 = vmatprep.subr.mxu0 0.0
        %3868 = vmatpush1.msra.mxu0 0.0
        %3869 = vmatprep.subr.mxu0 0.0
        %3870 = vmatpush1.msra.mxu0 0.0
        %3871 = vmatprep.subr.mxu0 0.0
        %3872 = vmatpush1.msra.mxu0 0.0
        %3873 = vmatprep.subr.mxu0 0.0
        %3874 = vmatpush1.msra.mxu0 0.0
        %3875 = vmatprep.subr.mxu0 0.0
        %3876 = vmatpush1.msra.mxu0 0.0
        %3877 = vmatprep.subr.mxu0 0.0
        %3878 = vmatpush1.msra.mxu0 0.0
        %3879 = vmatprep.subr.mxu0 0.0
        %3880 = vmatpush1.msra.mxu0 0.0
        %3881 = vmatprep.subr.mxu0 0.0
        %3882 = vmatpush1.msra.mxu0 0.0
        %3883 = vmatprep.subr.mxu0 0.0
        %3884 = vmatpush1.msra.mxu0 0.0
        %3885 = vmatprep.subr.mxu0 0.0
        %3886 = vmatpush1.msra.mxu0 0.0
        %3887 = vmatprep.subr.mxu0 0.0
        %3888 = vmatpush1.msra.mxu0 0.0
        %3889 = vmatprep.mubr.f32.mxu0 0.0
        %v3890 = vand.u32 %v3436, 4294901760
        %3891 = vmatmul.mubr.f32.gmra.mrb[0].mxu0 %v3890
        %v3892 = vpop.f32.mrb[0].mxu0
        %v3893 = vadd.f32 %v3798, %v3892
        %v3894 = vpop.f32.mrb[0].mxu0
        %3895 = vdwg.mxu0
        %3896 = vmatprep.subr.mxu0 0.0
        %v3897 = vand.u32 %v3401, 4294901760
        %3898 = vmatpush1.msra.mxu0 %v3897
        %3899 = vmatprep.subr.mxu0 0.0
        %v3900 = vand.u32 %v3402, 4294901760
        %3901 = vmatpush1.msra.mxu0 %v3900
        %3902 = vmatprep.subr.mxu0 0.0
        %v3903 = vand.u32 %v3403, 4294901760
        %3904 = vmatpush1.msra.mxu0 %v3903
        %3905 = vmatprep.subr.mxu0 0.0
        %v3906 = vand.u32 %v3404, 4294901760
        %3907 = vmatpush1.msra.mxu0 %v3906
        %3908 = vmatprep.subr.mxu0 0.0
        %v3909 = vand.u32 %v3405, 4294901760
        %3910 = vmatpush1.msra.mxu0 %v3909
        %3911 = vmatprep.subr.mxu0 0.0
        %v3912 = vand.u32 %v3406, 4294901760
        %3913 = vmatpush1.msra.mxu0 %v3912
        %3914 = vmatprep.subr.mxu0 0.0
        %v3915 = vand.u32 %v3407, 4294901760
        %3916 = vmatpush1.msra.mxu0 %v3915
        %3917 = vmatprep.subr.mxu0 0.0
        %v3918 = vand.u32 %v3408, 4294901760
        %3919 = vmatpush1.msra.mxu0 %v3918
        %3920 = vmatprep.subr.mxu0 0.0
        %3921 = vmatpush1.msra.mxu0 0.0
        %3922 = vmatprep.subr.mxu0 0.0
        %3923 = vmatpush1.msra.mxu0 0.0
        %3924 = vmatprep.subr.mxu0 0.0
        %3925 = vmatpush1.msra.mxu0 0.0
        %3926 = vmatprep.subr.mxu0 0.0
        %3927 = vmatpush1.msra.mxu0 0.0
        %3928 = vmatprep.subr.mxu0 0.0
        %3929 = vmatpush1.msra.mxu0 0.0
        %3930 = vmatprep.subr.mxu0 0.0
        %3931 = vmatpush1.msra.mxu0 0.0
        %3932 = vmatprep.subr.mxu0 0.0
        %3933 = vmatpush1.msra.mxu0 0.0
        %3934 = vmatprep.subr.mxu0 0.0
        %3935 = vmatpush1.msra.mxu0 0.0
        %3936 = vmatprep.subr.mxu0 0.0
        %3937 = vmatpush1.msra.mxu0 0.0
        %3938 = vmatprep.subr.mxu0 0.0
        %3939 = vmatpush1.msra.mxu0 0.0
        %3940 = vmatprep.subr.mxu0 0.0
        %3941 = vmatpush1.msra.mxu0 0.0
        %3942 = vmatprep.subr.mxu0 0.0
        %3943 = vmatpush1.msra.mxu0 0.0
        %3944 = vmatprep.subr.mxu0 0.0
        %3945 = vmatpush1.msra.mxu0 0.0
        %3946 = vmatprep.subr.mxu0 0.0
        %3947 = vmatpush1.msra.mxu0 0.0
        %3948 = vmatprep.subr.mxu0 0.0
        %3949 = vmatpush1.msra.mxu0 0.0
        %3950 = vmatprep.subr.mxu0 0.0
        %3951 = vmatpush1.msra.mxu0 0.0
        %3952 = vmatprep.subr.mxu0 0.0
        %3953 = vmatpush1.msra.mxu0 0.0
        %3954 = vmatprep.subr.mxu0 0.0
        %3955 = vmatpush1.msra.mxu0 0.0
        %3956 = vmatprep.subr.mxu0 0.0
        %3957 = vmatpush1.msra.mxu0 0.0
        %3958 = vmatprep.subr.mxu0 0.0
        %3959 = vmatpush1.msra.mxu0 0.0
        %3960 = vmatprep.subr.mxu0 0.0
        %3961 = vmatpush1.msra.mxu0 0.0
        %3962 = vmatprep.subr.mxu0 0.0
        %3963 = vmatpush1.msra.mxu0 0.0
        %3964 = vmatprep.subr.mxu0 0.0
        %3965 = vmatpush1.msra.mxu0 0.0
        %3966 = vmatprep.subr.mxu0 0.0
        %3967 = vmatpush1.msra.mxu0 0.0
        %3968 = vmatprep.mubr.f32.mxu0 0.0
        %v3969 = vand.u32 %v3436, 4294901760
        %3970 = vmatmul.mubr.f32.gmra.mrb[0].mxu0 %v3969
        %v3971 = vpop.f32.mrb[0].mxu0
        %v3972 = vadd.f32 %v3893, %v3971
        %v3973 = vpop.f32.mrb[0].mxu0
        %3974 = vdwg.mxu0
        %v3975 = vmax.f32 %v3972, 0.0
        %v3976 = vld [vmem:[%s9] sm:$0xff]
        %v3977 = vld [vmem:[%s9 + $0x8] sm:$0xff]
        %v3978 = vld [vmem:[%s10] sm:$0x1]
        %v3980 = vlaneseq
        %v3981 = vshrl.u32 %v3980, 7
        %v3982 = vsub.s32 0, %v3981
        %v3983 = vrot.slane %v3978, %v3982
        %v3986 = vsel %vm595, %v3975, 0
        %3988 = vmatprep.subr.mxu0 0.0
        %v3989 = vand.u32 %v3976, 4294901760
        %3990 = vmatpush1.msra.mxu0 %v3989
        %3991 = vmatprep.subr.mxu0 0.0
        %v3992 = vand.u32 %v3977, 4294901760
        %3993 = vmatpush1.msra.mxu0 %v3992
        %3994 = vmatprep.subr.mxu0 0.0
        %3995 = vmatpush1.msra.mxu0 0.0
        %3996 = vmatprep.subr.mxu0 0.0
        %3997 = vmatpush1.msra.mxu0 0.0
        %3998 = vmatprep.subr.mxu0 0.0
        %3999 = vmatpush1.msra.mxu0 0.0
        %4000 = vmatprep.subr.mxu0 0.0
        %4001 = vmatpush1.msra.mxu0 0.0
        %4002 = vmatprep.subr.mxu0 0.0
        %4003 = vmatpush1.msra.mxu0 0.0
        %4004 = vmatprep.subr.mxu0 0.0
        %4005 = vmatpush1.msra.mxu0 0.0
        %4006 = vmatprep.subr.mxu0 0.0
        %4007 = vmatpush1.msra.mxu0 0.0
        %4008 = vmatprep.subr.mxu0 0.0
        %4009 = vmatpush1.msra.mxu0 0.0
        %4010 = vmatprep.subr.mxu0 0.0
        %4011 = vmatpush1.msra.mxu0 0.0
        %4012 = vmatprep.subr.mxu0 0.0
        %4013 = vmatpush1.msra.mxu0 0.0
        %4014 = vmatprep.subr.mxu0 0.0
        %4015 = vmatpush1.msra.mxu0 0.0
        %4016 = vmatprep.subr.mxu0 0.0
        %4017 = vmatpush1.msra.mxu0 0.0
        %4018 = vmatprep.subr.mxu0 0.0
        %4019 = vmatpush1.msra.mxu0 0.0
        %4020 = vmatprep.subr.mxu0 0.0
        %4021 = vmatpush1.msra.mxu0 0.0
        %4022 = vmatprep.subr.mxu0 0.0
        %4023 = vmatpush1.msra.mxu0 0.0
        %4024 = vmatprep.subr.mxu0 0.0
        %4025 = vmatpush1.msra.mxu0 0.0
        %4026 = vmatprep.subr.mxu0 0.0
        %4027 = vmatpush1.msra.mxu0 0.0
        %4028 = vmatprep.subr.mxu0 0.0
        %4029 = vmatpush1.msra.mxu0 0.0
        %4030 = vmatprep.subr.mxu0 0.0
        %4031 = vmatpush1.msra.mxu0 0.0
        %4032 = vmatprep.subr.mxu0 0.0
        %4033 = vmatpush1.msra.mxu0 0.0
        %4034 = vmatprep.subr.mxu0 0.0
        %4035 = vmatpush1.msra.mxu0 0.0
        %4036 = vmatprep.subr.mxu0 0.0
        %4037 = vmatpush1.msra.mxu0 0.0
        %4038 = vmatprep.subr.mxu0 0.0
        %4039 = vmatpush1.msra.mxu0 0.0
        %4040 = vmatprep.subr.mxu0 0.0
        %4041 = vmatpush1.msra.mxu0 0.0
        %4042 = vmatprep.subr.mxu0 0.0
        %4043 = vmatpush1.msra.mxu0 0.0
        %4044 = vmatprep.subr.mxu0 0.0
        %4045 = vmatpush1.msra.mxu0 0.0
        %4046 = vmatprep.subr.mxu0 0.0
        %4047 = vmatpush1.msra.mxu0 0.0
        %4048 = vmatprep.subr.mxu0 0.0
        %4049 = vmatpush1.msra.mxu0 0.0
        %4050 = vmatprep.subr.mxu0 0.0
        %4051 = vmatpush1.msra.mxu0 0.0
        %4052 = vmatprep.subr.mxu0 0.0
        %4053 = vmatpush1.msra.mxu0 0.0
        %4054 = vmatprep.mubr.f32.mxu0 0.0
        %v4055 = vand.u32 %v3986, 4294901760
        %v4056 = vsub.f32 %v3986, %v4055
        %v4057 = vand.u32 %v4056, 4294901760
        %v4058 = vsub.f32 %v4056, %v4057
        %v4059 = vand.u32 %v4058, 4294901760
        %4060 = vmatmul.mubr.f32.gmra.mrb[0].mxu0 %v4059
        %v4061 = vpop.f32.mrb[0].mxu0
        %v4062 = vadd.f32 %v3983, %v4061
        %v4063 = vpop.f32.mrb[0].mxu0
        %4064 = vdwg.mxu0
        %4065 = vmatprep.subr.mxu0 0.0
        %v4066 = vand.u32 %v3976, 4294901760
        %v4067 = vsub.f32 %v3976, %v4066
        %v4068 = vand.u32 %v4067, 4294901760
        %v4069 = vsub.f32 %v4067, %v4068
        %v4070 = vand.u32 %v4069, 4294901760
        %4071 = vmatpush1.msra.mxu0 %v4070
        %4072 = vmatprep.subr.mxu0 0.0
        %v4073 = vand.u32 %v3977, 4294901760
        %v4074 = vsub.f32 %v3977, %v4073
        %v4075 = vand.u32 %v4074, 4294901760
        %v4076 = vsub.f32 %v4074, %v4075
        %v4077 = vand.u32 %v4076, 4294901760
        %4078 = vmatpush1.msra.mxu0 %v4077
        %4079 = vmatprep.subr.mxu0 0.0
        %4080 = vmatpush1.msra.mxu0 0.0
        %4081 = vmatprep.subr.mxu0 0.0
        %4082 = vmatpush1.msra.mxu0 0.0
        %4083 = vmatprep.subr.mxu0 0.0
        %4084 = vmatpush1.msra.mxu0 0.0
        %4085 = vmatprep.subr.mxu0 0.0
        %4086 = vmatpush1.msra.mxu0 0.0
        %4087 = vmatprep.subr.mxu0 0.0
        %4088 = vmatpush1.msra.mxu0 0.0
        %4089 = vmatprep.subr.mxu0 0.0
        %4090 = vmatpush1.msra.mxu0 0.0
        %4091 = vmatprep.subr.mxu0 0.0
        %4092 = vmatpush1.msra.mxu0 0.0
        %4093 = vmatprep.subr.mxu0 0.0
        %4094 = vmatpush1.msra.mxu0 0.0
        %4095 = vmatprep.subr.mxu0 0.0
        %4096 = vmatpush1.msra.mxu0 0.0
        %4097 = vmatprep.subr.mxu0 0.0
        %4098 = vmatpush1.msra.mxu0 0.0
        %4099 = vmatprep.subr.mxu0 0.0
        %4100 = vmatpush1.msra.mxu0 0.0
        %4101 = vmatprep.subr.mxu0 0.0
        %4102 = vmatpush1.msra.mxu0 0.0
        %4103 = vmatprep.subr.mxu0 0.0
        %4104 = vmatpush1.msra.mxu0 0.0
        %4105 = vmatprep.subr.mxu0 0.0
        %4106 = vmatpush1.msra.mxu0 0.0
        %4107 = vmatprep.subr.mxu0 0.0
        %4108 = vmatpush1.msra.mxu0 0.0
        %4109 = vmatprep.subr.mxu0 0.0
        %4110 = vmatpush1.msra.mxu0 0.0
        %4111 = vmatprep.subr.mxu0 0.0
        %4112 = vmatpush1.msra.mxu0 0.0
        %4113 = vmatprep.subr.mxu0 0.0
        %4114 = vmatpush1.msra.mxu0 0.0
        %4115 = vmatprep.subr.mxu0 0.0
        %4116 = vmatpush1.msra.mxu0 0.0
        %4117 = vmatprep.subr.mxu0 0.0
        %4118 = vmatpush1.msra.mxu0 0.0
        %4119 = vmatprep.subr.mxu0 0.0
        %4120 = vmatpush1.msra.mxu0 0.0
        %4121 = vmatprep.subr.mxu0 0.0
        %4122 = vmatpush1.msra.mxu0 0.0
        %4123 = vmatprep.subr.mxu0 0.0
        %4124 = vmatpush1.msra.mxu0 0.0
        %4125 = vmatprep.subr.mxu0 0.0
        %4126 = vmatpush1.msra.mxu0 0.0
        %4127 = vmatprep.subr.mxu0 0.0
        %4128 = vmatpush1.msra.mxu0 0.0
        %4129 = vmatprep.subr.mxu0 0.0
        %4130 = vmatpush1.msra.mxu0 0.0
        %4131 = vmatprep.subr.mxu0 0.0
        %4132 = vmatpush1.msra.mxu0 0.0
        %4133 = vmatprep.subr.mxu0 0.0
        %4134 = vmatpush1.msra.mxu0 0.0
        %4135 = vmatprep.subr.mxu0 0.0
        %4136 = vmatpush1.msra.mxu0 0.0
        %4137 = vmatprep.subr.mxu0 0.0
        %4138 = vmatpush1.msra.mxu0 0.0
        %4139 = vmatprep.mubr.f32.mxu0 0.0
        %v4140 = vand.u32 %v3986, 4294901760
        %4141 = vmatmul.mubr.f32.gmra.mrb[0].mxu0 %v4140
        %v4142 = vpop.f32.mrb[0].mxu0
        %v4143 = vadd.f32 %v4062, %v4142
        %v4144 = vpop.f32.mrb[0].mxu0
        %4145 = vdwg.mxu0
        %4146 = vmatprep.subr.mxu0 0.0
        %v4147 = vand.u32 %v3976, 4294901760
        %v4148 = vsub.f32 %v3976, %v4147
        %4149 = vmatpush1.msra.mxu0 %v4148
        %4150 = vmatprep.subr.mxu0 0.0
        %v4151 = vand.u32 %v3977, 4294901760
        %v4152 = vsub.f32 %v3977, %v4151
        %4153 = vmatpush1.msra.mxu0 %v4152
        %4154 = vmatprep.subr.mxu0 0.0
        %4155 = vmatpush1.msra.mxu0 0.0
        %4156 = vmatprep.subr.mxu0 0.0
        %4157 = vmatpush1.msra.mxu0 0.0
        %4158 = vmatprep.subr.mxu0 0.0
        %4159 = vmatpush1.msra.mxu0 0.0
        %4160 = vmatprep.subr.mxu0 0.0
        %4161 = vmatpush1.msra.mxu0 0.0
        %4162 = vmatprep.subr.mxu0 0.0
        %4163 = vmatpush1.msra.mxu0 0.0
        %4164 = vmatprep.subr.mxu0 0.0
        %4165 = vmatpush1.msra.mxu0 0.0
        %4166 = vmatprep.subr.mxu0 0.0
        %4167 = vmatpush1.msra.mxu0 0.0
        %4168 = vmatprep.subr.mxu0 0.0
        %4169 = vmatpush1.msra.mxu0 0.0
        %4170 = vmatprep.subr.mxu0 0.0
        %4171 = vmatpush1.msra.mxu0 0.0
        %4172 = vmatprep.subr.mxu0 0.0
        %4173 = vmatpush1.msra.mxu0 0.0
        %4174 = vmatprep.subr.mxu0 0.0
        %4175 = vmatpush1.msra.mxu0 0.0
        %4176 = vmatprep.subr.mxu0 0.0
        %4177 = vmatpush1.msra.mxu0 0.0
        %4178 = vmatprep.subr.mxu0 0.0
        %4179 = vmatpush1.msra.mxu0 0.0
        %4180 = vmatprep.subr.mxu0 0.0
        %4181 = vmatpush1.msra.mxu0 0.0
        %4182 = vmatprep.subr.mxu0 0.0
        %4183 = vmatpush1.msra.mxu0 0.0
        %4184 = vmatprep.subr.mxu0 0.0
        %4185 = vmatpush1.msra.mxu0 0.0
        %4186 = vmatprep.subr.mxu0 0.0
        %4187 = vmatpush1.msra.mxu0 0.0
        %4188 = vmatprep.subr.mxu0 0.0
        %4189 = vmatpush1.msra.mxu0 0.0
        %4190 = vmatprep.subr.mxu0 0.0
        %4191 = vmatpush1.msra.mxu0 0.0
        %4192 = vmatprep.subr.mxu0 0.0
        %4193 = vmatpush1.msra.mxu0 0.0
        %4194 = vmatprep.subr.mxu0 0.0
        %4195 = vmatpush1.msra.mxu0 0.0
        %4196 = vmatprep.subr.mxu0 0.0
        %4197 = vmatpush1.msra.mxu0 0.0
        %4198 = vmatprep.subr.mxu0 0.0
        %4199 = vmatpush1.msra.mxu0 0.0
        %4200 = vmatprep.subr.mxu0 0.0
        %4201 = vmatpush1.msra.mxu0 0.0
        %4202 = vmatprep.subr.mxu0 0.0
        %4203 = vmatpush1.msra.mxu0 0.0
        %4204 = vmatprep.subr.mxu0 0.0
        %4205 = vmatpush1.msra.mxu0 0.0
        %4206 = vmatprep.subr.mxu0 0.0
        %4207 = vmatpush1.msra.mxu0 0.0
        %4208 = vmatprep.subr.mxu0 0.0
        %4209 = vmatpush1.msra.mxu0 0.0
        %4210 = vmatprep.subr.mxu0 0.0
        %4211 = vmatpush1.msra.mxu0 0.0
        %4212 = vmatprep.subr.mxu0 0.0
        %4213 = vmatpush1.msra.mxu0 0.0
        %4214 = vmatprep.mubr.f32.mxu0 0.0
        %v4215 = vand.u32 %v3986, 4294901760
        %v4216 = vsub.f32 %v3986, %v4215
        %4217 = vmatmul.mubr.f32.gmra.mrb[0].mxu0 %v4216
        %v4218 = vpop.f32.mrb[0].mxu0
        %v4219 = vadd.f32 %v4143, %v4218
        %v4220 = vpop.f32.mrb[0].mxu0
        %4221 = vdwg.mxu0
        %4222 = vmatprep.subr.mxu0 0.0
        %v4223 = vand.u32 %v3976, 4294901760
        %4224 = vmatpush1.msra.mxu0 %v4223
        %4225 = vmatprep.subr.mxu0 0.0
        %v4226 = vand.u32 %v3977, 4294901760
        %4227 = vmatpush1.msra.mxu0 %v4226
        %4228 = vmatprep.subr.mxu0 0.0
        %4229 = vmatpush1.msra.mxu0 0.0
        %4230 = vmatprep.subr.mxu0 0.0
        %4231 = vmatpush1.msra.mxu0 0.0
        %4232 = vmatprep.subr.mxu0 0.0
        %4233 = vmatpush1.msra.mxu0 0.0
        %4234 = vmatprep.subr.mxu0 0.0
        %4235 = vmatpush1.msra.mxu0 0.0
        %4236 = vmatprep.subr.mxu0 0.0
        %4237 = vmatpush1.msra.mxu0 0.0
        %4238 = vmatprep.subr.mxu0 0.0
        %4239 = vmatpush1.msra.mxu0 0.0
        %4240 = vmatprep.subr.mxu0 0.0
        %4241 = vmatpush1.msra.mxu0 0.0
        %4242 = vmatprep.subr.mxu0 0.0
        %4243 = vmatpush1.msra.mxu0 0.0
        %4244 = vmatprep.subr.mxu0 0.0
        %4245 = vmatpush1.msra.mxu0 0.0
        %4246 = vmatprep.subr.mxu0 0.0
        %4247 = vmatpush1.msra.mxu0 0.0
        %4248 = vmatprep.subr.mxu0 0.0
        %4249 = vmatpush1.msra.mxu0 0.0
        %4250 = vmatprep.subr.mxu0 0.0
        %4251 = vmatpush1.msra.mxu0 0.0
        %4252 = vmatprep.subr.mxu0 0.0
        %4253 = vmatpush1.msra.mxu0 0.0
        %4254 = vmatprep.subr.mxu0 0.0
        %4255 = vmatpush1.msra.mxu0 0.0
        %4256 = vmatprep.subr.mxu0 0.0
        %4257 = vmatpush1.msra.mxu0 0.0
        %4258 = vmatprep.subr.mxu0 0.0
        %4259 = vmatpush1.msra.mxu0 0.0
        %4260 = vmatprep.subr.mxu0 0.0
        %4261 = vmatpush1.msra.mxu0 0.0
        %4262 = vmatprep.subr.mxu0 0.0
        %4263 = vmatpush1.msra.mxu0 0.0
        %4264 = vmatprep.subr.mxu0 0.0
        %4265 = vmatpush1.msra.mxu0 0.0
        %4266 = vmatprep.subr.mxu0 0.0
        %4267 = vmatpush1.msra.mxu0 0.0
        %4268 = vmatprep.subr.mxu0 0.0
        %4269 = vmatpush1.msra.mxu0 0.0
        %4270 = vmatprep.subr.mxu0 0.0
        %4271 = vmatpush1.msra.mxu0 0.0
        %4272 = vmatprep.subr.mxu0 0.0
        %4273 = vmatpush1.msra.mxu0 0.0
        %4274 = vmatprep.subr.mxu0 0.0
        %4275 = vmatpush1.msra.mxu0 0.0
        %4276 = vmatprep.subr.mxu0 0.0
        %4277 = vmatpush1.msra.mxu0 0.0
        %4278 = vmatprep.subr.mxu0 0.0
        %4279 = vmatpush1.msra.mxu0 0.0
        %4280 = vmatprep.subr.mxu0 0.0
        %4281 = vmatpush1.msra.mxu0 0.0
        %4282 = vmatprep.subr.mxu0 0.0
        %4283 = vmatpush1.msra.mxu0 0.0
        %4284 = vmatprep.subr.mxu0 0.0
        %4285 = vmatpush1.msra.mxu0 0.0
        %4286 = vmatprep.subr.mxu0 0.0
        %4287 = vmatpush1.msra.mxu0 0.0
        %4288 = vmatprep.mubr.f32.mxu0 0.0
        %v4289 = vand.u32 %v3986, 4294901760
        %v4290 = vsub.f32 %v3986, %v4289
        %v4291 = vand.u32 %v4290, 4294901760
        %4292 = vmatmul.mubr.f32.gmra.mrb[0].mxu0 %v4291
        %v4293 = vpop.f32.mrb[0].mxu0
        %v4294 = vadd.f32 %v4219, %v4293
        %v4295 = vpop.f32.mrb[0].mxu0
        %4296 = vdwg.mxu0
        %4297 = vmatprep.subr.mxu0 0.0
        %v4298 = vand.u32 %v3976, 4294901760
        %v4299 = vsub.f32 %v3976, %v4298
        %v4300 = vand.u32 %v4299, 4294901760
        %4301 = vmatpush1.msra.mxu0 %v4300
        %4302 = vmatprep.subr.mxu0 0.0
        %v4303 = vand.u32 %v3977, 4294901760
        %v4304 = vsub.f32 %v3977, %v4303
        %v4305 = vand.u32 %v4304, 4294901760
        %4306 = vmatpush1.msra.mxu0 %v4305
        %4307 = vmatprep.subr.mxu0 0.0
        %4308 = vmatpush1.msra.mxu0 0.0
        %4309 = vmatprep.subr.mxu0 0.0
        %4310 = vmatpush1.msra.mxu0 0.0
        %4311 = vmatprep.subr.mxu0 0.0
        %4312 = vmatpush1.msra.mxu0 0.0
        %4313 = vmatprep.subr.mxu0 0.0
        %4314 = vmatpush1.msra.mxu0 0.0
        %4315 = vmatprep.subr.mxu0 0.0
        %4316 = vmatpush1.msra.mxu0 0.0
        %4317 = vmatprep.subr.mxu0 0.0
        %4318 = vmatpush1.msra.mxu0 0.0
        %4319 = vmatprep.subr.mxu0 0.0
        %4320 = vmatpush1.msra.mxu0 0.0
        %4321 = vmatprep.subr.mxu0 0.0
        %4322 = vmatpush1.msra.mxu0 0.0
        %4323 = vmatprep.subr.mxu0 0.0
        %4324 = vmatpush1.msra.mxu0 0.0
        %4325 = vmatprep.subr.mxu0 0.0
        %4326 = vmatpush1.msra.mxu0 0.0
        %4327 = vmatprep.subr.mxu0 0.0
        %4328 = vmatpush1.msra.mxu0 0.0
        %4329 = vmatprep.subr.mxu0 0.0
        %4330 = vmatpush1.msra.mxu0 0.0
        %4331 = vmatprep.subr.mxu0 0.0
        %4332 = vmatpush1.msra.mxu0 0.0
        %4333 = vmatprep.subr.mxu0 0.0
        %4334 = vmatpush1.msra.mxu0 0.0
        %4335 = vmatprep.subr.mxu0 0.0
        %4336 = vmatpush1.msra.mxu0 0.0
        %4337 = vmatprep.subr.mxu0 0.0
        %4338 = vmatpush1.msra.mxu0 0.0
        %4339 = vmatprep.subr.mxu0 0.0
        %4340 = vmatpush1.msra.mxu0 0.0
        %4341 = vmatprep.subr.mxu0 0.0
        %4342 = vmatpush1.msra.mxu0 0.0
        %4343 = vmatprep.subr.mxu0 0.0
        %4344 = vmatpush1.msra.mxu0 0.0
        %4345 = vmatprep.subr.mxu0 0.0
        %4346 = vmatpush1.msra.mxu0 0.0
        %4347 = vmatprep.subr.mxu0 0.0
        %4348 = vmatpush1.msra.mxu0 0.0
        %4349 = vmatprep.subr.mxu0 0.0
        %4350 = vmatpush1.msra.mxu0 0.0
        %4351 = vmatprep.subr.mxu0 0.0
        %4352 = vmatpush1.msra.mxu0 0.0
        %4353 = vmatprep.subr.mxu0 0.0
        %4354 = vmatpush1.msra.mxu0 0.0
        %4355 = vmatprep.subr.mxu0 0.0
        %4356 = vmatpush1.msra.mxu0 0.0
        %4357 = vmatprep.subr.mxu0 0.0
        %4358 = vmatpush1.msra.mxu0 0.0
        %4359 = vmatprep.subr.mxu0 0.0
        %4360 = vmatpush1.msra.mxu0 0.0
        %4361 = vmatprep.subr.mxu0 0.0
        %4362 = vmatpush1.msra.mxu0 0.0
        %4363 = vmatprep.subr.mxu0 0.0
        %4364 = vmatpush1.msra.mxu0 0.0
        %4365 = vmatprep.subr.mxu0 0.0
        %4366 = vmatpush1.msra.mxu0 0.0
        %4367 = vmatprep.mubr.f32.mxu0 0.0
        %v4368 = vand.u32 %v3986, 4294901760
        %4369 = vmatmul.mubr.f32.gmra.mrb[0].mxu0 %v4368
        %v4370 = vpop.f32.mrb[0].mxu0
        %v4371 = vadd.f32 %v4294, %v4370
        %v4372 = vpop.f32.mrb[0].mxu0
        %4373 = vdwg.mxu0
        %4374 = vmatprep.subr.mxu0 0.0
        %v4375 = vand.u32 %v3976, 4294901760
        %4376 = vmatpush1.msra.mxu0 %v4375
        %4377 = vmatprep.subr.mxu0 0.0
        %v4378 = vand.u32 %v3977, 4294901760
        %4379 = vmatpush1.msra.mxu0 %v4378
        %4380 = vmatprep.subr.mxu0 0.0
        %4381 = vmatpush1.msra.mxu0 0.0
        %4382 = vmatprep.subr.mxu0 0.0
        %4383 = vmatpush1.msra.mxu0 0.0
        %4384 = vmatprep.subr.mxu0 0.0
        %4385 = vmatpush1.msra.mxu0 0.0
        %4386 = vmatprep.subr.mxu0 0.0
        %4387 = vmatpush1.msra.mxu0 0.0
        %4388 = vmatprep.subr.mxu0 0.0
        %4389 = vmatpush1.msra.mxu0 0.0
        %4390 = vmatprep.subr.mxu0 0.0
        %4391 = vmatpush1.msra.mxu0 0.0
        %4392 = vmatprep.subr.mxu0 0.0
        %4393 = vmatpush1.msra.mxu0 0.0
        %4394 = vmatprep.subr.mxu0 0.0
        %4395 = vmatpush1.msra.mxu0 0.0
        %4396 = vmatprep.subr.mxu0 0.0
        %4397 = vmatpush1.msra.mxu0 0.0
        %4398 = vmatprep.subr.mxu0 0.0
        %4399 = vmatpush1.msra.mxu0 0.0
        %4400 = vmatprep.subr.mxu0 0.0
        %4401 = vmatpush1.msra.mxu0 0.0
        %4402 = vmatprep.subr.mxu0 0.0
        %4403 = vmatpush1.msra.mxu0 0.0
        %4404 = vmatprep.subr.mxu0 0.0
        %4405 = vmatpush1.msra.mxu0 0.0
        %4406 = vmatprep.subr.mxu0 0.0
        %4407 = vmatpush1.msra.mxu0 0.0
        %4408 = vmatprep.subr.mxu0 0.0
        %4409 = vmatpush1.msra.mxu0 0.0
        %4410 = vmatprep.subr.mxu0 0.0
        %4411 = vmatpush1.msra.mxu0 0.0
        %4412 = vmatprep.subr.mxu0 0.0
        %4413 = vmatpush1.msra.mxu0 0.0
        %4414 = vmatprep.subr.mxu0 0.0
        %4415 = vmatpush1.msra.mxu0 0.0
        %4416 = vmatprep.subr.mxu0 0.0
        %4417 = vmatpush1.msra.mxu0 0.0
        %4418 = vmatprep.subr.mxu0 0.0
        %4419 = vmatpush1.msra.mxu0 0.0
        %4420 = vmatprep.subr.mxu0 0.0
        %4421 = vmatpush1.msra.mxu0 0.0
        %4422 = vmatprep.subr.mxu0 0.0
        %4423 = vmatpush1.msra.mxu0 0.0
        %4424 = vmatprep.subr.mxu0 0.0
        %4425 = vmatpush1.msra.mxu0 0.0
        %4426 = vmatprep.subr.mxu0 0.0
        %4427 = vmatpush1.msra.mxu0 0.0
        %4428 = vmatprep.subr.mxu0 0.0
        %4429 = vmatpush1.msra.mxu0 0.0
        %4430 = vmatprep.subr.mxu0 0.0
        %4431 = vmatpush1.msra.mxu0 0.0
        %4432 = vmatprep.subr.mxu0 0.0
        %4433 = vmatpush1.msra.mxu0 0.0
        %4434 = vmatprep.subr.mxu0 0.0
        %4435 = vmatpush1.msra.mxu0 0.0
        %4436 = vmatprep.subr.mxu0 0.0
        %4437 = vmatpush1.msra.mxu0 0.0
        %4438 = vmatprep.subr.mxu0 0.0
        %4439 = vmatpush1.msra.mxu0 0.0
        %4440 = vmatprep.mubr.f32.mxu0 0.0
        %v4441 = vand.u32 %v3986, 4294901760
        %4442 = vmatmul.mubr.f32.gmra.mrb[0].mxu0 %v4441
        %v4443 = vpop.f32.mrb[0].mxu0
        %v4444 = vadd.f32 %v4371, %v4443
        %v4445 = vpop.f32.mrb[0].mxu0
        %4446 = vdwg.mxu0
        %v4447 = vmax.f32 %v4444, 0.0
        %vm4448 = vcmask 15360
        %4449 = vst.msk [vmem:[%s481] sm:$0xff] %vm4448, %v4447
        %p4450 = scmp.lt.s32.totalorder %s25, 1
        %s4451 = scalar_select %p4450, %s25, 1
        %s4452 = smul.addr %s4451, 8
        %s4453 = scalar_lea.vmem %s11, %s4452
        // Predicated region
        $region69: #{tpu_custom_call.1} parent=63 // pred_check
          %p4454 = pneg %p294
        $region70: #{tpu_custom_call.1} parent=63 // pred_check_branch
          %4456 = sbr.rel (%p4454) target = $region72
        $region71: #{tpu_custom_call.1} parent=63 // pred_region
          _
        $region72: #{tpu_custom_call.1} parent=63 // pred_fallthru
          _
      $region64: #{tpu_custom_call.1} parent=5 // pred_fallthru
        _
      %p4457 = scmp.le.s32.totalorder 2, %s20
      // Predicated region
      $region73: #{tpu_custom_call.1} parent=5 // pred_check
        %p4458 = pneg %p4457
      $region74: #{tpu_custom_call.1} parent=5 // pred_check_branch
        %4460 = sbr.rel (%p4458) target = $region76
      $region75: #{tpu_custom_call.1} parent=5 // pred_region
        %s4461 = ssub.s32 %s20, 2
        // Predicated region
        $region77: #{tpu_custom_call.1} parent=75 // pred_check
          %p4462 = pneg %p300
        $region78: #{tpu_custom_call.1} parent=75 // pred_check_branch
          %4464 = sbr.rel (%p4462) target = $region80
        $region79: #{tpu_custom_call.1} parent=75 // pred_region
          %p4465 = scmp.lt.s32.totalorder %s26, 1
          %s4466 = scalar_select %p4465, %s26, 1
          %s4467 = smul.addr %s4466, 8
          %s4468 = scalar_lea.vmem %s11, %s4467
        $region80: #{tpu_custom_call.1} parent=75 // pred_fallthru
          _
      $region76: #{tpu_custom_call.1} parent=5 // pred_fallthru
        _
    $region6: #{tpu_custom_call.1} parent=1 // loop_footer
      %s24 = sadd.s32 1, %s20
    $region7: #{tpu_custom_call.1} parent=1 // loop_footer_branch
      %19 = sbr.rel target = $region3
    $region8: #{tpu_custom_call.1} parent=1 // loop_exit
      _
    %4469 = vsyncpa [#allocation3], 1
    %s4470 = scalar_lea.sflag [#allocation3], 1
    %4471 = vsyncpa %s4470, 1

</llo_original>
